<compile_context>
chip_gen: v7x
topology: tpu7x:2x2x1
jax: 0.10.0
libtpu: 0.0.40
codegen_flags: <defaults>
</compile_context>

<pallas_src>
import functools

import jax
import jax.numpy as jnp
from jax.experimental import pallas as pl
from jax.experimental.pallas import tpu as pltpu


def _round_up(x, m):
    return (x + m - 1) // m * m


# ------------------------------ encoder kernel ----------------------------- #
def encoder_forward(x_tm, wx, wh, b):
    """x_tm: (src_len, batch_pad, emb_pad) bf16 -> final hidden (batch_pad, hidden_pad) f32."""
    src_len, batch_pad, _ = x_tm.shape
    hidden_pad = wh.shape[0]

    def kernel(x_ref, wx_ref, wh_ref, b_ref, h_out_ref):
        # Hoist loop-invariant loads once.
        wx_v = wx_ref[...]          # (Ep, Hp) bf16
        wh_v = wh_ref[...]          # (Hp, Hp) bf16
        bias = b_ref[...]           # (1, Hp)  f32

        def step(t, h):
            x = x_ref[t]            # (B, Ep) bf16
            h_new = jnp.tanh(
                jnp.dot(x, wx_v, preferred_element_type=jnp.float32)
                + jnp.dot(h.astype(jnp.bfloat16), wh_v,
                          preferred_element_type=jnp.float32)
                + bias)
            return h_new

        h0 = jnp.zeros((batch_pad, hidden_pad), jnp.float32)
        h_out_ref[...] = jax.lax.fori_loop(0, src_len, step, h0, unroll=True)

    return pl.pallas_call(
        kernel,
        out_shape=jax.ShapeDtypeStruct((batch_pad, hidden_pad), jnp.float32),
        grid_spec=pltpu.PrefetchScalarGridSpec(
            num_scalar_prefetch=0,
            grid=(1,),
            in_specs=[
                pl.BlockSpec(x_tm.shape, lambda i: (0, 0, 0)),   # whole seq resident
                pl.BlockSpec(wx.shape, lambda i: (0, 0)),        # resident weights
                pl.BlockSpec(wh.shape, lambda i: (0, 0)),
                pl.BlockSpec(b.shape, lambda i: (0, 0)),
            ],
            out_specs=pl.BlockSpec((batch_pad, hidden_pad), lambda i: (0, 0)),
        ),
        compiler_params=pltpu.CompilerParams(
            dimension_semantics=("arbitrary",)),
    )(x_tm, wx, wh, b)


# ------------------------- fused decoder-loop kernel ------------------------ #
def decoder_forward(tf_mask, trg_in, h0, emb_w, w_hh, b, w_fc, b_fc, *, vocab_real):
    """All trg_len-1 decode steps in ONE pallas_call (in-kernel time loop).

    tf_mask : (steps,) int32 teacher-forcing coins (scalar prefetch -> SMEM).
    trg_in  : (steps, batch_pad, 1) int32 input tokens (trg[:, 0..steps-1], time major).
    emb_w   : (vocab_pad, hidden_pad) bf16 folded  dec_emb @ W_ih^T.
    Returns logits (steps, batch_pad, vocab_pad) f32 for t = 1..trg_len-1.
    """
    steps, batch_pad, _ = trg_in.shape
    hidden_pad = h0.shape[1]
    vocab_pad = w_fc.shape[1]

    def kernel(tf_ref, trg_ref, h0_ref, embw_ref, whh_ref, b_ref,
               wfc_ref, bfc_ref, out_ref):
        # Hoist loop-invariant loads / broadcasts (JAX does not CSE iota).
        embw = embw_ref[...]        # (Vp, Hp) bf16
        whh = whh_ref[...]          # (Hp, Hp) bf16
        bias = b_ref[...]           # (1, Hp)  f32
        wfc = wfc_ref[...]          # (Hp, Vp) bf16
        bfc = bfc_ref[...]          # (1, Vp)  f32
        lane = jax.lax.broadcasted_iota(jnp.int32, (batch_pad, vocab_pad), 1)

        def step(i, carry):
            h, prev_tok = carry
            # step 0 always uses trg[:, 0]; later steps pick trg[:, i] when the
            # teacher-forcing coin is set, otherwise the previous greedy argmax.
            use_tf = jnp.logical_or(i == 0, tf_ref[i] != 0)
            tok = jnp.where(use_tf, trg_ref[i], prev_tok)            # (B, 1) i32

            # Embedding lookup folded into the input projection:
            # onehot @ (dec_emb @ W_ih^T)  (one MXU matmul, no gather).
            onehot = (lane == tok).astype(jnp.bfloat16)               # (B, Vp)
            h_new = jnp.tanh(
                jnp.dot(onehot, embw, preferred_element_type=jnp.float32)
                + jnp.dot(h.astype(jnp.bfloat16), whh,
                          preferred_element_type=jnp.float32)
                + bias)                                               # (B, Hp) f32

            logits = (jnp.dot(h_new.astype(jnp.bfloat16), wfc,
                              preferred_element_type=jnp.float32)
                      + bfc)                                          # (B, Vp) f32
            out_ref[i] = logits

            # Greedy argmax over the REAL vocab (padded lanes masked out);
            # ties resolved to the lowest index.
            masked = jnp.where(lane < vocab_real, logits, -1e30)
            row_max = jnp.max(masked, axis=-1, keepdims=True)
            cand = jnp.where(masked >= row_max, lane, vocab_pad)
            next_tok = jnp.min(cand, axis=-1, keepdims=True)          # (B, 1) i32
            return h_new, next_tok

        init = (h0_ref[...], jnp.zeros((batch_pad, 1), jnp.int32))
        jax.lax.fori_loop(0, steps, step, init, unroll=True)

    return pl.pallas_call(
        kernel,
        out_shape=jax.ShapeDtypeStruct((steps, batch_pad, vocab_pad), jnp.float32),
        grid_spec=pltpu.PrefetchScalarGridSpec(
            num_scalar_prefetch=1,                       # tf_mask -> SMEM
            grid=(1,),
            in_specs=[
                pl.BlockSpec(trg_in.shape, lambda i, tf: (0, 0, 0)),
                pl.BlockSpec(h0.shape, lambda i, tf: (0, 0)),
                pl.BlockSpec(emb_w.shape, lambda i, tf: (0, 0)),
                pl.BlockSpec(w_hh.shape, lambda i, tf: (0, 0)),
                pl.BlockSpec(b.shape, lambda i, tf: (0, 0)),
                pl.BlockSpec(w_fc.shape, lambda i, tf: (0, 0)),
                pl.BlockSpec(b_fc.shape, lambda i, tf: (0, 0)),
            ],
            out_specs=pl.BlockSpec((steps, batch_pad, vocab_pad),
                                   lambda i, tf: (0, 0, 0)),
        ),
        compiler_params=pltpu.CompilerParams(
            dimension_semantics=("arbitrary",)),
    )(tf_mask, trg_in, h0, emb_w, w_hh, b, w_fc, b_fc)


# ------------------------------- glue (JAX) --------------------------------- #
def _adjust_hidden(hidden, target_layers):
    # hidden: (num_layers, batch, hidden)
    current = hidden.shape[0]
    if current == target_layers:
        return hidden
    elif current < target_layers:
        diff = target_layers - current
        last = hidden[-1:, :, :]
        return jnp.concatenate([hidden, jnp.tile(last, (diff, 1, 1))], axis=0)
    else:
        return hidden[:target_layers]


@functools.partial(jax.jit, static_argnames=("out_vocab",))
def seq2seq_forward(params, src, trg, key, teacher_forcing_ratio, out_vocab):
    batch, src_len = src.shape
    _, trg_len = trg.shape
    batch_pad = _round_up(batch, 8)
    emb_pad = params["enc_emb"].shape[1]

    # --- encoder (embedding gather stays in plain JAX) -----------------------
    src_emb = jnp.take(params["enc_emb"], src, axis=0)         # (B, S, Ep)
    x_tm = jnp.zeros((src_len, batch_pad, emb_pad), jnp.bfloat16)
    x_tm = x_tm.at[:, :batch, :].set(
        jnp.transpose(src_emb, (1, 0, 2)).astype(jnp.bfloat16))
    enc_h = encoder_forward(x_tm, params["enc_wx"], params["enc_wh"],
                            params["enc_b"])

    # layer-count adjustment (1 encoder layer -> 1 decoder layer here)
    dec_h = _adjust_hidden(enc_h[None], 1)[0]                  # (Bp, Hp)

    # --- decoder: one fused kernel over all time steps -----------------------
    steps = trg_len - 1
    tf_mask = (jax.random.uniform(key, (steps,)) <
               teacher_forcing_ratio).astype(jnp.int32)
    trg_in = jnp.zeros((steps, batch_pad, 1), jnp.int32)
    trg_in = trg_in.at[:, :batch, 0].set(trg[:, :steps].T)

    logits_tm = decoder_forward(tf_mask, trg_in, dec_h, params["dec_embw"],
                                params["dec_wh"], params["dec_b"],
                                params["fc_w"], params["fc_b"],
                                vocab_real=out_vocab)
    logits = jnp.transpose(logits_tm, (1, 0, 2))[:batch, :, :out_vocab]
    outputs = jnp.concatenate(
        [jnp.zeros((batch, 1, out_vocab), jnp.float32), logits], axis=1)
    return outputs


# ------------------------------ parameters ---------------------------------- #
def init_params(key, src_vocab, trg_vocab, emb, hidden):
    """Logical (PyTorch-layout) parameters."""
    ks = jax.random.split(key, 12)
    s = 1.0 / float(hidden) ** 0.5
    u = lambda k, shape, a: jax.random.uniform(k, shape, jnp.float32, -a, a)
    return {
        "enc_emb":  u(ks[0], (src_vocab, emb), 1.0),
        "enc_w_ih": u(ks[1], (hidden, emb), s),
        "enc_w_hh": u(ks[2], (hidden, hidden), s),
        "enc_b_ih": u(ks[3], (hidden,), s),
        "enc_b_hh": u(ks[4], (hidden,), s),
        "dec_emb":  u(ks[5], (trg_vocab, emb), 1.0),
        "dec_w_ih": u(ks[6], (hidden, emb), s),
        "dec_w_hh": u(ks[7], (hidden, hidden), s),
        "dec_b_ih": u(ks[8], (hidden,), s),
        "dec_b_hh": u(ks[9], (hidden,), s),
        "fc_w":     u(ks[10], (trg_vocab, hidden), s),
        "fc_b":     u(ks[11], (trg_vocab,), s),
    }


def pack_params(p):
    """Pad to lane-dense tiles, pre-transpose / pre-fold weights, cast MXU operands to bf16."""
    src_vocab, E = p["enc_emb"].shape
    V, H = p["fc_w"].shape
    Ep, Hp, Vp = _round_up(E, 128), _round_up(H, 128), _round_up(V, 128)

    def pad2(a, rows, cols):
        out = jnp.zeros((rows, cols), jnp.float32)
        return out.at[:a.shape[0], :a.shape[1]].set(a)

    # Encoder: separate input / recurrent matrices (no in-kernel concat).
    enc_wx = pad2(p["enc_w_ih"].T, Ep, Hp)
    enc_wh = pad2(p["enc_w_hh"].T, Hp, Hp)
    enc_b = jnp.zeros((1, Hp), jnp.float32).at[0, :H].set(p["enc_b_ih"] + p["enc_b_hh"])

    # Decoder: embedding folded into the input projection  (V, H) = emb @ W_ih^T.
    dec_embw = pad2(p["dec_emb"] @ p["dec_w_ih"].T, Vp, Hp)
    dec_wh = pad2(p["dec_w_hh"].T, Hp, Hp)
    dec_b = jnp.zeros((1, Hp), jnp.float32).at[0, :H].set(p["dec_b_ih"] + p["dec_b_hh"])

    fc_w = pad2(p["fc_w"].T, Hp, Vp)
    fc_b = jnp.zeros((1, Vp), jnp.float32).at[0, :V].set(p["fc_b"])

    return {
        "enc_emb": jnp.zeros((src_vocab, Ep), jnp.float32).at[:, :E].set(p["enc_emb"]),
        "enc_wx": enc_wx.astype(jnp.bfloat16),
        "enc_wh": enc_wh.astype(jnp.bfloat16),
        "enc_b": enc_b,
        "dec_embw": dec_embw.astype(jnp.bfloat16),
        "dec_wh": dec_wh.astype(jnp.bfloat16),
        "dec_b": dec_b,
        "fc_w": fc_w.astype(jnp.bfloat16),
        "fc_b": fc_b,
    }


if __name__ == "__main__":
    key = jax.random.PRNGKey(0)
    pkey, skey, tkey, fkey = jax.random.split(key, 4)

    batch, src_len, trg_len = 2, 8, 8
    emb, hidden = 16, 32
    src_vocab, trg_vocab = 24, 24

    params = pack_params(init_params(pkey, src_vocab, trg_vocab, emb, hidden))
    src = jax.random.randint(skey, (batch, src_len), 0, src_vocab, dtype=jnp.int32)
    trg = jax.random.randint(tkey, (batch, trg_len), 0, trg_vocab, dtype=jnp.int32)

    out = seq2seq_forward(params, src, trg, fkey, 0.5, out_vocab=trg_vocab)
    out = jax.block_until_ready(out)
    assert out.shape == (batch, trg_len, trg_vocab)
    assert bool(jnp.all(out[:, 0] == 0.0))       # outputs[:, 0] stays zero (torch.zeros)
    assert bool(jnp.all(jnp.isfinite(out)))
    print("KERNEL_OK")
</pallas_src>

<mosaic_0001>
module attributes {stable_mosaic.version = 11 : i64} {
  func.func @kernel(%arg0: i32, %arg1: memref<8x8x128xbf16, #tpu.memory_space<vmem>>, %arg2: memref<128x128xbf16, #tpu.memory_space<vmem>>, %arg3: memref<128x128xbf16, #tpu.memory_space<vmem>>, %arg4: memref<1x128xf32, #tpu.memory_space<vmem>>, %arg5: memref<8x128xf32, #tpu.memory_space<vmem>>) attributes {dimension_semantics = [#tpu.dimension_semantics<arbitrary>], iteration_bounds = array<i64: 1>, scalar_prefetch = 0 : i64, scratch_operands = 0 : i64, tpu.core_type = #tpu.core_type<tc>, window_params = [{pipeline_mode = #tpu.pipeline_mode<synchronous>, transform_indices = @transform_0, window_bounds = array<i64: 8, 8, 128>}, {pipeline_mode = #tpu.pipeline_mode<synchronous>, transform_indices = @transform_1, window_bounds = array<i64: 128, 128>}, {pipeline_mode = #tpu.pipeline_mode<synchronous>, transform_indices = @transform_2, window_bounds = array<i64: 128, 128>}, {pipeline_mode = #tpu.pipeline_mode<synchronous>, transform_indices = @transform_3, window_bounds = array<i64: 1, 128>}, {pipeline_mode = #tpu.pipeline_mode<synchronous>, transform_indices = @transform_4, window_bounds = array<i64: 8, 128>}]} {
    %c0 = arith.constant 0 : index
    %c0_0 = arith.constant 0 : index
    %0 = vector.load %arg2[%c0, %c0_0] : memref<128x128xbf16, #tpu.memory_space<vmem>>, vector<128x128xbf16>
    %c0_1 = arith.constant 0 : index
    %c0_2 = arith.constant 0 : index
    %1 = vector.load %arg3[%c0_1, %c0_2] : memref<128x128xbf16, #tpu.memory_space<vmem>>, vector<128x128xbf16>
    %c0_3 = arith.constant 0 : index
    %c0_4 = arith.constant 0 : index
    %2 = vector.load %arg4[%c0_3, %c0_4] : memref<1x128xf32, #tpu.memory_space<vmem>>, vector<1x128xf32>
    %cst = arith.constant 0.000000e+00 : f32
    %3 = vector.broadcast %cst : f32 to vector<8x128xf32>
    %c0_i32 = arith.constant 0 : i32
    %4 = arith.index_cast %c0_i32 : i32 to index
    %c0_5 = arith.constant 0 : index
    %c0_6 = arith.constant 0 : index
    %5 = vector.load %arg1[%4, %c0_5, %c0_6] : memref<8x8x128xbf16, #tpu.memory_space<vmem>>, vector<1x8x128xbf16>
    %6 = vector.shape_cast %5 : vector<1x8x128xbf16> to vector<8x128xbf16>
    %cst_7 = arith.constant dense<0.000000e+00> : vector<8x128xf32>
    %7 = tpu.matmul %6, %0, %cst_7 {dimension_numbers = #tpu.dot_dimension_numbers<[1], [0], [0], [1], [0, 0, 1, 1], [], []>} : vector<8x128xbf16>, vector<128x128xbf16>, vector<8x128xf32> -> vector<8x128xf32>
    %8 = arith.truncf %3 : vector<8x128xf32> to vector<8x128xbf16>
    %cst_8 = arith.constant dense<0.000000e+00> : vector<8x128xf32>
    %9 = tpu.matmul %8, %1, %cst_8 {dimension_numbers = #tpu.dot_dimension_numbers<[1], [0], [0], [1], [0, 0, 1, 1], [], []>} : vector<8x128xbf16>, vector<128x128xbf16>, vector<8x128xf32> -> vector<8x128xf32>
    %10 = arith.addf %7, %9 : vector<8x128xf32>
    %11 = vector.broadcast %2 : vector<1x128xf32> to vector<8x128xf32>
    %12 = arith.addf %10, %11 : vector<8x128xf32>
    %13 = math.tanh %12 : vector<8x128xf32>
    %c1_i32 = arith.constant 1 : i32
    %14 = arith.index_cast %c1_i32 : i32 to index
    %c0_9 = arith.constant 0 : index
    %c0_10 = arith.constant 0 : index
    %15 = vector.load %arg1[%14, %c0_9, %c0_10] : memref<8x8x128xbf16, #tpu.memory_space<vmem>>, vector<1x8x128xbf16>
    %16 = vector.shape_cast %15 : vector<1x8x128xbf16> to vector<8x128xbf16>
    %cst_11 = arith.constant dense<0.000000e+00> : vector<8x128xf32>
    %17 = tpu.matmul %16, %0, %cst_11 {dimension_numbers = #tpu.dot_dimension_numbers<[1], [0], [0], [1], [0, 0, 1, 1], [], []>} : vector<8x128xbf16>, vector<128x128xbf16>, vector<8x128xf32> -> vector<8x128xf32>
    %18 = arith.truncf %13 : vector<8x128xf32> to vector<8x128xbf16>
    %cst_12 = arith.constant dense<0.000000e+00> : vector<8x128xf32>
    %19 = tpu.matmul %18, %1, %cst_12 {dimension_numbers = #tpu.dot_dimension_numbers<[1], [0], [0], [1], [0, 0, 1, 1], [], []>} : vector<8x128xbf16>, vector<128x128xbf16>, vector<8x128xf32> -> vector<8x128xf32>
    %20 = arith.addf %17, %19 : vector<8x128xf32>
    %21 = vector.broadcast %2 : vector<1x128xf32> to vector<8x128xf32>
    %22 = arith.addf %20, %21 : vector<8x128xf32>
    %23 = math.tanh %22 : vector<8x128xf32>
    %c2_i32 = arith.constant 2 : i32
    %24 = arith.index_cast %c2_i32 : i32 to index
    %c0_13 = arith.constant 0 : index
    %c0_14 = arith.constant 0 : index
    %25 = vector.load %arg1[%24, %c0_13, %c0_14] : memref<8x8x128xbf16, #tpu.memory_space<vmem>>, vector<1x8x128xbf16>
    %26 = vector.shape_cast %25 : vector<1x8x128xbf16> to vector<8x128xbf16>
    %cst_15 = arith.constant dense<0.000000e+00> : vector<8x128xf32>
    %27 = tpu.matmul %26, %0, %cst_15 {dimension_numbers = #tpu.dot_dimension_numbers<[1], [0], [0], [1], [0, 0, 1, 1], [], []>} : vector<8x128xbf16>, vector<128x128xbf16>, vector<8x128xf32> -> vector<8x128xf32>
    %28 = arith.truncf %23 : vector<8x128xf32> to vector<8x128xbf16>
    %cst_16 = arith.constant dense<0.000000e+00> : vector<8x128xf32>
    %29 = tpu.matmul %28, %1, %cst_16 {dimension_numbers = #tpu.dot_dimension_numbers<[1], [0], [0], [1], [0, 0, 1, 1], [], []>} : vector<8x128xbf16>, vector<128x128xbf16>, vector<8x128xf32> -> vector<8x128xf32>
    %30 = arith.addf %27, %29 : vector<8x128xf32>
    %31 = vector.broadcast %2 : vector<1x128xf32> to vector<8x128xf32>
    %32 = arith.addf %30, %31 : vector<8x128xf32>
    %33 = math.tanh %32 : vector<8x128xf32>
    %c3_i32 = arith.constant 3 : i32
    %34 = arith.index_cast %c3_i32 : i32 to index
    %c0_17 = arith.constant 0 : index
    %c0_18 = arith.constant 0 : index
    %35 = vector.load %arg1[%34, %c0_17, %c0_18] : memref<8x8x128xbf16, #tpu.memory_space<vmem>>, vector<1x8x128xbf16>
    %36 = vector.shape_cast %35 : vector<1x8x128xbf16> to vector<8x128xbf16>
    %cst_19 = arith.constant dense<0.000000e+00> : vector<8x128xf32>
    %37 = tpu.matmul %36, %0, %cst_19 {dimension_numbers = #tpu.dot_dimension_numbers<[1], [0], [0], [1], [0, 0, 1, 1], [], []>} : vector<8x128xbf16>, vector<128x128xbf16>, vector<8x128xf32> -> vector<8x128xf32>
    %38 = arith.truncf %33 : vector<8x128xf32> to vector<8x128xbf16>
    %cst_20 = arith.constant dense<0.000000e+00> : vector<8x128xf32>
    %39 = tpu.matmul %38, %1, %cst_20 {dimension_numbers = #tpu.dot_dimension_numbers<[1], [0], [0], [1], [0, 0, 1, 1], [], []>} : vector<8x128xbf16>, vector<128x128xbf16>, vector<8x128xf32> -> vector<8x128xf32>
    %40 = arith.addf %37, %39 : vector<8x128xf32>
    %41 = vector.broadcast %2 : vector<1x128xf32> to vector<8x128xf32>
    %42 = arith.addf %40, %41 : vector<8x128xf32>
    %43 = math.tanh %42 : vector<8x128xf32>
    %c4_i32 = arith.constant 4 : i32
    %44 = arith.index_cast %c4_i32 : i32 to index
    %c0_21 = arith.constant 0 : index
    %c0_22 = arith.constant 0 : index
    %45 = vector.load %arg1[%44, %c0_21, %c0_22] : memref<8x8x128xbf16, #tpu.memory_space<vmem>>, vector<1x8x128xbf16>
    %46 = vector.shape_cast %45 : vector<1x8x128xbf16> to vector<8x128xbf16>
    %cst_23 = arith.constant dense<0.000000e+00> : vector<8x128xf32>
    %47 = tpu.matmul %46, %0, %cst_23 {dimension_numbers = #tpu.dot_dimension_numbers<[1], [0], [0], [1], [0, 0, 1, 1], [], []>} : vector<8x128xbf16>, vector<128x128xbf16>, vector<8x128xf32> -> vector<8x128xf32>
    %48 = arith.truncf %43 : vector<8x128xf32> to vector<8x128xbf16>
    %cst_24 = arith.constant dense<0.000000e+00> : vector<8x128xf32>
    %49 = tpu.matmul %48, %1, %cst_24 {dimension_numbers = #tpu.dot_dimension_numbers<[1], [0], [0], [1], [0, 0, 1, 1], [], []>} : vector<8x128xbf16>, vector<128x128xbf16>, vector<8x128xf32> -> vector<8x128xf32>
    %50 = arith.addf %47, %49 : vector<8x128xf32>
    %51 = vector.broadcast %2 : vector<1x128xf32> to vector<8x128xf32>
    %52 = arith.addf %50, %51 : vector<8x128xf32>
    %53 = math.tanh %52 : vector<8x128xf32>
    %c5_i32 = arith.constant 5 : i32
    %54 = arith.index_cast %c5_i32 : i32 to index
    %c0_25 = arith.constant 0 : index
    %c0_26 = arith.constant 0 : index
    %55 = vector.load %arg1[%54, %c0_25, %c0_26] : memref<8x8x128xbf16, #tpu.memory_space<vmem>>, vector<1x8x128xbf16>
    %56 = vector.shape_cast %55 : vector<1x8x128xbf16> to vector<8x128xbf16>
    %cst_27 = arith.constant dense<0.000000e+00> : vector<8x128xf32>
    %57 = tpu.matmul %56, %0, %cst_27 {dimension_numbers = #tpu.dot_dimension_numbers<[1], [0], [0], [1], [0, 0, 1, 1], [], []>} : vector<8x128xbf16>, vector<128x128xbf16>, vector<8x128xf32> -> vector<8x128xf32>
    %58 = arith.truncf %53 : vector<8x128xf32> to vector<8x128xbf16>
    %cst_28 = arith.constant dense<0.000000e+00> : vector<8x128xf32>
    %59 = tpu.matmul %58, %1, %cst_28 {dimension_numbers = #tpu.dot_dimension_numbers<[1], [0], [0], [1], [0, 0, 1, 1], [], []>} : vector<8x128xbf16>, vector<128x128xbf16>, vector<8x128xf32> -> vector<8x128xf32>
    %60 = arith.addf %57, %59 : vector<8x128xf32>
    %61 = vector.broadcast %2 : vector<1x128xf32> to vector<8x128xf32>
    %62 = arith.addf %60, %61 : vector<8x128xf32>
    %63 = math.tanh %62 : vector<8x128xf32>
    %c6_i32 = arith.constant 6 : i32
    %64 = arith.index_cast %c6_i32 : i32 to index
    %c0_29 = arith.constant 0 : index
    %c0_30 = arith.constant 0 : index
    %65 = vector.load %arg1[%64, %c0_29, %c0_30] : memref<8x8x128xbf16, #tpu.memory_space<vmem>>, vector<1x8x128xbf16>
    %66 = vector.shape_cast %65 : vector<1x8x128xbf16> to vector<8x128xbf16>
    %cst_31 = arith.constant dense<0.000000e+00> : vector<8x128xf32>
    %67 = tpu.matmul %66, %0, %cst_31 {dimension_numbers = #tpu.dot_dimension_numbers<[1], [0], [0], [1], [0, 0, 1, 1], [], []>} : vector<8x128xbf16>, vector<128x128xbf16>, vector<8x128xf32> -> vector<8x128xf32>
    %68 = arith.truncf %63 : vector<8x128xf32> to vector<8x128xbf16>
    %cst_32 = arith.constant dense<0.000000e+00> : vector<8x128xf32>
    %69 = tpu.matmul %68, %1, %cst_32 {dimension_numbers = #tpu.dot_dimension_numbers<[1], [0], [0], [1], [0, 0, 1, 1], [], []>} : vector<8x128xbf16>, vector<128x128xbf16>, vector<8x128xf32> -> vector<8x128xf32>
    %70 = arith.addf %67, %69 : vector<8x128xf32>
    %71 = vector.broadcast %2 : vector<1x128xf32> to vector<8x128xf32>
    %72 = arith.addf %70, %71 : vector<8x128xf32>
    %73 = math.tanh %72 : vector<8x128xf32>
    %c7_i32 = arith.constant 7 : i32
    %74 = arith.index_cast %c7_i32 : i32 to index
    %c0_33 = arith.constant 0 : index
    %c0_34 = arith.constant 0 : index
    %75 = vector.load %arg1[%74, %c0_33, %c0_34] : memref<8x8x128xbf16, #tpu.memory_space<vmem>>, vector<1x8x128xbf16>
    %76 = vector.shape_cast %75 : vector<1x8x128xbf16> to vector<8x128xbf16>
    %cst_35 = arith.constant dense<0.000000e+00> : vector<8x128xf32>
    %77 = tpu.matmul %76, %0, %cst_35 {dimension_numbers = #tpu.dot_dimension_numbers<[1], [0], [0], [1], [0, 0, 1, 1], [], []>} : vector<8x128xbf16>, vector<128x128xbf16>, vector<8x128xf32> -> vector<8x128xf32>
    %78 = arith.truncf %73 : vector<8x128xf32> to vector<8x128xbf16>
    %cst_36 = arith.constant dense<0.000000e+00> : vector<8x128xf32>
    %79 = tpu.matmul %78, %1, %cst_36 {dimension_numbers = #tpu.dot_dimension_numbers<[1], [0], [0], [1], [0, 0, 1, 1], [], []>} : vector<8x128xbf16>, vector<128x128xbf16>, vector<8x128xf32> -> vector<8x128xf32>
    %80 = arith.addf %77, %79 : vector<8x128xf32>
    %81 = vector.broadcast %2 : vector<1x128xf32> to vector<8x128xf32>
    %82 = arith.addf %80, %81 : vector<8x128xf32>
    %83 = math.tanh %82 : vector<8x128xf32>
    %c8_i32 = arith.constant 8 : i32
    %c0_37 = arith.constant 0 : index
    %c0_38 = arith.constant 0 : index
    %84 = vector.load %arg5[%c0_37, %c0_38] : memref<8x128xf32, #tpu.memory_space<vmem>>, vector<8x128xf32>
    tpu.vector_store %arg5[%c0_37, %c0_38], %83 {strides = array<i32>} : memref<8x128xf32, #tpu.memory_space<vmem>>, vector<8x128xf32>,
    return
  }
  func.func @transform_0(%arg0: i32) -> (i32, i32, i32) {
    %c0_i32 = arith.constant 0 : i32
    %c0_i32_0 = arith.constant 0 : i32
    %c0_i32_1 = arith.constant 0 : i32
    %c0_i32_2 = arith.constant 0 : i32
    return %c0_i32, %c0_i32_0, %c0_i32_1 : i32, i32, i32
  }
  func.func @transform_1(%arg0: i32) -> (i32, i32) {
    %c0_i32 = arith.constant 0 : i32
    %c0_i32_0 = arith.constant 0 : i32
    %c0_i32_1 = arith.constant 0 : i32
    return %c0_i32, %c0_i32_0 : i32, i32
  }
  func.func @transform_2(%arg0: i32) -> (i32, i32) {
    %c0_i32 = arith.constant 0 : i32
    %c0_i32_0 = arith.constant 0 : i32
    %c0_i32_1 = arith.constant 0 : i32
    return %c0_i32, %c0_i32_0 : i32, i32
  }
  func.func @transform_3(%arg0: i32) -> (i32, i32) {
    %c0_i32 = arith.constant 0 : i32
    %c0_i32_0 = arith.constant 0 : i32
    %c0_i32_1 = arith.constant 0 : i32
    return %c0_i32, %c0_i32_0 : i32, i32
  }
  func.func @transform_4(%arg0: i32) -> (i32, i32) {
    %c0_i32 = arith.constant 0 : i32
    %c0_i32_0 = arith.constant 0 : i32
    %c0_i32_1 = arith.constant 0 : i32
    return %c0_i32, %c0_i32_0 : i32, i32
  }
}

module attributes {stable_mosaic.version = 11 : i64} {
  func.func @kernel(%arg0: i32, %arg1: memref<7xi32, #tpu.memory_space<smem>>, %arg2: memref<7x8x1xi32, #tpu.memory_space<vmem>>, %arg3: memref<8x128xf32, #tpu.memory_space<vmem>>, %arg4: memref<128x128xbf16, #tpu.memory_space<vmem>>, %arg5: memref<128x128xbf16, #tpu.memory_space<vmem>>, %arg6: memref<1x128xf32, #tpu.memory_space<vmem>>, %arg7: memref<128x128xbf16, #tpu.memory_space<vmem>>, %arg8: memref<1x128xf32, #tpu.memory_space<vmem>>, %arg9: memref<7x8x128xf32, #tpu.memory_space<vmem>>) attributes {dimension_semantics = [#tpu.dimension_semantics<arbitrary>], iteration_bounds = array<i64: 1>, scalar_prefetch = 1 : i64, scratch_operands = 0 : i64, tpu.core_type = #tpu.core_type<tc>, window_params = [{pipeline_mode = #tpu.pipeline_mode<synchronous>, transform_indices = @transform_0, window_bounds = array<i64: 7, 8, 1>}, {pipeline_mode = #tpu.pipeline_mode<synchronous>, transform_indices = @transform_1, window_bounds = array<i64: 8, 128>}, {pipeline_mode = #tpu.pipeline_mode<synchronous>, transform_indices = @transform_2, window_bounds = array<i64: 128, 128>}, {pipeline_mode = #tpu.pipeline_mode<synchronous>, transform_indices = @transform_3, window_bounds = array<i64: 128, 128>}, {pipeline_mode = #tpu.pipeline_mode<synchronous>, transform_indices = @transform_4, window_bounds = array<i64: 1, 128>}, {pipeline_mode = #tpu.pipeline_mode<synchronous>, transform_indices = @transform_5, window_bounds = array<i64: 128, 128>}, {pipeline_mode = #tpu.pipeline_mode<synchronous>, transform_indices = @transform_6, window_bounds = array<i64: 1, 128>}, {pipeline_mode = #tpu.pipeline_mode<synchronous>, transform_indices = @transform_7, window_bounds = array<i64: 7, 8, 128>}]} {
    %c0 = arith.constant 0 : index
    %c0_0 = arith.constant 0 : index
    %0 = vector.load %arg4[%c0, %c0_0] : memref<128x128xbf16, #tpu.memory_space<vmem>>, vector<128x128xbf16>
    %c0_1 = arith.constant 0 : index
    %c0_2 = arith.constant 0 : index
    %1 = vector.load %arg5[%c0_1, %c0_2] : memref<128x128xbf16, #tpu.memory_space<vmem>>, vector<128x128xbf16>
    %c0_3 = arith.constant 0 : index
    %c0_4 = arith.constant 0 : index
    %2 = vector.load %arg6[%c0_3, %c0_4] : memref<1x128xf32, #tpu.memory_space<vmem>>, vector<1x128xf32>
    %c0_5 = arith.constant 0 : index
    %c0_6 = arith.constant 0 : index
    %3 = vector.load %arg7[%c0_5, %c0_6] : memref<128x128xbf16, #tpu.memory_space<vmem>>, vector<128x128xbf16>
    %c0_7 = arith.constant 0 : index
    %c0_8 = arith.constant 0 : index
    %4 = vector.load %arg8[%c0_7, %c0_8] : memref<1x128xf32, #tpu.memory_space<vmem>>, vector<1x128xf32>
    %5 = tpu.iota {dimensions = array<i32: 1>} : vector<8x128xi32>
    %c0_9 = arith.constant 0 : index
    %c0_10 = arith.constant 0 : index
    %6 = vector.load %arg3[%c0_9, %c0_10] : memref<8x128xf32, #tpu.memory_space<vmem>>, vector<8x128xf32>
    %c0_i32 = arith.constant 0 : i32
    %7 = vector.broadcast %c0_i32 : i32 to vector<8x1xi32>
    %c0_i32_11 = arith.constant 0 : i32
    %c0_i32_12 = arith.constant 0 : i32
    %8 = arith.cmpi eq, %c0_i32_11, %c0_i32_12 : i32
    %9 = arith.index_cast %c0_i32_11 : i32 to index
    %10 = memref.load %arg1[%9] : memref<7xi32, #tpu.memory_space<smem>>
    %c0_i32_13 = arith.constant 0 : i32
    %11 = arith.cmpi ne, %10, %c0_i32_13 : i32
    %12 = arith.ori %8, %11 : i1
    %13 = arith.index_cast %c0_i32_11 : i32 to index
    %c0_14 = arith.constant 0 : index
    %c0_15 = arith.constant 0 : index
    %14 = vector.load %arg2[%13, %c0_14, %c0_15] : memref<7x8x1xi32, #tpu.memory_space<vmem>>, vector<1x8x1xi32>
    %15 = vector.shape_cast %14 : vector<1x8x1xi32> to vector<8x1xi32>
    %16 = arith.select %12, %15, %7 : vector<8x1xi32>
    %17 = vector.broadcast %16 : vector<8x1xi32> to vector<8x128xi32>
    %18 = arith.cmpi eq, %5, %17 : vector<8x128xi32>
    %19 = arith.extui %18 : vector<8x128xi1> to vector<8x128xi32>
    %20 = arith.sitofp %19 : vector<8x128xi32> to vector<8x128xf32>
    %21 = arith.truncf %20 : vector<8x128xf32> to vector<8x128xbf16>
    %cst = arith.constant dense<0.000000e+00> : vector<8x128xf32>
    %22 = tpu.matmul %21, %0, %cst {dimension_numbers = #tpu.dot_dimension_numbers<[1], [0], [0], [1], [0, 0, 1, 1], [], []>} : vector<8x128xbf16>, vector<128x128xbf16>, vector<8x128xf32> -> vector<8x128xf32>
    %23 = arith.truncf %6 : vector<8x128xf32> to vector<8x128xbf16>
    %cst_16 = arith.constant dense<0.000000e+00> : vector<8x128xf32>
    %24 = tpu.matmul %23, %1, %cst_16 {dimension_numbers = #tpu.dot_dimension_numbers<[1], [0], [0], [1], [0, 0, 1, 1], [], []>} : vector<8x128xbf16>, vector<128x128xbf16>, vector<8x128xf32> -> vector<8x128xf32>
    %25 = arith.addf %22, %24 : vector<8x128xf32>
    %26 = vector.broadcast %2 : vector<1x128xf32> to vector<8x128xf32>
    %27 = arith.addf %25, %26 : vector<8x128xf32>
    %28 = math.tanh %27 : vector<8x128xf32>
    %29 = arith.truncf %28 : vector<8x128xf32> to vector<8x128xbf16>
    %cst_17 = arith.constant dense<0.000000e+00> : vector<8x128xf32>
    %30 = tpu.matmul %29, %3, %cst_17 {dimension_numbers = #tpu.dot_dimension_numbers<[1], [0], [0], [1], [0, 0, 1, 1], [], []>} : vector<8x128xbf16>, vector<128x128xbf16>, vector<8x128xf32> -> vector<8x128xf32>
    %31 = vector.broadcast %4 : vector<1x128xf32> to vector<8x128xf32>
    %32 = arith.addf %30, %31 : vector<8x128xf32>
    %33 = arith.index_cast %c0_i32_11 : i32 to index
    %c0_18 = arith.constant 0 : index
    %c0_19 = arith.constant 0 : index
    %34 = vector.load %arg9[%33, %c0_18, %c0_19] : memref<7x8x128xf32, #tpu.memory_space<vmem>>, vector<1x8x128xf32>
    %35 = vector.shape_cast %34 : vector<1x8x128xf32> to vector<8x128xf32>
    %36 = vector.shape_cast %32 : vector<8x128xf32> to vector<1x8x128xf32>
    tpu.vector_store %arg9[%33, %c0_18, %c0_19], %36 {strides = array<i32>} : memref<7x8x128xf32, #tpu.memory_space<vmem>>, vector<1x8x128xf32>,
    %c24_i32 = arith.constant 24 : i32
    %37 = vector.broadcast %c24_i32 : i32 to vector<8x128xi32>
    %38 = arith.cmpi slt, %5, %37 : vector<8x128xi32>
    %cst_20 = arith.constant -1.000000e+30 : f32
    %39 = vector.broadcast %cst_20 : f32 to vector<8x128xf32>
    %40 = arith.select %38, %32, %39 : vector<8x128xi1>, vector<8x128xf32>
    %cst_21 = arith.constant dense<0xFF800000> : vector<8xf32>
    %41 = vector.multi_reduction <maximumf>, %40, %cst_21 [1] : vector<8x128xf32> to vector<8xf32>
    %42 = vector.shape_cast %41 : vector<8xf32> to vector<8x1xf32>
    %43 = vector.broadcast %42 : vector<8x1xf32> to vector<8x128xf32>
    %44 = arith.cmpf oge, %40, %43 : vector<8x128xf32>
    %c128_i32 = arith.constant 128 : i32
    %45 = vector.broadcast %c128_i32 : i32 to vector<8x128xi32>
    %46 = arith.select %44, %5, %45 : vector<8x128xi1>, vector<8x128xi32>
    %cst_22 = arith.constant dense<2147483647> : vector<8xi32>
    %47 = vector.multi_reduction <minsi>, %46, %cst_22 [1] : vector<8x128xi32> to vector<8xi32>
    %48 = vector.shape_cast %47 : vector<8xi32> to vector<8x1xi32>
    %c1_i32 = arith.constant 1 : i32
    %c0_i32_23 = arith.constant 0 : i32
    %49 = arith.cmpi eq, %c1_i32, %c0_i32_23 : i32
    %50 = arith.index_cast %c1_i32 : i32 to index
    %51 = memref.load %arg1[%50] : memref<7xi32, #tpu.memory_space<smem>>
    %c0_i32_24 = arith.constant 0 : i32
    %52 = arith.cmpi ne, %51, %c0_i32_24 : i32
    %53 = arith.ori %49, %52 : i1
    %54 = arith.index_cast %c1_i32 : i32 to index
    %c0_25 = arith.constant 0 : index
    %c0_26 = arith.constant 0 : index
    %55 = vector.load %arg2[%54, %c0_25, %c0_26] : memref<7x8x1xi32, #tpu.memory_space<vmem>>, vector<1x8x1xi32>
    %56 = vector.shape_cast %55 : vector<1x8x1xi32> to vector<8x1xi32>
    %57 = arith.select %53, %56, %48 : vector<8x1xi32>
    %58 = vector.broadcast %57 : vector<8x1xi32> to vector<8x128xi32>
    %59 = arith.cmpi eq, %5, %58 : vector<8x128xi32>
    %60 = arith.extui %59 : vector<8x128xi1> to vector<8x128xi32>
    %61 = arith.sitofp %60 : vector<8x128xi32> to vector<8x128xf32>
    %62 = arith.truncf %61 : vector<8x128xf32> to vector<8x128xbf16>
    %cst_27 = arith.constant dense<0.000000e+00> : vector<8x128xf32>
    %63 = tpu.matmul %62, %0, %cst_27 {dimension_numbers = #tpu.dot_dimension_numbers<[1], [0], [0], [1], [0, 0, 1, 1], [], []>} : vector<8x128xbf16>, vector<128x128xbf16>, vector<8x128xf32> -> vector<8x128xf32>
    %64 = arith.truncf %28 : vector<8x128xf32> to vector<8x128xbf16>
    %cst_28 = arith.constant dense<0.000000e+00> : vector<8x128xf32>
    %65 = tpu.matmul %64, %1, %cst_28 {dimension_numbers = #tpu.dot_dimension_numbers<[1], [0], [0], [1], [0, 0, 1, 1], [], []>} : vector<8x128xbf16>, vector<128x128xbf16>, vector<8x128xf32> -> vector<8x128xf32>
    %66 = arith.addf %63, %65 : vector<8x128xf32>
    %67 = vector.broadcast %2 : vector<1x128xf32> to vector<8x128xf32>
    %68 = arith.addf %66, %67 : vector<8x128xf32>
    %69 = math.tanh %68 : vector<8x128xf32>
    %70 = arith.truncf %69 : vector<8x128xf32> to vector<8x128xbf16>
    %cst_29 = arith.constant dense<0.000000e+00> : vector<8x128xf32>
    %71 = tpu.matmul %70, %3, %cst_29 {dimension_numbers = #tpu.dot_dimension_numbers<[1], [0], [0], [1], [0, 0, 1, 1], [], []>} : vector<8x128xbf16>, vector<128x128xbf16>, vector<8x128xf32> -> vector<8x128xf32>
    %72 = vector.broadcast %4 : vector<1x128xf32> to vector<8x128xf32>
    %73 = arith.addf %71, %72 : vector<8x128xf32>
    %74 = arith.index_cast %c1_i32 : i32 to index
    %c0_30 = arith.constant 0 : index
    %c0_31 = arith.constant 0 : index
    %75 = vector.load %arg9[%74, %c0_30, %c0_31] : memref<7x8x128xf32, #tpu.memory_space<vmem>>, vector<1x8x128xf32>
    %76 = vector.shape_cast %75 : vector<1x8x128xf32> to vector<8x128xf32>
    %77 = vector.shape_cast %73 : vector<8x128xf32> to vector<1x8x128xf32>
    tpu.vector_store %arg9[%74, %c0_30, %c0_31], %77 {strides = array<i32>} : memref<7x8x128xf32, #tpu.memory_space<vmem>>, vector<1x8x128xf32>,
    %c24_i32_32 = arith.constant 24 : i32
    %78 = vector.broadcast %c24_i32_32 : i32 to vector<8x128xi32>
    %79 = arith.cmpi slt, %5, %78 : vector<8x128xi32>
    %cst_33 = arith.constant -1.000000e+30 : f32
    %80 = vector.broadcast %cst_33 : f32 to vector<8x128xf32>
    %81 = arith.select %79, %73, %80 : vector<8x128xi1>, vector<8x128xf32>
    %cst_34 = arith.constant dense<0xFF800000> : vector<8xf32>
    %82 = vector.multi_reduction <maximumf>, %81, %cst_34 [1] : vector<8x128xf32> to vector<8xf32>
    %83 = vector.shape_cast %82 : vector<8xf32> to vector<8x1xf32>
    %84 = vector.broadcast %83 : vector<8x1xf32> to vector<8x128xf32>
    %85 = arith.cmpf oge, %81, %84 : vector<8x128xf32>
    %c128_i32_35 = arith.constant 128 : i32
    %86 = vector.broadcast %c128_i32_35 : i32 to vector<8x128xi32>
    %87 = arith.select %85, %5, %86 : vector<8x128xi1>, vector<8x128xi32>
    %cst_36 = arith.constant dense<2147483647> : vector<8xi32>
    %88 = vector.multi_reduction <minsi>, %87, %cst_36 [1] : vector<8x128xi32> to vector<8xi32>
    %89 = vector.shape_cast %88 : vector<8xi32> to vector<8x1xi32>
    %c2_i32 = arith.constant 2 : i32
    %c0_i32_37 = arith.constant 0 : i32
    %90 = arith.cmpi eq, %c2_i32, %c0_i32_37 : i32
    %91 = arith.index_cast %c2_i32 : i32 to index
    %92 = memref.load %arg1[%91] : memref<7xi32, #tpu.memory_space<smem>>
    %c0_i32_38 = arith.constant 0 : i32
    %93 = arith.cmpi ne, %92, %c0_i32_38 : i32
    %94 = arith.ori %90, %93 : i1
    %95 = arith.index_cast %c2_i32 : i32 to index
    %c0_39 = arith.constant 0 : index
    %c0_40 = arith.constant 0 : index
    %96 = vector.load %arg2[%95, %c0_39, %c0_40] : memref<7x8x1xi32, #tpu.memory_space<vmem>>, vector<1x8x1xi32>
    %97 = vector.shape_cast %96 : vector<1x8x1xi32> to vector<8x1xi32>
    %98 = arith.select %94, %97, %89 : vector<8x1xi32>
    %99 = vector.broadcast %98 : vector<8x1xi32> to vector<8x128xi32>
    %100 = arith.cmpi eq, %5, %99 : vector<8x128xi32>
    %101 = arith.extui %100 : vector<8x128xi1> to vector<8x128xi32>
    %102 = arith.sitofp %101 : vector<8x128xi32> to vector<8x128xf32>
    %103 = arith.truncf %102 : vector<8x128xf32> to vector<8x128xbf16>
    %cst_41 = arith.constant dense<0.000000e+00> : vector<8x128xf32>
    %104 = tpu.matmul %103, %0, %cst_41 {dimension_numbers = #tpu.dot_dimension_numbers<[1], [0], [0], [1], [0, 0, 1, 1], [], []>} : vector<8x128xbf16>, vector<128x128xbf16>, vector<8x128xf32> -> vector<8x128xf32>
    %105 = arith.truncf %69 : vector<8x128xf32> to vector<8x128xbf16>
    %cst_42 = arith.constant dense<0.000000e+00> : vector<8x128xf32>
    %106 = tpu.matmul %105, %1, %cst_42 {dimension_numbers = #tpu.dot_dimension_numbers<[1], [0], [0], [1], [0, 0, 1, 1], [], []>} : vector<8x128xbf16>, vector<128x128xbf16>, vector<8x128xf32> -> vector<8x128xf32>
    %107 = arith.addf %104, %106 : vector<8x128xf32>
    %108 = vector.broadcast %2 : vector<1x128xf32> to vector<8x128xf32>
    %109 = arith.addf %107, %108 : vector<8x128xf32>
    %110 = math.tanh %109 : vector<8x128xf32>
    %111 = arith.truncf %110 : vector<8x128xf32> to vector<8x128xbf16>
    %cst_43 = arith.constant dense<0.000000e+00> : vector<8x128xf32>
    %112 = tpu.matmul %111, %3, %cst_43 {dimension_numbers = #tpu.dot_dimension_numbers<[1], [0], [0], [1], [0, 0, 1, 1], [], []>} : vector<8x128xbf16>, vector<128x128xbf16>, vector<8x128xf32> -> vector<8x128xf32>
    %113 = vector.broadcast %4 : vector<1x128xf32> to vector<8x128xf32>
    %114 = arith.addf %112, %113 : vector<8x128xf32>
    %115 = arith.index_cast %c2_i32 : i32 to index
    %c0_44 = arith.constant 0 : index
    %c0_45 = arith.constant 0 : index
    %116 = vector.load %arg9[%115, %c0_44, %c0_45] : memref<7x8x128xf32, #tpu.memory_space<vmem>>, vector<1x8x128xf32>
    %117 = vector.shape_cast %116 : vector<1x8x128xf32> to vector<8x128xf32>
    %118 = vector.shape_cast %114 : vector<8x128xf32> to vector<1x8x128xf32>
    tpu.vector_store %arg9[%115, %c0_44, %c0_45], %118 {strides = array<i32>} : memref<7x8x128xf32, #tpu.memory_space<vmem>>, vector<1x8x128xf32>,
    %c24_i32_46 = arith.constant 24 : i32
    %119 = vector.broadcast %c24_i32_46 : i32 to vector<8x128xi32>
    %120 = arith.cmpi slt, %5, %119 : vector<8x128xi32>
    %cst_47 = arith.constant -1.000000e+30 : f32
    %121 = vector.broadcast %cst_47 : f32 to vector<8x128xf32>
    %122 = arith.select %120, %114, %121 : vector<8x128xi1>, vector<8x128xf32>
    %cst_48 = arith.constant dense<0xFF800000> : vector<8xf32>
    %123 = vector.multi_reduction <maximumf>, %122, %cst_48 [1] : vector<8x128xf32> to vector<8xf32>
    %124 = vector.shape_cast %123 : vector<8xf32> to vector<8x1xf32>
    %125 = vector.broadcast %124 : vector<8x1xf32> to vector<8x128xf32>
    %126 = arith.cmpf oge, %122, %125 : vector<8x128xf32>
    %c128_i32_49 = arith.constant 128 : i32
    %127 = vector.broadcast %c128_i32_49 : i32 to vector<8x128xi32>
    %128 = arith.select %126, %5, %127 : vector<8x128xi1>, vector<8x128xi32>
    %cst_50 = arith.constant dense<2147483647> : vector<8xi32>
    %129 = vector.multi_reduction <minsi>, %128, %cst_50 [1] : vector<8x128xi32> to vector<8xi32>
    %130 = vector.shape_cast %129 : vector<8xi32> to vector<8x1xi32>
    %c3_i32 = arith.constant 3 : i32
    %c0_i32_51 = arith.constant 0 : i32
    %131 = arith.cmpi eq, %c3_i32, %c0_i32_51 : i32
    %132 = arith.index_cast %c3_i32 : i32 to index
    %133 = memref.load %arg1[%132] : memref<7xi32, #tpu.memory_space<smem>>
    %c0_i32_52 = arith.constant 0 : i32
    %134 = arith.cmpi ne, %133, %c0_i32_52 : i32
    %135 = arith.ori %131, %134 : i1
    %136 = arith.index_cast %c3_i32 : i32 to index
    %c0_53 = arith.constant 0 : index
    %c0_54 = arith.constant 0 : index
    %137 = vector.load %arg2[%136, %c0_53, %c0_54] : memref<7x8x1xi32, #tpu.memory_space<vmem>>, vector<1x8x1xi32>
    %138 = vector.shape_cast %137 : vector<1x8x1xi32> to vector<8x1xi32>
    %139 = arith.select %135, %138, %130 : vector<8x1xi32>
    %140 = vector.broadcast %139 : vector<8x1xi32> to vector<8x128xi32>
    %141 = arith.cmpi eq, %5, %140 : vector<8x128xi32>
    %142 = arith.extui %141 : vector<8x128xi1> to vector<8x128xi32>
    %143 = arith.sitofp %142 : vector<8x128xi32> to vector<8x128xf32>
    %144 = arith.truncf %143 : vector<8x128xf32> to vector<8x128xbf16>
    %cst_55 = arith.constant dense<0.000000e+00> : vector<8x128xf32>
    %145 = tpu.matmul %144, %0, %cst_55 {dimension_numbers = #tpu.dot_dimension_numbers<[1], [0], [0], [1], [0, 0, 1, 1], [], []>} : vector<8x128xbf16>, vector<128x128xbf16>, vector<8x128xf32> -> vector<8x128xf32>
    %146 = arith.truncf %110 : vector<8x128xf32> to vector<8x128xbf16>
    %cst_56 = arith.constant dense<0.000000e+00> : vector<8x128xf32>
    %147 = tpu.matmul %146, %1, %cst_56 {dimension_numbers = #tpu.dot_dimension_numbers<[1], [0], [0], [1], [0, 0, 1, 1], [], []>} : vector<8x128xbf16>, vector<128x128xbf16>, vector<8x128xf32> -> vector<8x128xf32>
    %148 = arith.addf %145, %147 : vector<8x128xf32>
    %149 = vector.broadcast %2 : vector<1x128xf32> to vector<8x128xf32>
    %150 = arith.addf %148, %149 : vector<8x128xf32>
    %151 = math.tanh %150 : vector<8x128xf32>
    %152 = arith.truncf %151 : vector<8x128xf32> to vector<8x128xbf16>
    %cst_57 = arith.constant dense<0.000000e+00> : vector<8x128xf32>
    %153 = tpu.matmul %152, %3, %cst_57 {dimension_numbers = #tpu.dot_dimension_numbers<[1], [0], [0], [1], [0, 0, 1, 1], [], []>} : vector<8x128xbf16>, vector<128x128xbf16>, vector<8x128xf32> -> vector<8x128xf32>
    %154 = vector.broadcast %4 : vector<1x128xf32> to vector<8x128xf32>
    %155 = arith.addf %153, %154 : vector<8x128xf32>
    %156 = arith.index_cast %c3_i32 : i32 to index
    %c0_58 = arith.constant 0 : index
    %c0_59 = arith.constant 0 : index
    %157 = vector.load %arg9[%156, %c0_58, %c0_59] : memref<7x8x128xf32, #tpu.memory_space<vmem>>, vector<1x8x128xf32>
    %158 = vector.shape_cast %157 : vector<1x8x128xf32> to vector<8x128xf32>
    %159 = vector.shape_cast %155 : vector<8x128xf32> to vector<1x8x128xf32>
    tpu.vector_store %arg9[%156, %c0_58, %c0_59], %159 {strides = array<i32>} : memref<7x8x128xf32, #tpu.memory_space<vmem>>, vector<1x8x128xf32>,
    %c24_i32_60 = arith.constant 24 : i32
    %160 = vector.broadcast %c24_i32_60 : i32 to vector<8x128xi32>
    %161 = arith.cmpi slt, %5, %160 : vector<8x128xi32>
    %cst_61 = arith.constant -1.000000e+30 : f32
    %162 = vector.broadcast %cst_61 : f32 to vector<8x128xf32>
    %163 = arith.select %161, %155, %162 : vector<8x128xi1>, vector<8x128xf32>
    %cst_62 = arith.constant dense<0xFF800000> : vector<8xf32>
    %164 = vector.multi_reduction <maximumf>, %163, %cst_62 [1] : vector<8x128xf32> to vector<8xf32>
    %165 = vector.shape_cast %164 : vector<8xf32> to vector<8x1xf32>
    %166 = vector.broadcast %165 : vector<8x1xf32> to vector<8x128xf32>
    %167 = arith.cmpf oge, %163, %166 : vector<8x128xf32>
    %c128_i32_63 = arith.constant 128 : i32
    %168 = vector.broadcast %c128_i32_63 : i32 to vector<8x128xi32>
    %169 = arith.select %167, %5, %168 : vector<8x128xi1>, vector<8x128xi32>
    %cst_64 = arith.constant dense<2147483647> : vector<8xi32>
    %170 = vector.multi_reduction <minsi>, %169, %cst_64 [1] : vector<8x128xi32> to vector<8xi32>
    %171 = vector.shape_cast %170 : vector<8xi32> to vector<8x1xi32>
    %c4_i32 = arith.constant 4 : i32
    %c0_i32_65 = arith.constant 0 : i32
    %172 = arith.cmpi eq, %c4_i32, %c0_i32_65 : i32
    %173 = arith.index_cast %c4_i32 : i32 to index
    %174 = memref.load %arg1[%173] : memref<7xi32, #tpu.memory_space<smem>>
    %c0_i32_66 = arith.constant 0 : i32
    %175 = arith.cmpi ne, %174, %c0_i32_66 : i32
    %176 = arith.ori %172, %175 : i1
    %177 = arith.index_cast %c4_i32 : i32 to index
    %c0_67 = arith.constant 0 : index
    %c0_68 = arith.constant 0 : index
    %178 = vector.load %arg2[%177, %c0_67, %c0_68] : memref<7x8x1xi32, #tpu.memory_space<vmem>>, vector<1x8x1xi32>
    %179 = vector.shape_cast %178 : vector<1x8x1xi32> to vector<8x1xi32>
    %180 = arith.select %176, %179, %171 : vector<8x1xi32>
    %181 = vector.broadcast %180 : vector<8x1xi32> to vector<8x128xi32>
    %182 = arith.cmpi eq, %5, %181 : vector<8x128xi32>
    %183 = arith.extui %182 : vector<8x128xi1> to vector<8x128xi32>
    %184 = arith.sitofp %183 : vector<8x128xi32> to vector<8x128xf32>
    %185 = arith.truncf %184 : vector<8x128xf32> to vector<8x128xbf16>
    %cst_69 = arith.constant dense<0.000000e+00> : vector<8x128xf32>
    %186 = tpu.matmul %185, %0, %cst_69 {dimension_numbers = #tpu.dot_dimension_numbers<[1], [0], [0], [1], [0, 0, 1, 1], [], []>} : vector<8x128xbf16>, vector<128x128xbf16>, vector<8x128xf32> -> vector<8x128xf32>
    %187 = arith.truncf %151 : vector<8x128xf32> to vector<8x128xbf16>
    %cst_70 = arith.constant dense<0.000000e+00> : vector<8x128xf32>
    %188 = tpu.matmul %187, %1, %cst_70 {dimension_numbers = #tpu.dot_dimension_numbers<[1], [0], [0], [1], [0, 0, 1, 1], [], []>} : vector<8x128xbf16>, vector<128x128xbf16>, vector<8x128xf32> -> vector<8x128xf32>
    %189 = arith.addf %186, %188 : vector<8x128xf32>
    %190 = vector.broadcast %2 : vector<1x128xf32> to vector<8x128xf32>
    %191 = arith.addf %189, %190 : vector<8x128xf32>
    %192 = math.tanh %191 : vector<8x128xf32>
    %193 = arith.truncf %192 : vector<8x128xf32> to vector<8x128xbf16>
    %cst_71 = arith.constant dense<0.000000e+00> : vector<8x128xf32>
    %194 = tpu.matmul %193, %3, %cst_71 {dimension_numbers = #tpu.dot_dimension_numbers<[1], [0], [0], [1], [0, 0, 1, 1], [], []>} : vector<8x128xbf16>, vector<128x128xbf16>, vector<8x128xf32> -> vector<8x128xf32>
    %195 = vector.broadcast %4 : vector<1x128xf32> to vector<8x128xf32>
    %196 = arith.addf %194, %195 : vector<8x128xf32>
    %197 = arith.index_cast %c4_i32 : i32 to index
    %c0_72 = arith.constant 0 : index
    %c0_73 = arith.constant 0 : index
    %198 = vector.load %arg9[%197, %c0_72, %c0_73] : memref<7x8x128xf32, #tpu.memory_space<vmem>>, vector<1x8x128xf32>
    %199 = vector.shape_cast %198 : vector<1x8x128xf32> to vector<8x128xf32>
    %200 = vector.shape_cast %196 : vector<8x128xf32> to vector<1x8x128xf32>
    tpu.vector_store %arg9[%197, %c0_72, %c0_73], %200 {strides = array<i32>} : memref<7x8x128xf32, #tpu.memory_space<vmem>>, vector<1x8x128xf32>,
    %c24_i32_74 = arith.constant 24 : i32
    %201 = vector.broadcast %c24_i32_74 : i32 to vector<8x128xi32>
    %202 = arith.cmpi slt, %5, %201 : vector<8x128xi32>
    %cst_75 = arith.constant -1.000000e+30 : f32
    %203 = vector.broadcast %cst_75 : f32 to vector<8x128xf32>
    %204 = arith.select %202, %196, %203 : vector<8x128xi1>, vector<8x128xf32>
    %cst_76 = arith.constant dense<0xFF800000> : vector<8xf32>
    %205 = vector.multi_reduction <maximumf>, %204, %cst_76 [1] : vector<8x128xf32> to vector<8xf32>
    %206 = vector.shape_cast %205 : vector<8xf32> to vector<8x1xf32>
    %207 = vector.broadcast %206 : vector<8x1xf32> to vector<8x128xf32>
    %208 = arith.cmpf oge, %204, %207 : vector<8x128xf32>
    %c128_i32_77 = arith.constant 128 : i32
    %209 = vector.broadcast %c128_i32_77 : i32 to vector<8x128xi32>
    %210 = arith.select %208, %5, %209 : vector<8x128xi1>, vector<8x128xi32>
    %cst_78 = arith.constant dense<2147483647> : vector<8xi32>
    %211 = vector.multi_reduction <minsi>, %210, %cst_78 [1] : vector<8x128xi32> to vector<8xi32>
    %212 = vector.shape_cast %211 : vector<8xi32> to vector<8x1xi32>
    %c5_i32 = arith.constant 5 : i32
    %c0_i32_79 = arith.constant 0 : i32
    %213 = arith.cmpi eq, %c5_i32, %c0_i32_79 : i32
    %214 = arith.index_cast %c5_i32 : i32 to index
    %215 = memref.load %arg1[%214] : memref<7xi32, #tpu.memory_space<smem>>
    %c0_i32_80 = arith.constant 0 : i32
    %216 = arith.cmpi ne, %215, %c0_i32_80 : i32
    %217 = arith.ori %213, %216 : i1
    %218 = arith.index_cast %c5_i32 : i32 to index
    %c0_81 = arith.constant 0 : index
    %c0_82 = arith.constant 0 : index
    %219 = vector.load %arg2[%218, %c0_81, %c0_82] : memref<7x8x1xi32, #tpu.memory_space<vmem>>, vector<1x8x1xi32>
    %220 = vector.shape_cast %219 : vector<1x8x1xi32> to vector<8x1xi32>
    %221 = arith.select %217, %220, %212 : vector<8x1xi32>
    %222 = vector.broadcast %221 : vector<8x1xi32> to vector<8x128xi32>
    %223 = arith.cmpi eq, %5, %222 : vector<8x128xi32>
    %224 = arith.extui %223 : vector<8x128xi1> to vector<8x128xi32>
    %225 = arith.sitofp %224 : vector<8x128xi32> to vector<8x128xf32>
    %226 = arith.truncf %225 : vector<8x128xf32> to vector<8x128xbf16>
    %cst_83 = arith.constant dense<0.000000e+00> : vector<8x128xf32>
    %227 = tpu.matmul %226, %0, %cst_83 {dimension_numbers = #tpu.dot_dimension_numbers<[1], [0], [0], [1], [0, 0, 1, 1], [], []>} : vector<8x128xbf16>, vector<128x128xbf16>, vector<8x128xf32> -> vector<8x128xf32>
    %228 = arith.truncf %192 : vector<8x128xf32> to vector<8x128xbf16>
    %cst_84 = arith.constant dense<0.000000e+00> : vector<8x128xf32>
    %229 = tpu.matmul %228, %1, %cst_84 {dimension_numbers = #tpu.dot_dimension_numbers<[1], [0], [0], [1], [0, 0, 1, 1], [], []>} : vector<8x128xbf16>, vector<128x128xbf16>, vector<8x128xf32> -> vector<8x128xf32>
    %230 = arith.addf %227, %229 : vector<8x128xf32>
    %231 = vector.broadcast %2 : vector<1x128xf32> to vector<8x128xf32>
    %232 = arith.addf %230, %231 : vector<8x128xf32>
    %233 = math.tanh %232 : vector<8x128xf32>
    %234 = arith.truncf %233 : vector<8x128xf32> to vector<8x128xbf16>
    %cst_85 = arith.constant dense<0.000000e+00> : vector<8x128xf32>
    %235 = tpu.matmul %234, %3, %cst_85 {dimension_numbers = #tpu.dot_dimension_numbers<[1], [0], [0], [1], [0, 0, 1, 1], [], []>} : vector<8x128xbf16>, vector<128x128xbf16>, vector<8x128xf32> -> vector<8x128xf32>
    %236 = vector.broadcast %4 : vector<1x128xf32> to vector<8x128xf32>
    %237 = arith.addf %235, %236 : vector<8x128xf32>
    %238 = arith.index_cast %c5_i32 : i32 to index
    %c0_86 = arith.constant 0 : index
    %c0_87 = arith.constant 0 : index
    %239 = vector.load %arg9[%238, %c0_86, %c0_87] : memref<7x8x128xf32, #tpu.memory_space<vmem>>, vector<1x8x128xf32>
    %240 = vector.shape_cast %239 : vector<1x8x128xf32> to vector<8x128xf32>
    %241 = vector.shape_cast %237 : vector<8x128xf32> to vector<1x8x128xf32>
    tpu.vector_store %arg9[%238, %c0_86, %c0_87], %241 {strides = array<i32>} : memref<7x8x128xf32, #tpu.memory_space<vmem>>, vector<1x8x128xf32>,
    %c24_i32_88 = arith.constant 24 : i32
    %242 = vector.broadcast %c24_i32_88 : i32 to vector<8x128xi32>
    %243 = arith.cmpi slt, %5, %242 : vector<8x128xi32>
    %cst_89 = arith.constant -1.000000e+30 : f32
    %244 = vector.broadcast %cst_89 : f32 to vector<8x128xf32>
    %245 = arith.select %243, %237, %244 : vector<8x128xi1>, vector<8x128xf32>
    %cst_90 = arith.constant dense<0xFF800000> : vector<8xf32>
    %246 = vector.multi_reduction <maximumf>, %245, %cst_90 [1] : vector<8x128xf32> to vector<8xf32>
    %247 = vector.shape_cast %246 : vector<8xf32> to vector<8x1xf32>
    %248 = vector.broadcast %247 : vector<8x1xf32> to vector<8x128xf32>
    %249 = arith.cmpf oge, %245, %248 : vector<8x128xf32>
    %c128_i32_91 = arith.constant 128 : i32
    %250 = vector.broadcast %c128_i32_91 : i32 to vector<8x128xi32>
    %251 = arith.select %249, %5, %250 : vector<8x128xi1>, vector<8x128xi32>
    %cst_92 = arith.constant dense<2147483647> : vector<8xi32>
    %252 = vector.multi_reduction <minsi>, %251, %cst_92 [1] : vector<8x128xi32> to vector<8xi32>
    %253 = vector.shape_cast %252 : vector<8xi32> to vector<8x1xi32>
    %c6_i32 = arith.constant 6 : i32
    %c0_i32_93 = arith.constant 0 : i32
    %254 = arith.cmpi eq, %c6_i32, %c0_i32_93 : i32
    %255 = arith.index_cast %c6_i32 : i32 to index
    %256 = memref.load %arg1[%255] : memref<7xi32, #tpu.memory_space<smem>>
    %c0_i32_94 = arith.constant 0 : i32
    %257 = arith.cmpi ne, %256, %c0_i32_94 : i32
    %258 = arith.ori %254, %257 : i1
    %259 = arith.index_cast %c6_i32 : i32 to index
    %c0_95 = arith.constant 0 : index
    %c0_96 = arith.constant 0 : index
    %260 = vector.load %arg2[%259, %c0_95, %c0_96] : memref<7x8x1xi32, #tpu.memory_space<vmem>>, vector<1x8x1xi32>
    %261 = vector.shape_cast %260 : vector<1x8x1xi32> to vector<8x1xi32>
    %262 = arith.select %258, %261, %253 : vector<8x1xi32>
    %263 = vector.broadcast %262 : vector<8x1xi32> to vector<8x128xi32>
    %264 = arith.cmpi eq, %5, %263 : vector<8x128xi32>
    %265 = arith.extui %264 : vector<8x128xi1> to vector<8x128xi32>
    %266 = arith.sitofp %265 : vector<8x128xi32> to vector<8x128xf32>
    %267 = arith.truncf %266 : vector<8x128xf32> to vector<8x128xbf16>
    %cst_97 = arith.constant dense<0.000000e+00> : vector<8x128xf32>
    %268 = tpu.matmul %267, %0, %cst_97 {dimension_numbers = #tpu.dot_dimension_numbers<[1], [0], [0], [1], [0, 0, 1, 1], [], []>} : vector<8x128xbf16>, vector<128x128xbf16>, vector<8x128xf32> -> vector<8x128xf32>
    %269 = arith.truncf %233 : vector<8x128xf32> to vector<8x128xbf16>
    %cst_98 = arith.constant dense<0.000000e+00> : vector<8x128xf32>
    %270 = tpu.matmul %269, %1, %cst_98 {dimension_numbers = #tpu.dot_dimension_numbers<[1], [0], [0], [1], [0, 0, 1, 1], [], []>} : vector<8x128xbf16>, vector<128x128xbf16>, vector<8x128xf32> -> vector<8x128xf32>
    %271 = arith.addf %268, %270 : vector<8x128xf32>
    %272 = vector.broadcast %2 : vector<1x128xf32> to vector<8x128xf32>
    %273 = arith.addf %271, %272 : vector<8x128xf32>
    %274 = math.tanh %273 : vector<8x128xf32>
    %275 = arith.truncf %274 : vector<8x128xf32> to vector<8x128xbf16>
    %cst_99 = arith.constant dense<0.000000e+00> : vector<8x128xf32>
    %276 = tpu.matmul %275, %3, %cst_99 {dimension_numbers = #tpu.dot_dimension_numbers<[1], [0], [0], [1], [0, 0, 1, 1], [], []>} : vector<8x128xbf16>, vector<128x128xbf16>, vector<8x128xf32> -> vector<8x128xf32>
    %277 = vector.broadcast %4 : vector<1x128xf32> to vector<8x128xf32>
    %278 = arith.addf %276, %277 : vector<8x128xf32>
    %279 = arith.index_cast %c6_i32 : i32 to index
    %c0_100 = arith.constant 0 : index
    %c0_101 = arith.constant 0 : index
    %280 = vector.load %arg9[%279, %c0_100, %c0_101] : memref<7x8x128xf32, #tpu.memory_space<vmem>>, vector<1x8x128xf32>
    %281 = vector.shape_cast %280 : vector<1x8x128xf32> to vector<8x128xf32>
    %282 = vector.shape_cast %278 : vector<8x128xf32> to vector<1x8x128xf32>
    tpu.vector_store %arg9[%279, %c0_100, %c0_101], %282 {strides = array<i32>} : memref<7x8x128xf32, #tpu.memory_space<vmem>>, vector<1x8x128xf32>,
    %c24_i32_102 = arith.constant 24 : i32
    %283 = vector.broadcast %c24_i32_102 : i32 to vector<8x128xi32>
    %284 = arith.cmpi slt, %5, %283 : vector<8x128xi32>
    %cst_103 = arith.constant -1.000000e+30 : f32
    %285 = vector.broadcast %cst_103 : f32 to vector<8x128xf32>
    %286 = arith.select %284, %278, %285 : vector<8x128xi1>, vector<8x128xf32>
    %cst_104 = arith.constant dense<0xFF800000> : vector<8xf32>
    %287 = vector.multi_reduction <maximumf>, %286, %cst_104 [1] : vector<8x128xf32> to vector<8xf32>
    %288 = vector.shape_cast %287 : vector<8xf32> to vector<8x1xf32>
    %289 = vector.broadcast %288 : vector<8x1xf32> to vector<8x128xf32>
    %290 = arith.cmpf oge, %286, %289 : vector<8x128xf32>
    %c128_i32_105 = arith.constant 128 : i32
    %291 = vector.broadcast %c128_i32_105 : i32 to vector<8x128xi32>
    %292 = arith.select %290, %5, %291 : vector<8x128xi1>, vector<8x128xi32>
    %cst_106 = arith.constant dense<2147483647> : vector<8xi32>
    %293 = vector.multi_reduction <minsi>, %292, %cst_106 [1] : vector<8x128xi32> to vector<8xi32>
    %294 = vector.shape_cast %293 : vector<8xi32> to vector<8x1xi32>
    %c7_i32 = arith.constant 7 : i32
    return
  }
  func.func @transform_0(%arg0: i32, %arg1: memref<7xi32, #tpu.memory_space<smem>>) -> (i32, i32, i32) {
    %c0_i32 = arith.constant 0 : i32
    %c0_i32_0 = arith.constant 0 : i32
    %c0_i32_1 = arith.constant 0 : i32
    %c0_i32_2 = arith.constant 0 : i32
    return %c0_i32, %c0_i32_0, %c0_i32_1 : i32, i32, i32
  }
  func.func @transform_1(%arg0: i32, %arg1: memref<7xi32, #tpu.memory_space<smem>>) -> (i32, i32) {
    %c0_i32 = arith.constant 0 : i32
    %c0_i32_0 = arith.constant 0 : i32
    %c0_i32_1 = arith.constant 0 : i32
    return %c0_i32, %c0_i32_0 : i32, i32
  }
  func.func @transform_2(%arg0: i32, %arg1: memref<7xi32, #tpu.memory_space<smem>>) -> (i32, i32) {
    %c0_i32 = arith.constant 0 : i32
    %c0_i32_0 = arith.constant 0 : i32
    %c0_i32_1 = arith.constant 0 : i32
    return %c0_i32, %c0_i32_0 : i32, i32
  }
  func.func @transform_3(%arg0: i32, %arg1: memref<7xi32, #tpu.memory_space<smem>>) -> (i32, i32) {
    %c0_i32 = arith.constant 0 : i32
    %c0_i32_0 = arith.constant 0 : i32
    %c0_i32_1 = arith.constant 0 : i32
    return %c0_i32, %c0_i32_0 : i32, i32
  }
  func.func @transform_4(%arg0: i32, %arg1: memref<7xi32, #tpu.memory_space<smem>>) -> (i32, i32) {
    %c0_i32 = arith.constant 0 : i32
    %c0_i32_0 = arith.constant 0 : i32
    %c0_i32_1 = arith.constant 0 : i32
    return %c0_i32, %c0_i32_0 : i32, i32
  }
  func.func @transform_5(%arg0: i32, %arg1: memref<7xi32, #tpu.memory_space<smem>>) -> (i32, i32) {
    %c0_i32 = arith.constant 0 : i32
    %c0_i32_0 = arith.constant 0 : i32
    %c0_i32_1 = arith.constant 0 : i32
    return %c0_i32, %c0_i32_0 : i32, i32
  }
  func.func @transform_6(%arg0: i32, %arg1: memref<7xi32, #tpu.memory_space<smem>>) -> (i32, i32) {
    %c0_i32 = arith.constant 0 : i32
    %c0_i32_0 = arith.constant 0 : i32
    %c0_i32_1 = arith.constant 0 : i32
    return %c0_i32, %c0_i32_0 : i32, i32
  }
  func.func @transform_7(%arg0: i32, %arg1: memref<7xi32, #tpu.memory_space<smem>>) -> (i32, i32, i32) {
    %c0_i32 = arith.constant 0 : i32
    %c0_i32_0 = arith.constant 0 : i32
    %c0_i32_1 = arith.constant 0 : i32
    %c0_i32_2 = arith.constant 0 : i32
    return %c0_i32, %c0_i32_0, %c0_i32_1 : i32, i32, i32
  }
}

</mosaic_0001>

<llo_original>
// kernel: seq2seq_forward.2
$region0: #{seq2seq_forward.2}
  #allocation0 [shape = 'u32[]', space=smem, size = 0x4, offset = 0x4, fixed_abs, tag = 'smem constant byte address 0x4 - core index']
  #allocation1 [shape = 'u32[144,128]{1,0:T(1,128)}', space=vmem, size = 0x12000, scoped, tag = 'internal scratch']
  %s0 = inlined_call_operand.vmem [shape: bf16[8,8,128], index: 0, kind: input, shape index: {}]
  %s1 = inlined_call_operand.vmem [shape: bf16[128,128], index: 1, kind: input, shape index: {}]
  %s2 = inlined_call_operand.vmem [shape: bf16[128,128], index: 2, kind: input, shape index: {}]
  %s3 = inlined_call_operand.vmem [shape: f32[1,128], index: 3, kind: input, shape index: {}]
  %s4 = inlined_call_operand.vmem [shape: f32[8,128], index: 4, kind: output, shape index: {}]
  %s5 = sld [smem:[#allocation0]]
  $region26: #{seq2seq_forward.2} parent=0
    _
  %s7 = ssub.s32 1, %s5
  %s8 = scalar_select 0, %s7, %s5
  // Predicated region
  $region2: #{seq2seq_forward.2} parent=0 // pred_check
    _
  $region3: #{seq2seq_forward.2} parent=0 // pred_check_branch
    %10 = sbr.rel (0) target = $region5
  $region4: #{seq2seq_forward.2} parent=0 // pred_region
    _
  $region5: #{seq2seq_forward.2} parent=0 // pred_fallthru
    _
  // Predicated region
  $region6: #{seq2seq_forward.2} parent=0 // pred_check
    _
  $region7: #{seq2seq_forward.2} parent=0 // pred_check_branch
    %12 = sbr.rel (0) target = $region9
  $region8: #{seq2seq_forward.2} parent=0 // pred_region
    _
  $region9: #{seq2seq_forward.2} parent=0 // pred_fallthru
    _
  // Predicated region
  $region10: #{seq2seq_forward.2} parent=0 // pred_check
    _
  $region11: #{seq2seq_forward.2} parent=0 // pred_check_branch
    %14 = sbr.rel (0) target = $region13
  $region12: #{seq2seq_forward.2} parent=0 // pred_region
    _
  $region13: #{seq2seq_forward.2} parent=0 // pred_fallthru
    _
  // Predicated region
  $region14: #{seq2seq_forward.2} parent=0 // pred_check
    _
  $region15: #{seq2seq_forward.2} parent=0 // pred_check_branch
    %16 = sbr.rel (0) target = $region17
  $region16: #{seq2seq_forward.2} parent=0 // pred_region
    _
  $region17: #{seq2seq_forward.2} parent=0 // pred_fallthru
    _
  %v18 = vld [vmem:[%s1] sm:$0xf]
  %v19 = vld [vmem:[%s1 + $0x4] sm:$0xf]
  %v20 = vld [vmem:[%s1 + $0x8] sm:$0xf]
  %v21 = vld [vmem:[%s1 + $0xc] sm:$0xf]
  %v22 = vld [vmem:[%s1 + $0x10] sm:$0xf]
  %v23 = vld [vmem:[%s1 + $0x14] sm:$0xf]
  %v24 = vld [vmem:[%s1 + $0x18] sm:$0xf]
  %v25 = vld [vmem:[%s1 + $0x1c] sm:$0xf]
  %v26 = vld [vmem:[%s1 + $0x20] sm:$0xf]
  %v27 = vld [vmem:[%s1 + $0x24] sm:$0xf]
  %v28 = vld [vmem:[%s1 + $0x28] sm:$0xf]
  %v29 = vld [vmem:[%s1 + $0x2c] sm:$0xf]
  %v30 = vld [vmem:[%s1 + $0x30] sm:$0xf]
  %v31 = vld [vmem:[%s1 + $0x34] sm:$0xf]
  %v32 = vld [vmem:[%s1 + $0x38] sm:$0xf]
  %v33 = vld [vmem:[%s1 + $0x3c] sm:$0xf]
  %v34 = vld [vmem:[%s2] sm:$0xf]
  %v35 = vld [vmem:[%s2 + $0x4] sm:$0xf]
  %v36 = vld [vmem:[%s2 + $0x8] sm:$0xf]
  %v37 = vld [vmem:[%s2 + $0xc] sm:$0xf]
  %v38 = vld [vmem:[%s2 + $0x10] sm:$0xf]
  %v39 = vld [vmem:[%s2 + $0x14] sm:$0xf]
  %v40 = vld [vmem:[%s2 + $0x18] sm:$0xf]
  %v41 = vld [vmem:[%s2 + $0x1c] sm:$0xf]
  %v42 = vld [vmem:[%s2 + $0x20] sm:$0xf]
  %v43 = vld [vmem:[%s2 + $0x24] sm:$0xf]
  %v44 = vld [vmem:[%s2 + $0x28] sm:$0xf]
  %v45 = vld [vmem:[%s2 + $0x2c] sm:$0xf]
  %v46 = vld [vmem:[%s2 + $0x30] sm:$0xf]
  %v47 = vld [vmem:[%s2 + $0x34] sm:$0xf]
  %v48 = vld [vmem:[%s2 + $0x38] sm:$0xf]
  %v49 = vld [vmem:[%s2 + $0x3c] sm:$0xf]
  %v50 = vld [vmem:[%s3] sm:$0x1]
  %v51 = vld [vmem:[%s0] sm:$0xf]
  %v68 = vunpack.c.l.b16 %v34
  %v69 = vunpack.c.l.b16 %v35
  %v70 = vunpack.c.l.b16 %v36
  %v71 = vunpack.c.l.b16 %v37
  %v72 = vunpack.c.l.b16 %v38
  %v73 = vunpack.c.l.b16 %v39
  %v74 = vunpack.c.l.b16 %v40
  %v75 = vunpack.c.l.b16 %v41
  %v76 = vunpack.c.l.b16 %v42
  %v77 = vunpack.c.l.b16 %v43
  %v78 = vunpack.c.l.b16 %v44
  %v79 = vunpack.c.l.b16 %v45
  %v80 = vunpack.c.l.b16 %v46
  %v81 = vunpack.c.l.b16 %v47
  %v82 = vunpack.c.l.b16 %v48
  %v83 = vunpack.c.l.b16 %v49
  %v84 = vpack.c.b16 %v69, %v68
  %v85 = vpack.c.b16 %v71, %v70
  %v86 = vpack.c.b16 %v73, %v72
  %v87 = vpack.c.b16 %v75, %v74
  %v88 = vpack.c.b16 %v77, %v76
  %v89 = vpack.c.b16 %v79, %v78
  %v90 = vpack.c.b16 %v81, %v80
  %v91 = vpack.c.b16 %v83, %v82
  %100 = vmatprep.subr.bf16.mxu0 0
  %101 = vmatpush1.bf16.msra.mxu0 %v84
  %102 = vmatprep.subr.bf16.mxu0 0
  %103 = vmatpush1.bf16.msra.mxu0 %v85
  %104 = vmatprep.subr.bf16.mxu0 0
  %105 = vmatpush1.bf16.msra.mxu0 %v86
  %106 = vmatprep.subr.bf16.mxu0 0
  %107 = vmatpush1.bf16.msra.mxu0 %v87
  %108 = vmatprep.subr.bf16.mxu0 0
  %109 = vmatpush1.bf16.msra.mxu0 %v88
  %110 = vmatprep.subr.bf16.mxu0 0
  %111 = vmatpush1.bf16.msra.mxu0 %v89
  %112 = vmatprep.subr.bf16.mxu0 0
  %113 = vmatpush1.bf16.msra.mxu0 %v90
  %114 = vmatprep.subr.bf16.mxu0 0
  %115 = vmatpush1.bf16.msra.mxu0 %v91
  %116 = vmatprep.subr.bf16.mxu0 0
  %117 = vmatpush1.bf16.msra.mxu0 0
  %118 = vmatprep.subr.bf16.mxu0 0
  %119 = vmatpush1.bf16.msra.mxu0 0
  %120 = vmatprep.subr.bf16.mxu0 0
  %121 = vmatpush1.bf16.msra.mxu0 0
  %122 = vmatprep.subr.bf16.mxu0 0
  %123 = vmatpush1.bf16.msra.mxu0 0
  %124 = vmatprep.subr.bf16.mxu0 0
  %125 = vmatpush1.bf16.msra.mxu0 0
  %126 = vmatprep.subr.bf16.mxu0 0
  %127 = vmatpush1.bf16.msra.mxu0 0
  %128 = vmatprep.subr.bf16.mxu0 0
  %129 = vmatpush1.bf16.msra.mxu0 0
  %130 = vmatprep.subr.bf16.mxu0 0
  %131 = vmatpush1.bf16.msra.mxu0 0
  %132 = vmatprep.mubr.bf16.mxu0 0
  %133 = vmatmul.mubr.bf16.gmra.mrb[0].mxu0 0
  %v134 = vpop.f32.mrb[0].mxu0
  %v135 = vadd.f32 0.0, %v134
  %v136 = vpop.f32.mrb[0].mxu0
  %v137 = vpop.f32.mrb[0].mxu0
  %v138 = vpop.f32.mrb[0].mxu0
  %139 = vdwg.mxu0
  %v156 = vunpack.c.l.b16 %v18
  %v157 = vunpack.c.l.b16 %v19
  %v158 = vunpack.c.l.b16 %v20
  %v159 = vunpack.c.l.b16 %v21
  %v160 = vunpack.c.l.b16 %v22
  %v161 = vunpack.c.l.b16 %v23
  %v162 = vunpack.c.l.b16 %v24
  %v163 = vunpack.c.l.b16 %v25
  %v164 = vunpack.c.l.b16 %v26
  %v165 = vunpack.c.l.b16 %v27
  %v166 = vunpack.c.l.b16 %v28
  %v167 = vunpack.c.l.b16 %v29
  %v168 = vunpack.c.l.b16 %v30
  %v169 = vunpack.c.l.b16 %v31
  %v170 = vunpack.c.l.b16 %v32
  %v171 = vunpack.c.l.b16 %v33
  %v172 = vpack.c.b16 %v157, %v156
  %v173 = vpack.c.b16 %v159, %v158
  %v174 = vpack.c.b16 %v161, %v160
  %v175 = vpack.c.b16 %v163, %v162
  %v176 = vpack.c.b16 %v165, %v164
  %v177 = vpack.c.b16 %v167, %v166
  %v178 = vpack.c.b16 %v169, %v168
  %v179 = vpack.c.b16 %v171, %v170
  %188 = vmatprep.subr.bf16.mxu0 0
  %189 = vmatpush1.bf16.msra.mxu0 %v172
  %190 = vmatprep.subr.bf16.mxu0 0
  %191 = vmatpush1.bf16.msra.mxu0 %v173
  %192 = vmatprep.subr.bf16.mxu0 0
  %193 = vmatpush1.bf16.msra.mxu0 %v174
  %194 = vmatprep.subr.bf16.mxu0 0
  %195 = vmatpush1.bf16.msra.mxu0 %v175
  %196 = vmatprep.subr.bf16.mxu0 0
  %197 = vmatpush1.bf16.msra.mxu0 %v176
  %198 = vmatprep.subr.bf16.mxu0 0
  %199 = vmatpush1.bf16.msra.mxu0 %v177
  %200 = vmatprep.subr.bf16.mxu0 0
  %201 = vmatpush1.bf16.msra.mxu0 %v178
  %202 = vmatprep.subr.bf16.mxu0 0
  %203 = vmatpush1.bf16.msra.mxu0 %v179
  %204 = vmatprep.subr.bf16.mxu0 0
  %205 = vmatpush1.bf16.msra.mxu0 0
  %206 = vmatprep.subr.bf16.mxu0 0
  %207 = vmatpush1.bf16.msra.mxu0 0
  %208 = vmatprep.subr.bf16.mxu0 0
  %209 = vmatpush1.bf16.msra.mxu0 0
  %210 = vmatprep.subr.bf16.mxu0 0
  %211 = vmatpush1.bf16.msra.mxu0 0
  %212 = vmatprep.subr.bf16.mxu0 0
  %213 = vmatpush1.bf16.msra.mxu0 0
  %214 = vmatprep.subr.bf16.mxu0 0
  %215 = vmatpush1.bf16.msra.mxu0 0
  %216 = vmatprep.subr.bf16.mxu0 0
  %217 = vmatpush1.bf16.msra.mxu0 0
  %218 = vmatprep.subr.bf16.mxu0 0
  %219 = vmatpush1.bf16.msra.mxu0 0
  %220 = vmatprep.mubr.bf16.mxu0 0
  %221 = vmatmul.mubr.bf16.gmra.mrb[0].mxu0 %v51
  %v222 = vpop.f32.mrb[0].mxu0
  %v223 = vadd.f32 %v135, %v222
  %v224 = vpop.f32.mrb[0].mxu0
  %v225 = vpop.f32.mrb[0].mxu0
  %v226 = vpop.f32.mrb[0].mxu0
  %227 = vdwg.mxu0
  %v229 = vlaneseq
  %v230 = vshrl.u32 %v229, 7
  %v231 = vsub.s32 0, %v230
  %v232 = vrot.slane %v50, %v231
  %v234 = vadd.f32 %v223, %v232
  %v235 = vtanh.pop %v234
  %s236 = scalar_lea.vmem %s0, 4
  %v237 = vld [vmem:[%s236] sm:$0xf]
  %v238 = vpack.c.bf16 %v235, %v235
  %239 = vmatprep.subr.bf16.mxu0 0
  %240 = vmatpush1.bf16.msra.mxu0 %v84
  %241 = vmatprep.subr.bf16.mxu0 0
  %242 = vmatpush1.bf16.msra.mxu0 %v85
  %243 = vmatprep.subr.bf16.mxu0 0
  %244 = vmatpush1.bf16.msra.mxu0 %v86
  %245 = vmatprep.subr.bf16.mxu0 0
  %246 = vmatpush1.bf16.msra.mxu0 %v87
  %247 = vmatprep.subr.bf16.mxu0 0
  %248 = vmatpush1.bf16.msra.mxu0 %v88
  %249 = vmatprep.subr.bf16.mxu0 0
  %250 = vmatpush1.bf16.msra.mxu0 %v89
  %251 = vmatprep.subr.bf16.mxu0 0
  %252 = vmatpush1.bf16.msra.mxu0 %v90
  %253 = vmatprep.subr.bf16.mxu0 0
  %254 = vmatpush1.bf16.msra.mxu0 %v91
  %255 = vmatprep.subr.bf16.mxu0 0
  %256 = vmatpush1.bf16.msra.mxu0 0
  %257 = vmatprep.subr.bf16.mxu0 0
  %258 = vmatpush1.bf16.msra.mxu0 0
  %259 = vmatprep.subr.bf16.mxu0 0
  %260 = vmatpush1.bf16.msra.mxu0 0
  %261 = vmatprep.subr.bf16.mxu0 0
  %262 = vmatpush1.bf16.msra.mxu0 0
  %263 = vmatprep.subr.bf16.mxu0 0
  %264 = vmatpush1.bf16.msra.mxu0 0
  %265 = vmatprep.subr.bf16.mxu0 0
  %266 = vmatpush1.bf16.msra.mxu0 0
  %267 = vmatprep.subr.bf16.mxu0 0
  %268 = vmatpush1.bf16.msra.mxu0 0
  %269 = vmatprep.subr.bf16.mxu0 0
  %270 = vmatpush1.bf16.msra.mxu0 0
  %271 = vmatprep.mubr.bf16.mxu0 0
  %272 = vmatmul.mubr.bf16.gmra.mrb[0].mxu0 %v238
  %v273 = vpop.f32.mrb[0].mxu0
  %v274 = vadd.f32 0.0, %v273
  %v275 = vpop.f32.mrb[0].mxu0
  %v276 = vpop.f32.mrb[0].mxu0
  %v277 = vpop.f32.mrb[0].mxu0
  %278 = vdwg.mxu0
  %279 = vmatprep.subr.bf16.mxu0 0
  %280 = vmatpush1.bf16.msra.mxu0 %v172
  %281 = vmatprep.subr.bf16.mxu0 0
  %282 = vmatpush1.bf16.msra.mxu0 %v173
  %283 = vmatprep.subr.bf16.mxu0 0
  %284 = vmatpush1.bf16.msra.mxu0 %v174
  %285 = vmatprep.subr.bf16.mxu0 0
  %286 = vmatpush1.bf16.msra.mxu0 %v175
  %287 = vmatprep.subr.bf16.mxu0 0
  %288 = vmatpush1.bf16.msra.mxu0 %v176
  %289 = vmatprep.subr.bf16.mxu0 0
  %290 = vmatpush1.bf16.msra.mxu0 %v177
  %291 = vmatprep.subr.bf16.mxu0 0
  %292 = vmatpush1.bf16.msra.mxu0 %v178
  %293 = vmatprep.subr.bf16.mxu0 0
  %294 = vmatpush1.bf16.msra.mxu0 %v179
  %295 = vmatprep.subr.bf16.mxu0 0
  %296 = vmatpush1.bf16.msra.mxu0 0
  %297 = vmatprep.subr.bf16.mxu0 0
  %298 = vmatpush1.bf16.msra.mxu0 0
  %299 = vmatprep.subr.bf16.mxu0 0
  %300 = vmatpush1.bf16.msra.mxu0 0
  %301 = vmatprep.subr.bf16.mxu0 0
  %302 = vmatpush1.bf16.msra.mxu0 0
  %303 = vmatprep.subr.bf16.mxu0 0
  %304 = vmatpush1.bf16.msra.mxu0 0
  %305 = vmatprep.subr.bf16.mxu0 0
  %306 = vmatpush1.bf16.msra.mxu0 0
  %307 = vmatprep.subr.bf16.mxu0 0
  %308 = vmatpush1.bf16.msra.mxu0 0
  %309 = vmatprep.subr.bf16.mxu0 0
  %310 = vmatpush1.bf16.msra.mxu0 0
  %311 = vmatprep.mubr.bf16.mxu0 0
  %312 = vmatmul.mubr.bf16.gmra.mrb[0].mxu0 %v237
  %v313 = vpop.f32.mrb[0].mxu0
  %v314 = vadd.f32 %v274, %v313
  %v315 = vpop.f32.mrb[0].mxu0
  %v316 = vpop.f32.mrb[0].mxu0
  %v317 = vpop.f32.mrb[0].mxu0
  %318 = vdwg.mxu0
  %v319 = vadd.f32 %v314, %v232
  %v320 = vtanh.pop %v319
  %s321 = scalar_lea.vmem %s0, 8
  %v322 = vld [vmem:[%s321] sm:$0xf]
  %v323 = vpack.c.bf16 %v320, %v320
  %324 = vmatprep.subr.bf16.mxu0 0
  %325 = vmatpush1.bf16.msra.mxu0 %v84
  %326 = vmatprep.subr.bf16.mxu0 0
  %327 = vmatpush1.bf16.msra.mxu0 %v85
  %328 = vmatprep.subr.bf16.mxu0 0
  %329 = vmatpush1.bf16.msra.mxu0 %v86
  %330 = vmatprep.subr.bf16.mxu0 0
  %331 = vmatpush1.bf16.msra.mxu0 %v87
  %332 = vmatprep.subr.bf16.mxu0 0
  %333 = vmatpush1.bf16.msra.mxu0 %v88
  %334 = vmatprep.subr.bf16.mxu0 0
  %335 = vmatpush1.bf16.msra.mxu0 %v89
  %336 = vmatprep.subr.bf16.mxu0 0
  %337 = vmatpush1.bf16.msra.mxu0 %v90
  %338 = vmatprep.subr.bf16.mxu0 0
  %339 = vmatpush1.bf16.msra.mxu0 %v91
  %340 = vmatprep.subr.bf16.mxu0 0
  %341 = vmatpush1.bf16.msra.mxu0 0
  %342 = vmatprep.subr.bf16.mxu0 0
  %343 = vmatpush1.bf16.msra.mxu0 0
  %344 = vmatprep.subr.bf16.mxu0 0
  %345 = vmatpush1.bf16.msra.mxu0 0
  %346 = vmatprep.subr.bf16.mxu0 0
  %347 = vmatpush1.bf16.msra.mxu0 0
  %348 = vmatprep.subr.bf16.mxu0 0
  %349 = vmatpush1.bf16.msra.mxu0 0
  %350 = vmatprep.subr.bf16.mxu0 0
  %351 = vmatpush1.bf16.msra.mxu0 0
  %352 = vmatprep.subr.bf16.mxu0 0
  %353 = vmatpush1.bf16.msra.mxu0 0
  %354 = vmatprep.subr.bf16.mxu0 0
  %355 = vmatpush1.bf16.msra.mxu0 0
  %356 = vmatprep.mubr.bf16.mxu0 0
  %357 = vmatmul.mubr.bf16.gmra.mrb[0].mxu0 %v323
  %v358 = vpop.f32.mrb[0].mxu0
  %v359 = vadd.f32 0.0, %v358
  %v360 = vpop.f32.mrb[0].mxu0
  %v361 = vpop.f32.mrb[0].mxu0
  %v362 = vpop.f32.mrb[0].mxu0
  %363 = vdwg.mxu0
  %364 = vmatprep.subr.bf16.mxu0 0
  %365 = vmatpush1.bf16.msra.mxu0 %v172
  %366 = vmatprep.subr.bf16.mxu0 0
  %367 = vmatpush1.bf16.msra.mxu0 %v173
  %368 = vmatprep.subr.bf16.mxu0 0
  %369 = vmatpush1.bf16.msra.mxu0 %v174
  %370 = vmatprep.subr.bf16.mxu0 0
  %371 = vmatpush1.bf16.msra.mxu0 %v175
  %372 = vmatprep.subr.bf16.mxu0 0
  %373 = vmatpush1.bf16.msra.mxu0 %v176
  %374 = vmatprep.subr.bf16.mxu0 0
  %375 = vmatpush1.bf16.msra.mxu0 %v177
  %376 = vmatprep.subr.bf16.mxu0 0
  %377 = vmatpush1.bf16.msra.mxu0 %v178
  %378 = vmatprep.subr.bf16.mxu0 0
  %379 = vmatpush1.bf16.msra.mxu0 %v179
  %380 = vmatprep.subr.bf16.mxu0 0
  %381 = vmatpush1.bf16.msra.mxu0 0
  %382 = vmatprep.subr.bf16.mxu0 0
  %383 = vmatpush1.bf16.msra.mxu0 0
  %384 = vmatprep.subr.bf16.mxu0 0
  %385 = vmatpush1.bf16.msra.mxu0 0
  %386 = vmatprep.subr.bf16.mxu0 0
  %387 = vmatpush1.bf16.msra.mxu0 0
  %388 = vmatprep.subr.bf16.mxu0 0
  %389 = vmatpush1.bf16.msra.mxu0 0
  %390 = vmatprep.subr.bf16.mxu0 0
  %391 = vmatpush1.bf16.msra.mxu0 0
  %392 = vmatprep.subr.bf16.mxu0 0
  %393 = vmatpush1.bf16.msra.mxu0 0
  %394 = vmatprep.subr.bf16.mxu0 0
  %395 = vmatpush1.bf16.msra.mxu0 0
  %396 = vmatprep.mubr.bf16.mxu0 0
  %397 = vmatmul.mubr.bf16.gmra.mrb[0].mxu0 %v322
  %v398 = vpop.f32.mrb[0].mxu0
  %v399 = vadd.f32 %v359, %v398
  %v400 = vpop.f32.mrb[0].mxu0
  %v401 = vpop.f32.mrb[0].mxu0
  %v402 = vpop.f32.mrb[0].mxu0
  %403 = vdwg.mxu0
  %v404 = vadd.f32 %v399, %v232
  %v405 = vtanh.pop %v404
  %s406 = scalar_lea.vmem %s0, 12
  %v407 = vld [vmem:[%s406] sm:$0xf]
  %v408 = vpack.c.bf16 %v405, %v405
  %409 = vmatprep.subr.bf16.mxu0 0
  %410 = vmatpush1.bf16.msra.mxu0 %v84
  %411 = vmatprep.subr.bf16.mxu0 0
  %412 = vmatpush1.bf16.msra.mxu0 %v85
  %413 = vmatprep.subr.bf16.mxu0 0
  %414 = vmatpush1.bf16.msra.mxu0 %v86
  %415 = vmatprep.subr.bf16.mxu0 0
  %416 = vmatpush1.bf16.msra.mxu0 %v87
  %417 = vmatprep.subr.bf16.mxu0 0
  %418 = vmatpush1.bf16.msra.mxu0 %v88
  %419 = vmatprep.subr.bf16.mxu0 0
  %420 = vmatpush1.bf16.msra.mxu0 %v89
  %421 = vmatprep.subr.bf16.mxu0 0
  %422 = vmatpush1.bf16.msra.mxu0 %v90
  %423 = vmatprep.subr.bf16.mxu0 0
  %424 = vmatpush1.bf16.msra.mxu0 %v91
  %425 = vmatprep.subr.bf16.mxu0 0
  %426 = vmatpush1.bf16.msra.mxu0 0
  %427 = vmatprep.subr.bf16.mxu0 0
  %428 = vmatpush1.bf16.msra.mxu0 0
  %429 = vmatprep.subr.bf16.mxu0 0
  %430 = vmatpush1.bf16.msra.mxu0 0
  %431 = vmatprep.subr.bf16.mxu0 0
  %432 = vmatpush1.bf16.msra.mxu0 0
  %433 = vmatprep.subr.bf16.mxu0 0
  %434 = vmatpush1.bf16.msra.mxu0 0
  %435 = vmatprep.subr.bf16.mxu0 0
  %436 = vmatpush1.bf16.msra.mxu0 0
  %437 = vmatprep.subr.bf16.mxu0 0
  %438 = vmatpush1.bf16.msra.mxu0 0
  %439 = vmatprep.subr.bf16.mxu0 0
  %440 = vmatpush1.bf16.msra.mxu0 0
  %441 = vmatprep.mubr.bf16.mxu0 0
  %442 = vmatmul.mubr.bf16.gmra.mrb[0].mxu0 %v408
  %v443 = vpop.f32.mrb[0].mxu0
  %v444 = vadd.f32 0.0, %v443
  %v445 = vpop.f32.mrb[0].mxu0
  %v446 = vpop.f32.mrb[0].mxu0
  %v447 = vpop.f32.mrb[0].mxu0
  %448 = vdwg.mxu0
  %449 = vmatprep.subr.bf16.mxu0 0
  %450 = vmatpush1.bf16.msra.mxu0 %v172
  %451 = vmatprep.subr.bf16.mxu0 0
  %452 = vmatpush1.bf16.msra.mxu0 %v173
  %453 = vmatprep.subr.bf16.mxu0 0
  %454 = vmatpush1.bf16.msra.mxu0 %v174
  %455 = vmatprep.subr.bf16.mxu0 0
  %456 = vmatpush1.bf16.msra.mxu0 %v175
  %457 = vmatprep.subr.bf16.mxu0 0
  %458 = vmatpush1.bf16.msra.mxu0 %v176
  %459 = vmatprep.subr.bf16.mxu0 0
  %460 = vmatpush1.bf16.msra.mxu0 %v177
  %461 = vmatprep.subr.bf16.mxu0 0
  %462 = vmatpush1.bf16.msra.mxu0 %v178
  %463 = vmatprep.subr.bf16.mxu0 0
  %464 = vmatpush1.bf16.msra.mxu0 %v179
  %465 = vmatprep.subr.bf16.mxu0 0
  %466 = vmatpush1.bf16.msra.mxu0 0
  %467 = vmatprep.subr.bf16.mxu0 0
  %468 = vmatpush1.bf16.msra.mxu0 0
  %469 = vmatprep.subr.bf16.mxu0 0
  %470 = vmatpush1.bf16.msra.mxu0 0
  %471 = vmatprep.subr.bf16.mxu0 0
  %472 = vmatpush1.bf16.msra.mxu0 0
  %473 = vmatprep.subr.bf16.mxu0 0
  %474 = vmatpush1.bf16.msra.mxu0 0
  %475 = vmatprep.subr.bf16.mxu0 0
  %476 = vmatpush1.bf16.msra.mxu0 0
  %477 = vmatprep.subr.bf16.mxu0 0
  %478 = vmatpush1.bf16.msra.mxu0 0
  %479 = vmatprep.subr.bf16.mxu0 0
  %480 = vmatpush1.bf16.msra.mxu0 0
  %481 = vmatprep.mubr.bf16.mxu0 0
  %482 = vmatmul.mubr.bf16.gmra.mrb[0].mxu0 %v407
  %v483 = vpop.f32.mrb[0].mxu0
  %v484 = vadd.f32 %v444, %v483
  %v485 = vpop.f32.mrb[0].mxu0
  %v486 = vpop.f32.mrb[0].mxu0
  %v487 = vpop.f32.mrb[0].mxu0
  %488 = vdwg.mxu0
  %v489 = vadd.f32 %v484, %v232
  %v490 = vtanh.pop %v489
  %s491 = scalar_lea.vmem %s0, 16
  %v492 = vld [vmem:[%s491] sm:$0xf]
  %v493 = vpack.c.bf16 %v490, %v490
  %494 = vmatprep.subr.bf16.mxu0 0
  %495 = vmatpush1.bf16.msra.mxu0 %v84
  %496 = vmatprep.subr.bf16.mxu0 0
  %497 = vmatpush1.bf16.msra.mxu0 %v85
  %498 = vmatprep.subr.bf16.mxu0 0
  %499 = vmatpush1.bf16.msra.mxu0 %v86
  %500 = vmatprep.subr.bf16.mxu0 0
  %501 = vmatpush1.bf16.msra.mxu0 %v87
  %502 = vmatprep.subr.bf16.mxu0 0
  %503 = vmatpush1.bf16.msra.mxu0 %v88
  %504 = vmatprep.subr.bf16.mxu0 0
  %505 = vmatpush1.bf16.msra.mxu0 %v89
  %506 = vmatprep.subr.bf16.mxu0 0
  %507 = vmatpush1.bf16.msra.mxu0 %v90
  %508 = vmatprep.subr.bf16.mxu0 0
  %509 = vmatpush1.bf16.msra.mxu0 %v91
  %510 = vmatprep.subr.bf16.mxu0 0
  %511 = vmatpush1.bf16.msra.mxu0 0
  %512 = vmatprep.subr.bf16.mxu0 0
  %513 = vmatpush1.bf16.msra.mxu0 0
  %514 = vmatprep.subr.bf16.mxu0 0
  %515 = vmatpush1.bf16.msra.mxu0 0
  %516 = vmatprep.subr.bf16.mxu0 0
  %517 = vmatpush1.bf16.msra.mxu0 0
  %518 = vmatprep.subr.bf16.mxu0 0
  %519 = vmatpush1.bf16.msra.mxu0 0
  %520 = vmatprep.subr.bf16.mxu0 0
  %521 = vmatpush1.bf16.msra.mxu0 0
  %522 = vmatprep.subr.bf16.mxu0 0
  %523 = vmatpush1.bf16.msra.mxu0 0
  %524 = vmatprep.subr.bf16.mxu0 0
  %525 = vmatpush1.bf16.msra.mxu0 0
  %526 = vmatprep.mubr.bf16.mxu0 0
  %527 = vmatmul.mubr.bf16.gmra.mrb[0].mxu0 %v493
  %v528 = vpop.f32.mrb[0].mxu0
  %v529 = vadd.f32 0.0, %v528
  %v530 = vpop.f32.mrb[0].mxu0
  %v531 = vpop.f32.mrb[0].mxu0
  %v532 = vpop.f32.mrb[0].mxu0
  %533 = vdwg.mxu0
  %534 = vmatprep.subr.bf16.mxu0 0
  %535 = vmatpush1.bf16.msra.mxu0 %v172
  %536 = vmatprep.subr.bf16.mxu0 0
  %537 = vmatpush1.bf16.msra.mxu0 %v173
  %538 = vmatprep.subr.bf16.mxu0 0
  %539 = vmatpush1.bf16.msra.mxu0 %v174
  %540 = vmatprep.subr.bf16.mxu0 0
  %541 = vmatpush1.bf16.msra.mxu0 %v175
  %542 = vmatprep.subr.bf16.mxu0 0
  %543 = vmatpush1.bf16.msra.mxu0 %v176
  %544 = vmatprep.subr.bf16.mxu0 0
  %545 = vmatpush1.bf16.msra.mxu0 %v177
  %546 = vmatprep.subr.bf16.mxu0 0
  %547 = vmatpush1.bf16.msra.mxu0 %v178
  %548 = vmatprep.subr.bf16.mxu0 0
  %549 = vmatpush1.bf16.msra.mxu0 %v179
  %550 = vmatprep.subr.bf16.mxu0 0
  %551 = vmatpush1.bf16.msra.mxu0 0
  %552 = vmatprep.subr.bf16.mxu0 0
  %553 = vmatpush1.bf16.msra.mxu0 0
  %554 = vmatprep.subr.bf16.mxu0 0
  %555 = vmatpush1.bf16.msra.mxu0 0
  %556 = vmatprep.subr.bf16.mxu0 0
  %557 = vmatpush1.bf16.msra.mxu0 0
  %558 = vmatprep.subr.bf16.mxu0 0
  %559 = vmatpush1.bf16.msra.mxu0 0
  %560 = vmatprep.subr.bf16.mxu0 0
  %561 = vmatpush1.bf16.msra.mxu0 0
  %562 = vmatprep.subr.bf16.mxu0 0
  %563 = vmatpush1.bf16.msra.mxu0 0
  %564 = vmatprep.subr.bf16.mxu0 0
  %565 = vmatpush1.bf16.msra.mxu0 0
  %566 = vmatprep.mubr.bf16.mxu0 0
  %567 = vmatmul.mubr.bf16.gmra.mrb[0].mxu0 %v492
  %v568 = vpop.f32.mrb[0].mxu0
  %v569 = vadd.f32 %v529, %v568
  %v570 = vpop.f32.mrb[0].mxu0
  %v571 = vpop.f32.mrb[0].mxu0
  %v572 = vpop.f32.mrb[0].mxu0
  %573 = vdwg.mxu0
  %v574 = vadd.f32 %v569, %v232
  %v575 = vtanh.pop %v574
  %s576 = scalar_lea.vmem %s0, 20
  %v577 = vld [vmem:[%s576] sm:$0xf]
  %v578 = vpack.c.bf16 %v575, %v575
  %579 = vmatprep.subr.bf16.mxu0 0
  %580 = vmatpush1.bf16.msra.mxu0 %v84
  %581 = vmatprep.subr.bf16.mxu0 0
  %582 = vmatpush1.bf16.msra.mxu0 %v85
  %583 = vmatprep.subr.bf16.mxu0 0
  %584 = vmatpush1.bf16.msra.mxu0 %v86
  %585 = vmatprep.subr.bf16.mxu0 0
  %586 = vmatpush1.bf16.msra.mxu0 %v87
  %587 = vmatprep.subr.bf16.mxu0 0
  %588 = vmatpush1.bf16.msra.mxu0 %v88
  %589 = vmatprep.subr.bf16.mxu0 0
  %590 = vmatpush1.bf16.msra.mxu0 %v89
  %591 = vmatprep.subr.bf16.mxu0 0
  %592 = vmatpush1.bf16.msra.mxu0 %v90
  %593 = vmatprep.subr.bf16.mxu0 0
  %594 = vmatpush1.bf16.msra.mxu0 %v91
  %595 = vmatprep.subr.bf16.mxu0 0
  %596 = vmatpush1.bf16.msra.mxu0 0
  %597 = vmatprep.subr.bf16.mxu0 0
  %598 = vmatpush1.bf16.msra.mxu0 0
  %599 = vmatprep.subr.bf16.mxu0 0
  %600 = vmatpush1.bf16.msra.mxu0 0
  %601 = vmatprep.subr.bf16.mxu0 0
  %602 = vmatpush1.bf16.msra.mxu0 0
  %603 = vmatprep.subr.bf16.mxu0 0
  %604 = vmatpush1.bf16.msra.mxu0 0
  %605 = vmatprep.subr.bf16.mxu0 0
  %606 = vmatpush1.bf16.msra.mxu0 0
  %607 = vmatprep.subr.bf16.mxu0 0
  %608 = vmatpush1.bf16.msra.mxu0 0
  %609 = vmatprep.subr.bf16.mxu0 0
  %610 = vmatpush1.bf16.msra.mxu0 0
  %611 = vmatprep.mubr.bf16.mxu0 0
  %612 = vmatmul.mubr.bf16.gmra.mrb[0].mxu0 %v578
  %v613 = vpop.f32.mrb[0].mxu0
  %v614 = vadd.f32 0.0, %v613
  %v615 = vpop.f32.mrb[0].mxu0
  %v616 = vpop.f32.mrb[0].mxu0
  %v617 = vpop.f32.mrb[0].mxu0
  %618 = vdwg.mxu0
  %619 = vmatprep.subr.bf16.mxu0 0
  %620 = vmatpush1.bf16.msra.mxu0 %v172
  %621 = vmatprep.subr.bf16.mxu0 0
  %622 = vmatpush1.bf16.msra.mxu0 %v173
  %623 = vmatprep.subr.bf16.mxu0 0
  %624 = vmatpush1.bf16.msra.mxu0 %v174
  %625 = vmatprep.subr.bf16.mxu0 0
  %626 = vmatpush1.bf16.msra.mxu0 %v175
  %627 = vmatprep.subr.bf16.mxu0 0
  %628 = vmatpush1.bf16.msra.mxu0 %v176
  %629 = vmatprep.subr.bf16.mxu0 0
  %630 = vmatpush1.bf16.msra.mxu0 %v177
  %631 = vmatprep.subr.bf16.mxu0 0
  %632 = vmatpush1.bf16.msra.mxu0 %v178
  %633 = vmatprep.subr.bf16.mxu0 0
  %634 = vmatpush1.bf16.msra.mxu0 %v179
  %635 = vmatprep.subr.bf16.mxu0 0
  %636 = vmatpush1.bf16.msra.mxu0 0
  %637 = vmatprep.subr.bf16.mxu0 0
  %638 = vmatpush1.bf16.msra.mxu0 0
  %639 = vmatprep.subr.bf16.mxu0 0
  %640 = vmatpush1.bf16.msra.mxu0 0
  %641 = vmatprep.subr.bf16.mxu0 0
  %642 = vmatpush1.bf16.msra.mxu0 0
  %643 = vmatprep.subr.bf16.mxu0 0
  %644 = vmatpush1.bf16.msra.mxu0 0
  %645 = vmatprep.subr.bf16.mxu0 0
  %646 = vmatpush1.bf16.msra.mxu0 0
  %647 = vmatprep.subr.bf16.mxu0 0
  %648 = vmatpush1.bf16.msra.mxu0 0
  %649 = vmatprep.subr.bf16.mxu0 0
  %650 = vmatpush1.bf16.msra.mxu0 0
  %651 = vmatprep.mubr.bf16.mxu0 0
  %652 = vmatmul.mubr.bf16.gmra.mrb[0].mxu0 %v577
  %v653 = vpop.f32.mrb[0].mxu0
  %v654 = vadd.f32 %v614, %v653
  %v655 = vpop.f32.mrb[0].mxu0
  %v656 = vpop.f32.mrb[0].mxu0
  %v657 = vpop.f32.mrb[0].mxu0
  %658 = vdwg.mxu0
  %v659 = vadd.f32 %v654, %v232
  %v660 = vtanh.pop %v659
  %s661 = scalar_lea.vmem %s0, 24
  %v662 = vld [vmem:[%s661] sm:$0xf]
  %v663 = vpack.c.bf16 %v660, %v660
  %664 = vmatprep.subr.bf16.mxu0 0
  %665 = vmatpush1.bf16.msra.mxu0 %v84
  %666 = vmatprep.subr.bf16.mxu0 0
  %667 = vmatpush1.bf16.msra.mxu0 %v85
  %668 = vmatprep.subr.bf16.mxu0 0
  %669 = vmatpush1.bf16.msra.mxu0 %v86
  %670 = vmatprep.subr.bf16.mxu0 0
  %671 = vmatpush1.bf16.msra.mxu0 %v87
  %672 = vmatprep.subr.bf16.mxu0 0
  %673 = vmatpush1.bf16.msra.mxu0 %v88
  %674 = vmatprep.subr.bf16.mxu0 0
  %675 = vmatpush1.bf16.msra.mxu0 %v89
  %676 = vmatprep.subr.bf16.mxu0 0
  %677 = vmatpush1.bf16.msra.mxu0 %v90
  %678 = vmatprep.subr.bf16.mxu0 0
  %679 = vmatpush1.bf16.msra.mxu0 %v91
  %680 = vmatprep.subr.bf16.mxu0 0
  %681 = vmatpush1.bf16.msra.mxu0 0
  %682 = vmatprep.subr.bf16.mxu0 0
  %683 = vmatpush1.bf16.msra.mxu0 0
  %684 = vmatprep.subr.bf16.mxu0 0
  %685 = vmatpush1.bf16.msra.mxu0 0
  %686 = vmatprep.subr.bf16.mxu0 0
  %687 = vmatpush1.bf16.msra.mxu0 0
  %688 = vmatprep.subr.bf16.mxu0 0
  %689 = vmatpush1.bf16.msra.mxu0 0
  %690 = vmatprep.subr.bf16.mxu0 0
  %691 = vmatpush1.bf16.msra.mxu0 0
  %692 = vmatprep.subr.bf16.mxu0 0
  %693 = vmatpush1.bf16.msra.mxu0 0
  %694 = vmatprep.subr.bf16.mxu0 0
  %695 = vmatpush1.bf16.msra.mxu0 0
  %696 = vmatprep.mubr.bf16.mxu0 0
  %697 = vmatmul.mubr.bf16.gmra.mrb[0].mxu0 %v663
  %v698 = vpop.f32.mrb[0].mxu0
  %v699 = vadd.f32 0.0, %v698
  %v700 = vpop.f32.mrb[0].mxu0
  %v701 = vpop.f32.mrb[0].mxu0
  %v702 = vpop.f32.mrb[0].mxu0
  %703 = vdwg.mxu0
  %704 = vmatprep.subr.bf16.mxu0 0
  %705 = vmatpush1.bf16.msra.mxu0 %v172
  %706 = vmatprep.subr.bf16.mxu0 0
  %707 = vmatpush1.bf16.msra.mxu0 %v173
  %708 = vmatprep.subr.bf16.mxu0 0
  %709 = vmatpush1.bf16.msra.mxu0 %v174
  %710 = vmatprep.subr.bf16.mxu0 0
  %711 = vmatpush1.bf16.msra.mxu0 %v175
  %712 = vmatprep.subr.bf16.mxu0 0
  %713 = vmatpush1.bf16.msra.mxu0 %v176
  %714 = vmatprep.subr.bf16.mxu0 0
  %715 = vmatpush1.bf16.msra.mxu0 %v177
  %716 = vmatprep.subr.bf16.mxu0 0
  %717 = vmatpush1.bf16.msra.mxu0 %v178
  %718 = vmatprep.subr.bf16.mxu0 0
  %719 = vmatpush1.bf16.msra.mxu0 %v179
  %720 = vmatprep.subr.bf16.mxu0 0
  %721 = vmatpush1.bf16.msra.mxu0 0
  %722 = vmatprep.subr.bf16.mxu0 0
  %723 = vmatpush1.bf16.msra.mxu0 0
  %724 = vmatprep.subr.bf16.mxu0 0
  %725 = vmatpush1.bf16.msra.mxu0 0
  %726 = vmatprep.subr.bf16.mxu0 0
  %727 = vmatpush1.bf16.msra.mxu0 0
  %728 = vmatprep.subr.bf16.mxu0 0
  %729 = vmatpush1.bf16.msra.mxu0 0
  %730 = vmatprep.subr.bf16.mxu0 0
  %731 = vmatpush1.bf16.msra.mxu0 0
  %732 = vmatprep.subr.bf16.mxu0 0
  %733 = vmatpush1.bf16.msra.mxu0 0
  %734 = vmatprep.subr.bf16.mxu0 0
  %735 = vmatpush1.bf16.msra.mxu0 0
  %736 = vmatprep.mubr.bf16.mxu0 0
  %737 = vmatmul.mubr.bf16.gmra.mrb[0].mxu0 %v662
  %v738 = vpop.f32.mrb[0].mxu0
  %v739 = vadd.f32 %v699, %v738
  %v740 = vpop.f32.mrb[0].mxu0
  %v741 = vpop.f32.mrb[0].mxu0
  %v742 = vpop.f32.mrb[0].mxu0
  %743 = vdwg.mxu0
  %v744 = vadd.f32 %v739, %v232
  %v745 = vtanh.pop %v744
  %s746 = scalar_lea.vmem %s0, 28
  %v747 = vld [vmem:[%s746] sm:$0xf]
  %v748 = vpack.c.bf16 %v745, %v745
  %749 = vmatprep.subr.bf16.mxu0 0
  %750 = vmatpush1.bf16.msra.mxu0 %v84
  %751 = vmatprep.subr.bf16.mxu0 0
  %752 = vmatpush1.bf16.msra.mxu0 %v85
  %753 = vmatprep.subr.bf16.mxu0 0
  %754 = vmatpush1.bf16.msra.mxu0 %v86
  %755 = vmatprep.subr.bf16.mxu0 0
  %756 = vmatpush1.bf16.msra.mxu0 %v87
  %757 = vmatprep.subr.bf16.mxu0 0
  %758 = vmatpush1.bf16.msra.mxu0 %v88
  %759 = vmatprep.subr.bf16.mxu0 0
  %760 = vmatpush1.bf16.msra.mxu0 %v89
  %761 = vmatprep.subr.bf16.mxu0 0
  %762 = vmatpush1.bf16.msra.mxu0 %v90
  %763 = vmatprep.subr.bf16.mxu0 0
  %764 = vmatpush1.bf16.msra.mxu0 %v91
  %765 = vmatprep.subr.bf16.mxu0 0
  %766 = vmatpush1.bf16.msra.mxu0 0
  %767 = vmatprep.subr.bf16.mxu0 0
  %768 = vmatpush1.bf16.msra.mxu0 0
  %769 = vmatprep.subr.bf16.mxu0 0
  %770 = vmatpush1.bf16.msra.mxu0 0
  %771 = vmatprep.subr.bf16.mxu0 0
  %772 = vmatpush1.bf16.msra.mxu0 0
  %773 = vmatprep.subr.bf16.mxu0 0
  %774 = vmatpush1.bf16.msra.mxu0 0
  %775 = vmatprep.subr.bf16.mxu0 0
  %776 = vmatpush1.bf16.msra.mxu0 0
  %777 = vmatprep.subr.bf16.mxu0 0
  %778 = vmatpush1.bf16.msra.mxu0 0
  %779 = vmatprep.subr.bf16.mxu0 0
  %780 = vmatpush1.bf16.msra.mxu0 0
  %781 = vmatprep.mubr.bf16.mxu0 0
  %782 = vmatmul.mubr.bf16.gmra.mrb[0].mxu0 %v748
  %v783 = vpop.f32.mrb[0].mxu0
  %v784 = vadd.f32 0.0, %v783
  %v785 = vpop.f32.mrb[0].mxu0
  %v786 = vpop.f32.mrb[0].mxu0
  %v787 = vpop.f32.mrb[0].mxu0
  %788 = vdwg.mxu0
  %789 = vmatprep.subr.bf16.mxu0 0
  %790 = vmatpush1.bf16.msra.mxu0 %v172
  %791 = vmatprep.subr.bf16.mxu0 0
  %792 = vmatpush1.bf16.msra.mxu0 %v173
  %793 = vmatprep.subr.bf16.mxu0 0
  %794 = vmatpush1.bf16.msra.mxu0 %v174
  %795 = vmatprep.subr.bf16.mxu0 0
  %796 = vmatpush1.bf16.msra.mxu0 %v175
  %797 = vmatprep.subr.bf16.mxu0 0
  %798 = vmatpush1.bf16.msra.mxu0 %v176
  %799 = vmatprep.subr.bf16.mxu0 0
  %800 = vmatpush1.bf16.msra.mxu0 %v177
  %801 = vmatprep.subr.bf16.mxu0 0
  %802 = vmatpush1.bf16.msra.mxu0 %v178
  %803 = vmatprep.subr.bf16.mxu0 0
  %804 = vmatpush1.bf16.msra.mxu0 %v179
  %805 = vmatprep.subr.bf16.mxu0 0
  %806 = vmatpush1.bf16.msra.mxu0 0
  %807 = vmatprep.subr.bf16.mxu0 0
  %808 = vmatpush1.bf16.msra.mxu0 0
  %809 = vmatprep.subr.bf16.mxu0 0
  %810 = vmatpush1.bf16.msra.mxu0 0
  %811 = vmatprep.subr.bf16.mxu0 0
  %812 = vmatpush1.bf16.msra.mxu0 0
  %813 = vmatprep.subr.bf16.mxu0 0
  %814 = vmatpush1.bf16.msra.mxu0 0
  %815 = vmatprep.subr.bf16.mxu0 0
  %816 = vmatpush1.bf16.msra.mxu0 0
  %817 = vmatprep.subr.bf16.mxu0 0
  %818 = vmatpush1.bf16.msra.mxu0 0
  %819 = vmatprep.subr.bf16.mxu0 0
  %820 = vmatpush1.bf16.msra.mxu0 0
  %821 = vmatprep.mubr.bf16.mxu0 0
  %822 = vmatmul.mubr.bf16.gmra.mrb[0].mxu0 %v747
  %v823 = vpop.f32.mrb[0].mxu0
  %v824 = vadd.f32 %v784, %v823
  %v825 = vpop.f32.mrb[0].mxu0
  %v826 = vpop.f32.mrb[0].mxu0
  %v827 = vpop.f32.mrb[0].mxu0
  %828 = vdwg.mxu0
  %v829 = vadd.f32 %v824, %v232
  %v830 = vtanh.pop %v829
  %831 = vst [vmem:[%s4] sm:$0xff] %v830
  // Predicated region
  $region18: #{seq2seq_forward.2} parent=0 // pred_check
    _
  $region19: #{seq2seq_forward.2} parent=0 // pred_check_branch
    %833 = sbr.rel (0) target = $region21
  $region20: #{seq2seq_forward.2} parent=0 // pred_region
    _
  $region21: #{seq2seq_forward.2} parent=0 // pred_fallthru
    _
  // Predicated region
  $region22: #{seq2seq_forward.2} parent=0 // pred_check
    _
  $region23: #{seq2seq_forward.2} parent=0 // pred_check_branch
    %835 = sbr.rel (0) target = $region25
  $region24: #{seq2seq_forward.2} parent=0 // pred_region
    _
  $region25: #{seq2seq_forward.2} parent=0 // pred_fallthru
    _

// kernel: seq2seq_forward.3
$region0: #{seq2seq_forward.3}
  #allocation0 [shape = 'u32[]', space=smem, size = 0x4, offset = 0x4, fixed_abs, tag = 'smem constant byte address 0x4 - core index']
  #allocation1 [shape = 'u32[144,128]{1,0:T(1,128)}', space=vmem, size = 0x12000, scoped, tag = 'internal scratch']
  #allocation2 [shape = 's32[1]{0}', space=sflag, size = 0x4, scoped, tag = 'scoped memory for seq2seq_forward.3']
  #allocation3 [shape = 'u8[512]{0}', space=smem, size = 0x200, scoped, tag = 'prefetched SMEM operand 0']
  %s0 = inlined_call_operand.vmem [shape: s32[7], index: 0, kind: input, shape index: {}]
  %s1 = inlined_call_operand.vmem [shape: s32[7,8,1], index: 1, kind: input, shape index: {}]
  %s2 = inlined_call_operand.vmem [shape: f32[8,128], index: 2, kind: input, shape index: {}]
  %s3 = inlined_call_operand.vmem [shape: bf16[128,128], index: 3, kind: input, shape index: {}]
  %s4 = inlined_call_operand.vmem [shape: bf16[128,128], index: 4, kind: input, shape index: {}]
  %s5 = inlined_call_operand.vmem [shape: f32[1,128], index: 5, kind: input, shape index: {}]
  %s6 = inlined_call_operand.vmem [shape: bf16[128,128], index: 6, kind: input, shape index: {}]
  %s7 = inlined_call_operand.vmem [shape: f32[1,128], index: 7, kind: input, shape index: {}]
  %s8 = inlined_call_operand.vmem [shape: f32[7,8,128], index: 8, kind: output, shape index: {}]
  %s9 = sld [smem:[#allocation0]]
  $region38: #{seq2seq_forward.3} parent=0
    _
  %s11 = ssub.s32 1, %s9
  %s12 = scalar_select 0, %s11, %s9
  %s13 = sshll.u32 %s0, 4
  %s14 = int_to_ptr.vmem [resolvable:$true] %s13
  %16 = dma.vmem_to_smem %s14, 16, [#allocation3], [#allocation2]
  %17 = dma.done [#allocation2], 16
  %18 = sfence
  // Predicated region
  $region2: #{seq2seq_forward.3} parent=0 // pred_check
    _
  $region3: #{seq2seq_forward.3} parent=0 // pred_check_branch
    %20 = sbr.rel (0) target = $region5
  $region4: #{seq2seq_forward.3} parent=0 // pred_region
    _
  $region5: #{seq2seq_forward.3} parent=0 // pred_fallthru
    _
  // Predicated region
  $region6: #{seq2seq_forward.3} parent=0 // pred_check
    _
  $region7: #{seq2seq_forward.3} parent=0 // pred_check_branch
    %22 = sbr.rel (0) target = $region9
  $region8: #{seq2seq_forward.3} parent=0 // pred_region
    _
  $region9: #{seq2seq_forward.3} parent=0 // pred_fallthru
    _
  // Predicated region
  $region10: #{seq2seq_forward.3} parent=0 // pred_check
    _
  $region11: #{seq2seq_forward.3} parent=0 // pred_check_branch
    %24 = sbr.rel (0) target = $region13
  $region12: #{seq2seq_forward.3} parent=0 // pred_region
    _
  $region13: #{seq2seq_forward.3} parent=0 // pred_fallthru
    _
  // Predicated region
  $region14: #{seq2seq_forward.3} parent=0 // pred_check
    _
  $region15: #{seq2seq_forward.3} parent=0 // pred_check_branch
    %26 = sbr.rel (0) target = $region17
  $region16: #{seq2seq_forward.3} parent=0 // pred_region
    _
  $region17: #{seq2seq_forward.3} parent=0 // pred_fallthru
    _
  // Predicated region
  $region18: #{seq2seq_forward.3} parent=0 // pred_check
    _
  $region19: #{seq2seq_forward.3} parent=0 // pred_check_branch
    %28 = sbr.rel (0) target = $region21
  $region20: #{seq2seq_forward.3} parent=0 // pred_region
    _
  $region21: #{seq2seq_forward.3} parent=0 // pred_fallthru
    _
  // Predicated region
  $region22: #{seq2seq_forward.3} parent=0 // pred_check
    _
  $region23: #{seq2seq_forward.3} parent=0 // pred_check_branch
    %30 = sbr.rel (0) target = $region25
  $region24: #{seq2seq_forward.3} parent=0 // pred_region
    _
  $region25: #{seq2seq_forward.3} parent=0 // pred_fallthru
    _
  // Predicated region
  $region26: #{seq2seq_forward.3} parent=0 // pred_check
    _
  $region27: #{seq2seq_forward.3} parent=0 // pred_check_branch
    %32 = sbr.rel (0) target = $region29
  $region28: #{seq2seq_forward.3} parent=0 // pred_region
    _
  $region29: #{seq2seq_forward.3} parent=0 // pred_fallthru
    _
  %v34 = vld [vmem:[%s3] sm:$0xf]
  %v35 = vld [vmem:[%s3 + $0x4] sm:$0xf]
  %v36 = vld [vmem:[%s3 + $0x8] sm:$0xf]
  %v37 = vld [vmem:[%s3 + $0xc] sm:$0xf]
  %v38 = vld [vmem:[%s3 + $0x10] sm:$0xf]
  %v39 = vld [vmem:[%s3 + $0x14] sm:$0xf]
  %v40 = vld [vmem:[%s3 + $0x18] sm:$0xf]
  %v41 = vld [vmem:[%s3 + $0x1c] sm:$0xf]
  %v42 = vld [vmem:[%s3 + $0x20] sm:$0xf]
  %v43 = vld [vmem:[%s3 + $0x24] sm:$0xf]
  %v44 = vld [vmem:[%s3 + $0x28] sm:$0xf]
  %v45 = vld [vmem:[%s3 + $0x2c] sm:$0xf]
  %v46 = vld [vmem:[%s3 + $0x30] sm:$0xf]
  %v47 = vld [vmem:[%s3 + $0x34] sm:$0xf]
  %v48 = vld [vmem:[%s3 + $0x38] sm:$0xf]
  %v49 = vld [vmem:[%s3 + $0x3c] sm:$0xf]
  %v50 = vld [vmem:[%s4] sm:$0xf]
  %v51 = vld [vmem:[%s4 + $0x4] sm:$0xf]
  %v52 = vld [vmem:[%s4 + $0x8] sm:$0xf]
  %v53 = vld [vmem:[%s4 + $0xc] sm:$0xf]
  %v54 = vld [vmem:[%s4 + $0x10] sm:$0xf]
  %v55 = vld [vmem:[%s4 + $0x14] sm:$0xf]
  %v56 = vld [vmem:[%s4 + $0x18] sm:$0xf]
  %v57 = vld [vmem:[%s4 + $0x1c] sm:$0xf]
  %v58 = vld [vmem:[%s4 + $0x20] sm:$0xf]
  %v59 = vld [vmem:[%s4 + $0x24] sm:$0xf]
  %v60 = vld [vmem:[%s4 + $0x28] sm:$0xf]
  %v61 = vld [vmem:[%s4 + $0x2c] sm:$0xf]
  %v62 = vld [vmem:[%s4 + $0x30] sm:$0xf]
  %v63 = vld [vmem:[%s4 + $0x34] sm:$0xf]
  %v64 = vld [vmem:[%s4 + $0x38] sm:$0xf]
  %v65 = vld [vmem:[%s4 + $0x3c] sm:$0xf]
  %v66 = vld [vmem:[%s5] sm:$0x1]
  %v67 = vld [vmem:[%s6] sm:$0xf]
  %v68 = vld [vmem:[%s6 + $0x4] sm:$0xf]
  %v69 = vld [vmem:[%s6 + $0x8] sm:$0xf]
  %v70 = vld [vmem:[%s6 + $0xc] sm:$0xf]
  %v71 = vld [vmem:[%s6 + $0x10] sm:$0xf]
  %v72 = vld [vmem:[%s6 + $0x14] sm:$0xf]
  %v73 = vld [vmem:[%s6 + $0x18] sm:$0xf]
  %v74 = vld [vmem:[%s6 + $0x1c] sm:$0xf]
  %v75 = vld [vmem:[%s6 + $0x20] sm:$0xf]
  %v76 = vld [vmem:[%s6 + $0x24] sm:$0xf]
  %v77 = vld [vmem:[%s6 + $0x28] sm:$0xf]
  %v78 = vld [vmem:[%s6 + $0x2c] sm:$0xf]
  %v79 = vld [vmem:[%s6 + $0x30] sm:$0xf]
  %v80 = vld [vmem:[%s6 + $0x34] sm:$0xf]
  %v81 = vld [vmem:[%s6 + $0x38] sm:$0xf]
  %v82 = vld [vmem:[%s6 + $0x3c] sm:$0xf]
  %v83 = vld [vmem:[%s7] sm:$0x1]
  %v84 = vlaneseq
  %v85 = vand.u32 %v84, 127
  %v86 = vld [vmem:[%s2] sm:$0xff]
  %v87 = vld [vmem:[%s1] sm:$0xff]
  %88 = vset.pattern.permute.xlu0 0
  %89 = vperm.xlu0 %88, %v87
  %v90 = vpop.permute.xlu0 %89
  %vm91 = vcmp.eq.s32.totalorder %v85, %v90
  %v92 = vsel %vm91, 1, 0
  %v93 = vcvt.s32.f32 %v92
  %v94 = vpack.c.bf16 %v93, %v93
  %v95 = vpack.c.bf16 %v86, %v86
  %v112 = vunpack.c.l.b16 %v50
  %v113 = vunpack.c.l.b16 %v51
  %v114 = vunpack.c.l.b16 %v52
  %v115 = vunpack.c.l.b16 %v53
  %v116 = vunpack.c.l.b16 %v54
  %v117 = vunpack.c.l.b16 %v55
  %v118 = vunpack.c.l.b16 %v56
  %v119 = vunpack.c.l.b16 %v57
  %v120 = vunpack.c.l.b16 %v58
  %v121 = vunpack.c.l.b16 %v59
  %v122 = vunpack.c.l.b16 %v60
  %v123 = vunpack.c.l.b16 %v61
  %v124 = vunpack.c.l.b16 %v62
  %v125 = vunpack.c.l.b16 %v63
  %v126 = vunpack.c.l.b16 %v64
  %v127 = vunpack.c.l.b16 %v65
  %v128 = vpack.c.b16 %v113, %v112
  %v129 = vpack.c.b16 %v115, %v114
  %v130 = vpack.c.b16 %v117, %v116
  %v131 = vpack.c.b16 %v119, %v118
  %v132 = vpack.c.b16 %v121, %v120
  %v133 = vpack.c.b16 %v123, %v122
  %v134 = vpack.c.b16 %v125, %v124
  %v135 = vpack.c.b16 %v127, %v126
  %144 = vmatprep.subr.bf16.mxu0 0
  %145 = vmatpush1.bf16.msra.mxu0 %v128
  %146 = vmatprep.subr.bf16.mxu0 0
  %147 = vmatpush1.bf16.msra.mxu0 %v129
  %148 = vmatprep.subr.bf16.mxu0 0
  %149 = vmatpush1.bf16.msra.mxu0 %v130
  %150 = vmatprep.subr.bf16.mxu0 0
  %151 = vmatpush1.bf16.msra.mxu0 %v131
  %152 = vmatprep.subr.bf16.mxu0 0
  %153 = vmatpush1.bf16.msra.mxu0 %v132
  %154 = vmatprep.subr.bf16.mxu0 0
  %155 = vmatpush1.bf16.msra.mxu0 %v133
  %156 = vmatprep.subr.bf16.mxu0 0
  %157 = vmatpush1.bf16.msra.mxu0 %v134
  %158 = vmatprep.subr.bf16.mxu0 0
  %159 = vmatpush1.bf16.msra.mxu0 %v135
  %160 = vmatprep.subr.bf16.mxu0 0
  %161 = vmatpush1.bf16.msra.mxu0 0
  %162 = vmatprep.subr.bf16.mxu0 0
  %163 = vmatpush1.bf16.msra.mxu0 0
  %164 = vmatprep.subr.bf16.mxu0 0
  %165 = vmatpush1.bf16.msra.mxu0 0
  %166 = vmatprep.subr.bf16.mxu0 0
  %167 = vmatpush1.bf16.msra.mxu0 0
  %168 = vmatprep.subr.bf16.mxu0 0
  %169 = vmatpush1.bf16.msra.mxu0 0
  %170 = vmatprep.subr.bf16.mxu0 0
  %171 = vmatpush1.bf16.msra.mxu0 0
  %172 = vmatprep.subr.bf16.mxu0 0
  %173 = vmatpush1.bf16.msra.mxu0 0
  %174 = vmatprep.subr.bf16.mxu0 0
  %175 = vmatpush1.bf16.msra.mxu0 0
  %176 = vmatprep.mubr.bf16.mxu0 0
  %177 = vmatmul.mubr.bf16.gmra.mrb[0].mxu0 %v95
  %v178 = vpop.f32.mrb[0].mxu0
  %v179 = vadd.f32 0.0, %v178
  %v180 = vpop.f32.mrb[0].mxu0
  %v181 = vpop.f32.mrb[0].mxu0
  %v182 = vpop.f32.mrb[0].mxu0
  %183 = vdwg.mxu0
  %v200 = vunpack.c.l.b16 %v34
  %v201 = vunpack.c.l.b16 %v35
  %v202 = vunpack.c.l.b16 %v36
  %v203 = vunpack.c.l.b16 %v37
  %v204 = vunpack.c.l.b16 %v38
  %v205 = vunpack.c.l.b16 %v39
  %v206 = vunpack.c.l.b16 %v40
  %v207 = vunpack.c.l.b16 %v41
  %v208 = vunpack.c.l.b16 %v42
  %v209 = vunpack.c.l.b16 %v43
  %v210 = vunpack.c.l.b16 %v44
  %v211 = vunpack.c.l.b16 %v45
  %v212 = vunpack.c.l.b16 %v46
  %v213 = vunpack.c.l.b16 %v47
  %v214 = vunpack.c.l.b16 %v48
  %v215 = vunpack.c.l.b16 %v49
  %v216 = vpack.c.b16 %v201, %v200
  %v217 = vpack.c.b16 %v203, %v202
  %v218 = vpack.c.b16 %v205, %v204
  %v219 = vpack.c.b16 %v207, %v206
  %v220 = vpack.c.b16 %v209, %v208
  %v221 = vpack.c.b16 %v211, %v210
  %v222 = vpack.c.b16 %v213, %v212
  %v223 = vpack.c.b16 %v215, %v214
  %232 = vmatprep.subr.bf16.mxu0 0
  %233 = vmatpush1.bf16.msra.mxu0 %v216
  %234 = vmatprep.subr.bf16.mxu0 0
  %235 = vmatpush1.bf16.msra.mxu0 %v217
  %236 = vmatprep.subr.bf16.mxu0 0
  %237 = vmatpush1.bf16.msra.mxu0 %v218
  %238 = vmatprep.subr.bf16.mxu0 0
  %239 = vmatpush1.bf16.msra.mxu0 %v219
  %240 = vmatprep.subr.bf16.mxu0 0
  %241 = vmatpush1.bf16.msra.mxu0 %v220
  %242 = vmatprep.subr.bf16.mxu0 0
  %243 = vmatpush1.bf16.msra.mxu0 %v221
  %244 = vmatprep.subr.bf16.mxu0 0
  %245 = vmatpush1.bf16.msra.mxu0 %v222
  %246 = vmatprep.subr.bf16.mxu0 0
  %247 = vmatpush1.bf16.msra.mxu0 %v223
  %248 = vmatprep.subr.bf16.mxu0 0
  %249 = vmatpush1.bf16.msra.mxu0 0
  %250 = vmatprep.subr.bf16.mxu0 0
  %251 = vmatpush1.bf16.msra.mxu0 0
  %252 = vmatprep.subr.bf16.mxu0 0
  %253 = vmatpush1.bf16.msra.mxu0 0
  %254 = vmatprep.subr.bf16.mxu0 0
  %255 = vmatpush1.bf16.msra.mxu0 0
  %256 = vmatprep.subr.bf16.mxu0 0
  %257 = vmatpush1.bf16.msra.mxu0 0
  %258 = vmatprep.subr.bf16.mxu0 0
  %259 = vmatpush1.bf16.msra.mxu0 0
  %260 = vmatprep.subr.bf16.mxu0 0
  %261 = vmatpush1.bf16.msra.mxu0 0
  %262 = vmatprep.subr.bf16.mxu0 0
  %263 = vmatpush1.bf16.msra.mxu0 0
  %264 = vmatprep.mubr.bf16.mxu0 0
  %265 = vmatmul.mubr.bf16.gmra.mrb[0].mxu0 %v94
  %v266 = vpop.f32.mrb[0].mxu0
  %v267 = vadd.f32 %v179, %v266
  %v268 = vpop.f32.mrb[0].mxu0
  %v269 = vpop.f32.mrb[0].mxu0
  %v270 = vpop.f32.mrb[0].mxu0
  %271 = vdwg.mxu0
  %v273 = vlaneseq
  %v274 = vshrl.u32 %v273, 7
  %v275 = vsub.s32 0, %v274
  %v276 = vrot.slane %v66, %v275
  %v278 = vadd.f32 %v267, %v276
  %v279 = vtanh.pop %v278
  %v280 = vpack.c.bf16 %v279, %v279
  %v282 = vlaneseq
  %v283 = vshrl.u32 %v282, 7
  %v284 = vsub.s32 0, %v283
  %v285 = vrot.slane %v83, %v284
  %v303 = vunpack.c.l.b16 %v67
  %v304 = vunpack.c.l.b16 %v68
  %v305 = vunpack.c.l.b16 %v69
  %v306 = vunpack.c.l.b16 %v70
  %v307 = vunpack.c.l.b16 %v71
  %v308 = vunpack.c.l.b16 %v72
  %v309 = vunpack.c.l.b16 %v73
  %v310 = vunpack.c.l.b16 %v74
  %v311 = vunpack.c.l.b16 %v75
  %v312 = vunpack.c.l.b16 %v76
  %v313 = vunpack.c.l.b16 %v77
  %v314 = vunpack.c.l.b16 %v78
  %v315 = vunpack.c.l.b16 %v79
  %v316 = vunpack.c.l.b16 %v80
  %v317 = vunpack.c.l.b16 %v81
  %v318 = vunpack.c.l.b16 %v82
  %v319 = vpack.c.b16 %v304, %v303
  %v320 = vpack.c.b16 %v306, %v305
  %v321 = vpack.c.b16 %v308, %v307
  %v322 = vpack.c.b16 %v310, %v309
  %v323 = vpack.c.b16 %v312, %v311
  %v324 = vpack.c.b16 %v314, %v313
  %v325 = vpack.c.b16 %v316, %v315
  %v326 = vpack.c.b16 %v318, %v317
  %335 = vmatprep.subr.bf16.mxu0 0
  %336 = vmatpush1.bf16.msra.mxu0 %v319
  %337 = vmatprep.subr.bf16.mxu0 0
  %338 = vmatpush1.bf16.msra.mxu0 %v320
  %339 = vmatprep.subr.bf16.mxu0 0
  %340 = vmatpush1.bf16.msra.mxu0 %v321
  %341 = vmatprep.subr.bf16.mxu0 0
  %342 = vmatpush1.bf16.msra.mxu0 %v322
  %343 = vmatprep.subr.bf16.mxu0 0
  %344 = vmatpush1.bf16.msra.mxu0 %v323
  %345 = vmatprep.subr.bf16.mxu0 0
  %346 = vmatpush1.bf16.msra.mxu0 %v324
  %347 = vmatprep.subr.bf16.mxu0 0
  %348 = vmatpush1.bf16.msra.mxu0 %v325
  %349 = vmatprep.subr.bf16.mxu0 0
  %350 = vmatpush1.bf16.msra.mxu0 %v326
  %351 = vmatprep.subr.bf16.mxu0 0
  %352 = vmatpush1.bf16.msra.mxu0 0
  %353 = vmatprep.subr.bf16.mxu0 0
  %354 = vmatpush1.bf16.msra.mxu0 0
  %355 = vmatprep.subr.bf16.mxu0 0
  %356 = vmatpush1.bf16.msra.mxu0 0
  %357 = vmatprep.subr.bf16.mxu0 0
  %358 = vmatpush1.bf16.msra.mxu0 0
  %359 = vmatprep.subr.bf16.mxu0 0
  %360 = vmatpush1.bf16.msra.mxu0 0
  %361 = vmatprep.subr.bf16.mxu0 0
  %362 = vmatpush1.bf16.msra.mxu0 0
  %363 = vmatprep.subr.bf16.mxu0 0
  %364 = vmatpush1.bf16.msra.mxu0 0
  %365 = vmatprep.subr.bf16.mxu0 0
  %366 = vmatpush1.bf16.msra.mxu0 0
  %367 = vmatprep.mubr.bf16.mxu0 0
  %368 = vmatmul.mubr.bf16.gmra.mrb[0].mxu0 %v280
  %v369 = vpop.f32.mrb[0].mxu0
  %v370 = vadd.f32 %v285, %v369
  %v371 = vpop.f32.mrb[0].mxu0
  %v372 = vpop.f32.mrb[0].mxu0
  %v373 = vpop.f32.mrb[0].mxu0
  %374 = vdwg.mxu0
  %375 = vst [vmem:[%s8] sm:$0xff] %v370
  %vm376 = vcmp.lt.s32.totalorder %v85, 24
  %v377 = vsel %vm376, %v370, -1e+30
  %378 = vmax.xlane.f32.xlu0 %v377
  %v379 = vpop.xlane.xlu0 %378
  %vm380 = vcmp.ge.f32.partialorder %v377, %v379
  %v381 = vsel %vm380, %v85, 128
  %v382 = vand.u32 %v381, 65535
  %v383 = vshra.s32 %v381, 16
  %v384 = vcvt.s32.f32 %v382
  %v385 = vcvt.s32.f32 %v383
  %386 = vmin.xlane.f32.xlu0 %v385
  %v387 = vpop.xlane.xlu0 %386
  %vm388 = vcmp.eq.f32.partialorder %v385, %v387
  %v389 = vsel %vm388, %v384, inf
  %390 = vmin.xlane.f32.xlu0 %v389
  %v391 = vpop.xlane.xlu0 %390
  %v392 = vcvt.f32.s32 %v391
  %v393 = vcvt.f32.s32 %v387
  %v394 = vshll.u32 %v393, 16
  %v395 = vadd.s32 %v394, %v392
  %s396 = sld [smem:[#allocation3 + $0x1]]
  %p397 = scmp.ne.s32.totalorder %s396, 0
  %s398 = scalar_lea.vmem %s1, 8
  %v399 = vld [vmem:[%s398] sm:$0xff]
  %s400 = scalar_select %p397, 1, 0
  %v401 = vstv %s400
  %vm402 = vcmp.eq.s32.totalorder %v401, 1
  %v403 = vsel %vm402, %v399, %v395
  %404 = vset.pattern.permute.xlu0 0
  %405 = vperm.xlu0 %404, %v403
  %v406 = vpop.permute.xlu0 %405
  %vm407 = vcmp.eq.s32.totalorder %v85, %v406
  %v408 = vsel %vm407, 1, 0
  %v409 = vcvt.s32.f32 %v408
  %v410 = vpack.c.bf16 %v409, %v409
  %411 = vmatprep.subr.bf16.mxu0 0
  %412 = vmatpush1.bf16.msra.mxu0 %v128
  %413 = vmatprep.subr.bf16.mxu0 0
  %414 = vmatpush1.bf16.msra.mxu0 %v129
  %415 = vmatprep.subr.bf16.mxu0 0
  %416 = vmatpush1.bf16.msra.mxu0 %v130
  %417 = vmatprep.subr.bf16.mxu0 0
  %418 = vmatpush1.bf16.msra.mxu0 %v131
  %419 = vmatprep.subr.bf16.mxu0 0
  %420 = vmatpush1.bf16.msra.mxu0 %v132
  %421 = vmatprep.subr.bf16.mxu0 0
  %422 = vmatpush1.bf16.msra.mxu0 %v133
  %423 = vmatprep.subr.bf16.mxu0 0
  %424 = vmatpush1.bf16.msra.mxu0 %v134
  %425 = vmatprep.subr.bf16.mxu0 0
  %426 = vmatpush1.bf16.msra.mxu0 %v135
  %427 = vmatprep.subr.bf16.mxu0 0
  %428 = vmatpush1.bf16.msra.mxu0 0
  %429 = vmatprep.subr.bf16.mxu0 0
  %430 = vmatpush1.bf16.msra.mxu0 0
  %431 = vmatprep.subr.bf16.mxu0 0
  %432 = vmatpush1.bf16.msra.mxu0 0
  %433 = vmatprep.subr.bf16.mxu0 0
  %434 = vmatpush1.bf16.msra.mxu0 0
  %435 = vmatprep.subr.bf16.mxu0 0
  %436 = vmatpush1.bf16.msra.mxu0 0
  %437 = vmatprep.subr.bf16.mxu0 0
  %438 = vmatpush1.bf16.msra.mxu0 0
  %439 = vmatprep.subr.bf16.mxu0 0
  %440 = vmatpush1.bf16.msra.mxu0 0
  %441 = vmatprep.subr.bf16.mxu0 0
  %442 = vmatpush1.bf16.msra.mxu0 0
  %443 = vmatprep.mubr.bf16.mxu0 0
  %444 = vmatmul.mubr.bf16.gmra.mrb[0].mxu0 %v280
  %v445 = vpop.f32.mrb[0].mxu0
  %v446 = vadd.f32 0.0, %v445
  %v447 = vpop.f32.mrb[0].mxu0
  %v448 = vpop.f32.mrb[0].mxu0
  %v449 = vpop.f32.mrb[0].mxu0
  %450 = vdwg.mxu0
  %451 = vmatprep.subr.bf16.mxu0 0
  %452 = vmatpush1.bf16.msra.mxu0 %v216
  %453 = vmatprep.subr.bf16.mxu0 0
  %454 = vmatpush1.bf16.msra.mxu0 %v217
  %455 = vmatprep.subr.bf16.mxu0 0
  %456 = vmatpush1.bf16.msra.mxu0 %v218
  %457 = vmatprep.subr.bf16.mxu0 0
  %458 = vmatpush1.bf16.msra.mxu0 %v219
  %459 = vmatprep.subr.bf16.mxu0 0
  %460 = vmatpush1.bf16.msra.mxu0 %v220
  %461 = vmatprep.subr.bf16.mxu0 0
  %462 = vmatpush1.bf16.msra.mxu0 %v221
  %463 = vmatprep.subr.bf16.mxu0 0
  %464 = vmatpush1.bf16.msra.mxu0 %v222
  %465 = vmatprep.subr.bf16.mxu0 0
  %466 = vmatpush1.bf16.msra.mxu0 %v223
  %467 = vmatprep.subr.bf16.mxu0 0
  %468 = vmatpush1.bf16.msra.mxu0 0
  %469 = vmatprep.subr.bf16.mxu0 0
  %470 = vmatpush1.bf16.msra.mxu0 0
  %471 = vmatprep.subr.bf16.mxu0 0
  %472 = vmatpush1.bf16.msra.mxu0 0
  %473 = vmatprep.subr.bf16.mxu0 0
  %474 = vmatpush1.bf16.msra.mxu0 0
  %475 = vmatprep.subr.bf16.mxu0 0
  %476 = vmatpush1.bf16.msra.mxu0 0
  %477 = vmatprep.subr.bf16.mxu0 0
  %478 = vmatpush1.bf16.msra.mxu0 0
  %479 = vmatprep.subr.bf16.mxu0 0
  %480 = vmatpush1.bf16.msra.mxu0 0
  %481 = vmatprep.subr.bf16.mxu0 0
  %482 = vmatpush1.bf16.msra.mxu0 0
  %483 = vmatprep.mubr.bf16.mxu0 0
  %484 = vmatmul.mubr.bf16.gmra.mrb[0].mxu0 %v410
  %v485 = vpop.f32.mrb[0].mxu0
  %v486 = vadd.f32 %v446, %v485
  %v487 = vpop.f32.mrb[0].mxu0
  %v488 = vpop.f32.mrb[0].mxu0
  %v489 = vpop.f32.mrb[0].mxu0
  %490 = vdwg.mxu0
  %v491 = vadd.f32 %v486, %v276
  %v492 = vtanh.pop %v491
  %v493 = vpack.c.bf16 %v492, %v492
  %494 = vmatprep.subr.bf16.mxu0 0
  %495 = vmatpush1.bf16.msra.mxu0 %v319
  %496 = vmatprep.subr.bf16.mxu0 0
  %497 = vmatpush1.bf16.msra.mxu0 %v320
  %498 = vmatprep.subr.bf16.mxu0 0
  %499 = vmatpush1.bf16.msra.mxu0 %v321
  %500 = vmatprep.subr.bf16.mxu0 0
  %501 = vmatpush1.bf16.msra.mxu0 %v322
  %502 = vmatprep.subr.bf16.mxu0 0
  %503 = vmatpush1.bf16.msra.mxu0 %v323
  %504 = vmatprep.subr.bf16.mxu0 0
  %505 = vmatpush1.bf16.msra.mxu0 %v324
  %506 = vmatprep.subr.bf16.mxu0 0
  %507 = vmatpush1.bf16.msra.mxu0 %v325
  %508 = vmatprep.subr.bf16.mxu0 0
  %509 = vmatpush1.bf16.msra.mxu0 %v326
  %510 = vmatprep.subr.bf16.mxu0 0
  %511 = vmatpush1.bf16.msra.mxu0 0
  %512 = vmatprep.subr.bf16.mxu0 0
  %513 = vmatpush1.bf16.msra.mxu0 0
  %514 = vmatprep.subr.bf16.mxu0 0
  %515 = vmatpush1.bf16.msra.mxu0 0
  %516 = vmatprep.subr.bf16.mxu0 0
  %517 = vmatpush1.bf16.msra.mxu0 0
  %518 = vmatprep.subr.bf16.mxu0 0
  %519 = vmatpush1.bf16.msra.mxu0 0
  %520 = vmatprep.subr.bf16.mxu0 0
  %521 = vmatpush1.bf16.msra.mxu0 0
  %522 = vmatprep.subr.bf16.mxu0 0
  %523 = vmatpush1.bf16.msra.mxu0 0
  %524 = vmatprep.subr.bf16.mxu0 0
  %525 = vmatpush1.bf16.msra.mxu0 0
  %526 = vmatprep.mubr.bf16.mxu0 0
  %527 = vmatmul.mubr.bf16.gmra.mrb[0].mxu0 %v493
  %v528 = vpop.f32.mrb[0].mxu0
  %v529 = vadd.f32 %v285, %v528
  %v530 = vpop.f32.mrb[0].mxu0
  %v531 = vpop.f32.mrb[0].mxu0
  %v532 = vpop.f32.mrb[0].mxu0
  %533 = vdwg.mxu0
  %s534 = scalar_lea.vmem %s8, 8
  %535 = vst [vmem:[%s534] sm:$0xff] %v529
  %v536 = vsel %vm376, %v529, -1e+30
  %537 = vmax.xlane.f32.xlu0 %v536
  %v538 = vpop.xlane.xlu0 %537
  %vm539 = vcmp.ge.f32.partialorder %v536, %v538
  %v540 = vsel %vm539, %v85, 128
  %v541 = vand.u32 %v540, 65535
  %v542 = vshra.s32 %v540, 16
  %v543 = vcvt.s32.f32 %v541
  %v544 = vcvt.s32.f32 %v542
  %545 = vmin.xlane.f32.xlu0 %v544
  %v546 = vpop.xlane.xlu0 %545
  %vm547 = vcmp.eq.f32.partialorder %v544, %v546
  %v548 = vsel %vm547, %v543, inf
  %549 = vmin.xlane.f32.xlu0 %v548
  %v550 = vpop.xlane.xlu0 %549
  %v551 = vcvt.f32.s32 %v550
  %v552 = vcvt.f32.s32 %v546
  %v553 = vshll.u32 %v552, 16
  %v554 = vadd.s32 %v553, %v551
  %s555 = sld [smem:[#allocation3 + $0x2]]
  %p556 = scmp.ne.s32.totalorder %s555, 0
  %s557 = scalar_lea.vmem %s1, 16
  %v558 = vld [vmem:[%s557] sm:$0xff]
  %s559 = scalar_select %p556, 1, 0
  %v560 = vstv %s559
  %vm561 = vcmp.eq.s32.totalorder %v560, 1
  %v562 = vsel %vm561, %v558, %v554
  %563 = vset.pattern.permute.xlu0 0
  %564 = vperm.xlu0 %563, %v562
  %v565 = vpop.permute.xlu0 %564
  %vm566 = vcmp.eq.s32.totalorder %v85, %v565
  %v567 = vsel %vm566, 1, 0
  %v568 = vcvt.s32.f32 %v567
  %v569 = vpack.c.bf16 %v568, %v568
  %570 = vmatprep.subr.bf16.mxu0 0
  %571 = vmatpush1.bf16.msra.mxu0 %v128
  %572 = vmatprep.subr.bf16.mxu0 0
  %573 = vmatpush1.bf16.msra.mxu0 %v129
  %574 = vmatprep.subr.bf16.mxu0 0
  %575 = vmatpush1.bf16.msra.mxu0 %v130
  %576 = vmatprep.subr.bf16.mxu0 0
  %577 = vmatpush1.bf16.msra.mxu0 %v131
  %578 = vmatprep.subr.bf16.mxu0 0
  %579 = vmatpush1.bf16.msra.mxu0 %v132
  %580 = vmatprep.subr.bf16.mxu0 0
  %581 = vmatpush1.bf16.msra.mxu0 %v133
  %582 = vmatprep.subr.bf16.mxu0 0
  %583 = vmatpush1.bf16.msra.mxu0 %v134
  %584 = vmatprep.subr.bf16.mxu0 0
  %585 = vmatpush1.bf16.msra.mxu0 %v135
  %586 = vmatprep.subr.bf16.mxu0 0
  %587 = vmatpush1.bf16.msra.mxu0 0
  %588 = vmatprep.subr.bf16.mxu0 0
  %589 = vmatpush1.bf16.msra.mxu0 0
  %590 = vmatprep.subr.bf16.mxu0 0
  %591 = vmatpush1.bf16.msra.mxu0 0
  %592 = vmatprep.subr.bf16.mxu0 0
  %593 = vmatpush1.bf16.msra.mxu0 0
  %594 = vmatprep.subr.bf16.mxu0 0
  %595 = vmatpush1.bf16.msra.mxu0 0
  %596 = vmatprep.subr.bf16.mxu0 0
  %597 = vmatpush1.bf16.msra.mxu0 0
  %598 = vmatprep.subr.bf16.mxu0 0
  %599 = vmatpush1.bf16.msra.mxu0 0
  %600 = vmatprep.subr.bf16.mxu0 0
  %601 = vmatpush1.bf16.msra.mxu0 0
  %602 = vmatprep.mubr.bf16.mxu0 0
  %603 = vmatmul.mubr.bf16.gmra.mrb[0].mxu0 %v493
  %v604 = vpop.f32.mrb[0].mxu0
  %v605 = vadd.f32 0.0, %v604
  %v606 = vpop.f32.mrb[0].mxu0
  %v607 = vpop.f32.mrb[0].mxu0
  %v608 = vpop.f32.mrb[0].mxu0
  %609 = vdwg.mxu0
  %610 = vmatprep.subr.bf16.mxu0 0
  %611 = vmatpush1.bf16.msra.mxu0 %v216
  %612 = vmatprep.subr.bf16.mxu0 0
  %613 = vmatpush1.bf16.msra.mxu0 %v217
  %614 = vmatprep.subr.bf16.mxu0 0
  %615 = vmatpush1.bf16.msra.mxu0 %v218
  %616 = vmatprep.subr.bf16.mxu0 0
  %617 = vmatpush1.bf16.msra.mxu0 %v219
  %618 = vmatprep.subr.bf16.mxu0 0
  %619 = vmatpush1.bf16.msra.mxu0 %v220
  %620 = vmatprep.subr.bf16.mxu0 0
  %621 = vmatpush1.bf16.msra.mxu0 %v221
  %622 = vmatprep.subr.bf16.mxu0 0
  %623 = vmatpush1.bf16.msra.mxu0 %v222
  %624 = vmatprep.subr.bf16.mxu0 0
  %625 = vmatpush1.bf16.msra.mxu0 %v223
  %626 = vmatprep.subr.bf16.mxu0 0
  %627 = vmatpush1.bf16.msra.mxu0 0
  %628 = vmatprep.subr.bf16.mxu0 0
  %629 = vmatpush1.bf16.msra.mxu0 0
  %630 = vmatprep.subr.bf16.mxu0 0
  %631 = vmatpush1.bf16.msra.mxu0 0
  %632 = vmatprep.subr.bf16.mxu0 0
  %633 = vmatpush1.bf16.msra.mxu0 0
  %634 = vmatprep.subr.bf16.mxu0 0
  %635 = vmatpush1.bf16.msra.mxu0 0
  %636 = vmatprep.subr.bf16.mxu0 0
  %637 = vmatpush1.bf16.msra.mxu0 0
  %638 = vmatprep.subr.bf16.mxu0 0
  %639 = vmatpush1.bf16.msra.mxu0 0
  %640 = vmatprep.subr.bf16.mxu0 0
  %641 = vmatpush1.bf16.msra.mxu0 0
  %642 = vmatprep.mubr.bf16.mxu0 0
  %643 = vmatmul.mubr.bf16.gmra.mrb[0].mxu0 %v569
  %v644 = vpop.f32.mrb[0].mxu0
  %v645 = vadd.f32 %v605, %v644
  %v646 = vpop.f32.mrb[0].mxu0
  %v647 = vpop.f32.mrb[0].mxu0
  %v648 = vpop.f32.mrb[0].mxu0
  %649 = vdwg.mxu0
  %v650 = vadd.f32 %v645, %v276
  %v651 = vtanh.pop %v650
  %v652 = vpack.c.bf16 %v651, %v651
  %653 = vmatprep.subr.bf16.mxu0 0
  %654 = vmatpush1.bf16.msra.mxu0 %v319
  %655 = vmatprep.subr.bf16.mxu0 0
  %656 = vmatpush1.bf16.msra.mxu0 %v320
  %657 = vmatprep.subr.bf16.mxu0 0
  %658 = vmatpush1.bf16.msra.mxu0 %v321
  %659 = vmatprep.subr.bf16.mxu0 0
  %660 = vmatpush1.bf16.msra.mxu0 %v322
  %661 = vmatprep.subr.bf16.mxu0 0
  %662 = vmatpush1.bf16.msra.mxu0 %v323
  %663 = vmatprep.subr.bf16.mxu0 0
  %664 = vmatpush1.bf16.msra.mxu0 %v324
  %665 = vmatprep.subr.bf16.mxu0 0
  %666 = vmatpush1.bf16.msra.mxu0 %v325
  %667 = vmatprep.subr.bf16.mxu0 0
  %668 = vmatpush1.bf16.msra.mxu0 %v326
  %669 = vmatprep.subr.bf16.mxu0 0
  %670 = vmatpush1.bf16.msra.mxu0 0
  %671 = vmatprep.subr.bf16.mxu0 0
  %672 = vmatpush1.bf16.msra.mxu0 0
  %673 = vmatprep.subr.bf16.mxu0 0
  %674 = vmatpush1.bf16.msra.mxu0 0
  %675 = vmatprep.subr.bf16.mxu0 0
  %676 = vmatpush1.bf16.msra.mxu0 0
  %677 = vmatprep.subr.bf16.mxu0 0
  %678 = vmatpush1.bf16.msra.mxu0 0
  %679 = vmatprep.subr.bf16.mxu0 0
  %680 = vmatpush1.bf16.msra.mxu0 0
  %681 = vmatprep.subr.bf16.mxu0 0
  %682 = vmatpush1.bf16.msra.mxu0 0
  %683 = vmatprep.subr.bf16.mxu0 0
  %684 = vmatpush1.bf16.msra.mxu0 0
  %685 = vmatprep.mubr.bf16.mxu0 0
  %686 = vmatmul.mubr.bf16.gmra.mrb[0].mxu0 %v652
  %v687 = vpop.f32.mrb[0].mxu0
  %v688 = vadd.f32 %v285, %v687
  %v689 = vpop.f32.mrb[0].mxu0
  %v690 = vpop.f32.mrb[0].mxu0
  %v691 = vpop.f32.mrb[0].mxu0
  %692 = vdwg.mxu0
  %s693 = scalar_lea.vmem %s8, 16
  %694 = vst [vmem:[%s693] sm:$0xff] %v688
  %v695 = vsel %vm376, %v688, -1e+30
  %696 = vmax.xlane.f32.xlu0 %v695
  %v697 = vpop.xlane.xlu0 %696
  %vm698 = vcmp.ge.f32.partialorder %v695, %v697
  %v699 = vsel %vm698, %v85, 128
  %v700 = vand.u32 %v699, 65535
  %v701 = vshra.s32 %v699, 16
  %v702 = vcvt.s32.f32 %v700
  %v703 = vcvt.s32.f32 %v701
  %704 = vmin.xlane.f32.xlu0 %v703
  %v705 = vpop.xlane.xlu0 %704
  %vm706 = vcmp.eq.f32.partialorder %v703, %v705
  %v707 = vsel %vm706, %v702, inf
  %708 = vmin.xlane.f32.xlu0 %v707
  %v709 = vpop.xlane.xlu0 %708
  %v710 = vcvt.f32.s32 %v709
  %v711 = vcvt.f32.s32 %v705
  %v712 = vshll.u32 %v711, 16
  %v713 = vadd.s32 %v712, %v710
  %s714 = sld [smem:[#allocation3 + $0x3]]
  %p715 = scmp.ne.s32.totalorder %s714, 0
  %s716 = scalar_lea.vmem %s1, 24
  %v717 = vld [vmem:[%s716] sm:$0xff]
  %s718 = scalar_select %p715, 1, 0
  %v719 = vstv %s718
  %vm720 = vcmp.eq.s32.totalorder %v719, 1
  %v721 = vsel %vm720, %v717, %v713
  %722 = vset.pattern.permute.xlu0 0
  %723 = vperm.xlu0 %722, %v721
  %v724 = vpop.permute.xlu0 %723
  %vm725 = vcmp.eq.s32.totalorder %v85, %v724
  %v726 = vsel %vm725, 1, 0
  %v727 = vcvt.s32.f32 %v726
  %v728 = vpack.c.bf16 %v727, %v727
  %729 = vmatprep.subr.bf16.mxu0 0
  %730 = vmatpush1.bf16.msra.mxu0 %v128
  %731 = vmatprep.subr.bf16.mxu0 0
  %732 = vmatpush1.bf16.msra.mxu0 %v129
  %733 = vmatprep.subr.bf16.mxu0 0
  %734 = vmatpush1.bf16.msra.mxu0 %v130
  %735 = vmatprep.subr.bf16.mxu0 0
  %736 = vmatpush1.bf16.msra.mxu0 %v131
  %737 = vmatprep.subr.bf16.mxu0 0
  %738 = vmatpush1.bf16.msra.mxu0 %v132
  %739 = vmatprep.subr.bf16.mxu0 0
  %740 = vmatpush1.bf16.msra.mxu0 %v133
  %741 = vmatprep.subr.bf16.mxu0 0
  %742 = vmatpush1.bf16.msra.mxu0 %v134
  %743 = vmatprep.subr.bf16.mxu0 0
  %744 = vmatpush1.bf16.msra.mxu0 %v135
  %745 = vmatprep.subr.bf16.mxu0 0
  %746 = vmatpush1.bf16.msra.mxu0 0
  %747 = vmatprep.subr.bf16.mxu0 0
  %748 = vmatpush1.bf16.msra.mxu0 0
  %749 = vmatprep.subr.bf16.mxu0 0
  %750 = vmatpush1.bf16.msra.mxu0 0
  %751 = vmatprep.subr.bf16.mxu0 0
  %752 = vmatpush1.bf16.msra.mxu0 0
  %753 = vmatprep.subr.bf16.mxu0 0
  %754 = vmatpush1.bf16.msra.mxu0 0
  %755 = vmatprep.subr.bf16.mxu0 0
  %756 = vmatpush1.bf16.msra.mxu0 0
  %757 = vmatprep.subr.bf16.mxu0 0
  %758 = vmatpush1.bf16.msra.mxu0 0
  %759 = vmatprep.subr.bf16.mxu0 0
  %760 = vmatpush1.bf16.msra.mxu0 0
  %761 = vmatprep.mubr.bf16.mxu0 0
  %762 = vmatmul.mubr.bf16.gmra.mrb[0].mxu0 %v652
  %v763 = vpop.f32.mrb[0].mxu0
  %v764 = vadd.f32 0.0, %v763
  %v765 = vpop.f32.mrb[0].mxu0
  %v766 = vpop.f32.mrb[0].mxu0
  %v767 = vpop.f32.mrb[0].mxu0
  %768 = vdwg.mxu0
  %769 = vmatprep.subr.bf16.mxu0 0
  %770 = vmatpush1.bf16.msra.mxu0 %v216
  %771 = vmatprep.subr.bf16.mxu0 0
  %772 = vmatpush1.bf16.msra.mxu0 %v217
  %773 = vmatprep.subr.bf16.mxu0 0
  %774 = vmatpush1.bf16.msra.mxu0 %v218
  %775 = vmatprep.subr.bf16.mxu0 0
  %776 = vmatpush1.bf16.msra.mxu0 %v219
  %777 = vmatprep.subr.bf16.mxu0 0
  %778 = vmatpush1.bf16.msra.mxu0 %v220
  %779 = vmatprep.subr.bf16.mxu0 0
  %780 = vmatpush1.bf16.msra.mxu0 %v221
  %781 = vmatprep.subr.bf16.mxu0 0
  %782 = vmatpush1.bf16.msra.mxu0 %v222
  %783 = vmatprep.subr.bf16.mxu0 0
  %784 = vmatpush1.bf16.msra.mxu0 %v223
  %785 = vmatprep.subr.bf16.mxu0 0
  %786 = vmatpush1.bf16.msra.mxu0 0
  %787 = vmatprep.subr.bf16.mxu0 0
  %788 = vmatpush1.bf16.msra.mxu0 0
  %789 = vmatprep.subr.bf16.mxu0 0
  %790 = vmatpush1.bf16.msra.mxu0 0
  %791 = vmatprep.subr.bf16.mxu0 0
  %792 = vmatpush1.bf16.msra.mxu0 0
  %793 = vmatprep.subr.bf16.mxu0 0
  %794 = vmatpush1.bf16.msra.mxu0 0
  %795 = vmatprep.subr.bf16.mxu0 0
  %796 = vmatpush1.bf16.msra.mxu0 0
  %797 = vmatprep.subr.bf16.mxu0 0
  %798 = vmatpush1.bf16.msra.mxu0 0
  %799 = vmatprep.subr.bf16.mxu0 0
  %800 = vmatpush1.bf16.msra.mxu0 0
  %801 = vmatprep.mubr.bf16.mxu0 0
  %802 = vmatmul.mubr.bf16.gmra.mrb[0].mxu0 %v728
  %v803 = vpop.f32.mrb[0].mxu0
  %v804 = vadd.f32 %v764, %v803
  %v805 = vpop.f32.mrb[0].mxu0
  %v806 = vpop.f32.mrb[0].mxu0
  %v807 = vpop.f32.mrb[0].mxu0
  %808 = vdwg.mxu0
  %v809 = vadd.f32 %v804, %v276
  %v810 = vtanh.pop %v809
  %v811 = vpack.c.bf16 %v810, %v810
  %812 = vmatprep.subr.bf16.mxu0 0
  %813 = vmatpush1.bf16.msra.mxu0 %v319
  %814 = vmatprep.subr.bf16.mxu0 0
  %815 = vmatpush1.bf16.msra.mxu0 %v320
  %816 = vmatprep.subr.bf16.mxu0 0
  %817 = vmatpush1.bf16.msra.mxu0 %v321
  %818 = vmatprep.subr.bf16.mxu0 0
  %819 = vmatpush1.bf16.msra.mxu0 %v322
  %820 = vmatprep.subr.bf16.mxu0 0
  %821 = vmatpush1.bf16.msra.mxu0 %v323
  %822 = vmatprep.subr.bf16.mxu0 0
  %823 = vmatpush1.bf16.msra.mxu0 %v324
  %824 = vmatprep.subr.bf16.mxu0 0
  %825 = vmatpush1.bf16.msra.mxu0 %v325
  %826 = vmatprep.subr.bf16.mxu0 0
  %827 = vmatpush1.bf16.msra.mxu0 %v326
  %828 = vmatprep.subr.bf16.mxu0 0
  %829 = vmatpush1.bf16.msra.mxu0 0
  %830 = vmatprep.subr.bf16.mxu0 0
  %831 = vmatpush1.bf16.msra.mxu0 0
  %832 = vmatprep.subr.bf16.mxu0 0
  %833 = vmatpush1.bf16.msra.mxu0 0
  %834 = vmatprep.subr.bf16.mxu0 0
  %835 = vmatpush1.bf16.msra.mxu0 0
  %836 = vmatprep.subr.bf16.mxu0 0
  %837 = vmatpush1.bf16.msra.mxu0 0
  %838 = vmatprep.subr.bf16.mxu0 0
  %839 = vmatpush1.bf16.msra.mxu0 0
  %840 = vmatprep.subr.bf16.mxu0 0
  %841 = vmatpush1.bf16.msra.mxu0 0
  %842 = vmatprep.subr.bf16.mxu0 0
  %843 = vmatpush1.bf16.msra.mxu0 0
  %844 = vmatprep.mubr.bf16.mxu0 0
  %845 = vmatmul.mubr.bf16.gmra.mrb[0].mxu0 %v811
  %v846 = vpop.f32.mrb[0].mxu0
  %v847 = vadd.f32 %v285, %v846
  %v848 = vpop.f32.mrb[0].mxu0
  %v849 = vpop.f32.mrb[0].mxu0
  %v850 = vpop.f32.mrb[0].mxu0
  %851 = vdwg.mxu0
  %s852 = scalar_lea.vmem %s8, 24
  %853 = vst [vmem:[%s852] sm:$0xff] %v847
  %v854 = vsel %vm376, %v847, -1e+30
  %855 = vmax.xlane.f32.xlu0 %v854
  %v856 = vpop.xlane.xlu0 %855
  %vm857 = vcmp.ge.f32.partialorder %v854, %v856
  %v858 = vsel %vm857, %v85, 128
  %v859 = vand.u32 %v858, 65535
  %v860 = vshra.s32 %v858, 16
  %v861 = vcvt.s32.f32 %v859
  %v862 = vcvt.s32.f32 %v860
  %863 = vmin.xlane.f32.xlu0 %v862
  %v864 = vpop.xlane.xlu0 %863
  %vm865 = vcmp.eq.f32.partialorder %v862, %v864
  %v866 = vsel %vm865, %v861, inf
  %867 = vmin.xlane.f32.xlu0 %v866
  %v868 = vpop.xlane.xlu0 %867
  %v869 = vcvt.f32.s32 %v868
  %v870 = vcvt.f32.s32 %v864
  %v871 = vshll.u32 %v870, 16
  %v872 = vadd.s32 %v871, %v869
  %s873 = sld [smem:[#allocation3 + $0x4]]
  %p874 = scmp.ne.s32.totalorder %s873, 0
  %s875 = scalar_lea.vmem %s1, 32
  %v876 = vld [vmem:[%s875] sm:$0xff]
  %s877 = scalar_select %p874, 1, 0
  %v878 = vstv %s877
  %vm879 = vcmp.eq.s32.totalorder %v878, 1
  %v880 = vsel %vm879, %v876, %v872
  %881 = vset.pattern.permute.xlu0 0
  %882 = vperm.xlu0 %881, %v880
  %v883 = vpop.permute.xlu0 %882
  %vm884 = vcmp.eq.s32.totalorder %v85, %v883
  %v885 = vsel %vm884, 1, 0
  %v886 = vcvt.s32.f32 %v885
  %v887 = vpack.c.bf16 %v886, %v886
  %888 = vmatprep.subr.bf16.mxu0 0
  %889 = vmatpush1.bf16.msra.mxu0 %v128
  %890 = vmatprep.subr.bf16.mxu0 0
  %891 = vmatpush1.bf16.msra.mxu0 %v129
  %892 = vmatprep.subr.bf16.mxu0 0
  %893 = vmatpush1.bf16.msra.mxu0 %v130
  %894 = vmatprep.subr.bf16.mxu0 0
  %895 = vmatpush1.bf16.msra.mxu0 %v131
  %896 = vmatprep.subr.bf16.mxu0 0
  %897 = vmatpush1.bf16.msra.mxu0 %v132
  %898 = vmatprep.subr.bf16.mxu0 0
  %899 = vmatpush1.bf16.msra.mxu0 %v133
  %900 = vmatprep.subr.bf16.mxu0 0
  %901 = vmatpush1.bf16.msra.mxu0 %v134
  %902 = vmatprep.subr.bf16.mxu0 0
  %903 = vmatpush1.bf16.msra.mxu0 %v135
  %904 = vmatprep.subr.bf16.mxu0 0
  %905 = vmatpush1.bf16.msra.mxu0 0
  %906 = vmatprep.subr.bf16.mxu0 0
  %907 = vmatpush1.bf16.msra.mxu0 0
  %908 = vmatprep.subr.bf16.mxu0 0
  %909 = vmatpush1.bf16.msra.mxu0 0
  %910 = vmatprep.subr.bf16.mxu0 0
  %911 = vmatpush1.bf16.msra.mxu0 0
  %912 = vmatprep.subr.bf16.mxu0 0
  %913 = vmatpush1.bf16.msra.mxu0 0
  %914 = vmatprep.subr.bf16.mxu0 0
  %915 = vmatpush1.bf16.msra.mxu0 0
  %916 = vmatprep.subr.bf16.mxu0 0
  %917 = vmatpush1.bf16.msra.mxu0 0
  %918 = vmatprep.subr.bf16.mxu0 0
  %919 = vmatpush1.bf16.msra.mxu0 0
  %920 = vmatprep.mubr.bf16.mxu0 0
  %921 = vmatmul.mubr.bf16.gmra.mrb[0].mxu0 %v811
  %v922 = vpop.f32.mrb[0].mxu0
  %v923 = vadd.f32 0.0, %v922
  %v924 = vpop.f32.mrb[0].mxu0
  %v925 = vpop.f32.mrb[0].mxu0
  %v926 = vpop.f32.mrb[0].mxu0
  %927 = vdwg.mxu0
  %928 = vmatprep.subr.bf16.mxu0 0
  %929 = vmatpush1.bf16.msra.mxu0 %v216
  %930 = vmatprep.subr.bf16.mxu0 0
  %931 = vmatpush1.bf16.msra.mxu0 %v217
  %932 = vmatprep.subr.bf16.mxu0 0
  %933 = vmatpush1.bf16.msra.mxu0 %v218
  %934 = vmatprep.subr.bf16.mxu0 0
  %935 = vmatpush1.bf16.msra.mxu0 %v219
  %936 = vmatprep.subr.bf16.mxu0 0
  %937 = vmatpush1.bf16.msra.mxu0 %v220
  %938 = vmatprep.subr.bf16.mxu0 0
  %939 = vmatpush1.bf16.msra.mxu0 %v221
  %940 = vmatprep.subr.bf16.mxu0 0
  %941 = vmatpush1.bf16.msra.mxu0 %v222
  %942 = vmatprep.subr.bf16.mxu0 0
  %943 = vmatpush1.bf16.msra.mxu0 %v223
  %944 = vmatprep.subr.bf16.mxu0 0
  %945 = vmatpush1.bf16.msra.mxu0 0
  %946 = vmatprep.subr.bf16.mxu0 0
  %947 = vmatpush1.bf16.msra.mxu0 0
  %948 = vmatprep.subr.bf16.mxu0 0
  %949 = vmatpush1.bf16.msra.mxu0 0
  %950 = vmatprep.subr.bf16.mxu0 0
  %951 = vmatpush1.bf16.msra.mxu0 0
  %952 = vmatprep.subr.bf16.mxu0 0
  %953 = vmatpush1.bf16.msra.mxu0 0
  %954 = vmatprep.subr.bf16.mxu0 0
  %955 = vmatpush1.bf16.msra.mxu0 0
  %956 = vmatprep.subr.bf16.mxu0 0
  %957 = vmatpush1.bf16.msra.mxu0 0
  %958 = vmatprep.subr.bf16.mxu0 0
  %959 = vmatpush1.bf16.msra.mxu0 0
  %960 = vmatprep.mubr.bf16.mxu0 0
  %961 = vmatmul.mubr.bf16.gmra.mrb[0].mxu0 %v887
  %v962 = vpop.f32.mrb[0].mxu0
  %v963 = vadd.f32 %v923, %v962
  %v964 = vpop.f32.mrb[0].mxu0
  %v965 = vpop.f32.mrb[0].mxu0
  %v966 = vpop.f32.mrb[0].mxu0
  %967 = vdwg.mxu0
  %v968 = vadd.f32 %v963, %v276
  %v969 = vtanh.pop %v968
  %v970 = vpack.c.bf16 %v969, %v969
  %971 = vmatprep.subr.bf16.mxu0 0
  %972 = vmatpush1.bf16.msra.mxu0 %v319
  %973 = vmatprep.subr.bf16.mxu0 0
  %974 = vmatpush1.bf16.msra.mxu0 %v320
  %975 = vmatprep.subr.bf16.mxu0 0
  %976 = vmatpush1.bf16.msra.mxu0 %v321
  %977 = vmatprep.subr.bf16.mxu0 0
  %978 = vmatpush1.bf16.msra.mxu0 %v322
  %979 = vmatprep.subr.bf16.mxu0 0
  %980 = vmatpush1.bf16.msra.mxu0 %v323
  %981 = vmatprep.subr.bf16.mxu0 0
  %982 = vmatpush1.bf16.msra.mxu0 %v324
  %983 = vmatprep.subr.bf16.mxu0 0
  %984 = vmatpush1.bf16.msra.mxu0 %v325
  %985 = vmatprep.subr.bf16.mxu0 0
  %986 = vmatpush1.bf16.msra.mxu0 %v326
  %987 = vmatprep.subr.bf16.mxu0 0
  %988 = vmatpush1.bf16.msra.mxu0 0
  %989 = vmatprep.subr.bf16.mxu0 0
  %990 = vmatpush1.bf16.msra.mxu0 0
  %991 = vmatprep.subr.bf16.mxu0 0
  %992 = vmatpush1.bf16.msra.mxu0 0
  %993 = vmatprep.subr.bf16.mxu0 0
  %994 = vmatpush1.bf16.msra.mxu0 0
  %995 = vmatprep.subr.bf16.mxu0 0
  %996 = vmatpush1.bf16.msra.mxu0 0
  %997 = vmatprep.subr.bf16.mxu0 0
  %998 = vmatpush1.bf16.msra.mxu0 0
  %999 = vmatprep.subr.bf16.mxu0 0
  %1000 = vmatpush1.bf16.msra.mxu0 0
  %1001 = vmatprep.subr.bf16.mxu0 0
  %1002 = vmatpush1.bf16.msra.mxu0 0
  %1003 = vmatprep.mubr.bf16.mxu0 0
  %1004 = vmatmul.mubr.bf16.gmra.mrb[0].mxu0 %v970
  %v1005 = vpop.f32.mrb[0].mxu0
  %v1006 = vadd.f32 %v285, %v1005
  %v1007 = vpop.f32.mrb[0].mxu0
  %v1008 = vpop.f32.mrb[0].mxu0
  %v1009 = vpop.f32.mrb[0].mxu0
  %1010 = vdwg.mxu0
  %s1011 = scalar_lea.vmem %s8, 32
  %1012 = vst [vmem:[%s1011] sm:$0xff] %v1006
  %v1013 = vsel %vm376, %v1006, -1e+30
  %1014 = vmax.xlane.f32.xlu0 %v1013
  %v1015 = vpop.xlane.xlu0 %1014
  %vm1016 = vcmp.ge.f32.partialorder %v1013, %v1015
  %v1017 = vsel %vm1016, %v85, 128
  %v1018 = vand.u32 %v1017, 65535
  %v1019 = vshra.s32 %v1017, 16
  %v1020 = vcvt.s32.f32 %v1018
  %v1021 = vcvt.s32.f32 %v1019
  %1022 = vmin.xlane.f32.xlu0 %v1021
  %v1023 = vpop.xlane.xlu0 %1022
  %vm1024 = vcmp.eq.f32.partialorder %v1021, %v1023
  %v1025 = vsel %vm1024, %v1020, inf
  %1026 = vmin.xlane.f32.xlu0 %v1025
  %v1027 = vpop.xlane.xlu0 %1026
  %v1028 = vcvt.f32.s32 %v1027
  %v1029 = vcvt.f32.s32 %v1023
  %v1030 = vshll.u32 %v1029, 16
  %v1031 = vadd.s32 %v1030, %v1028
  %s1032 = sld [smem:[#allocation3 + $0x5]]
  %p1033 = scmp.ne.s32.totalorder %s1032, 0
  %s1034 = scalar_lea.vmem %s1, 40
  %v1035 = vld [vmem:[%s1034] sm:$0xff]
  %s1036 = scalar_select %p1033, 1, 0
  %v1037 = vstv %s1036
  %vm1038 = vcmp.eq.s32.totalorder %v1037, 1
  %v1039 = vsel %vm1038, %v1035, %v1031
  %1040 = vset.pattern.permute.xlu0 0
  %1041 = vperm.xlu0 %1040, %v1039
  %v1042 = vpop.permute.xlu0 %1041
  %vm1043 = vcmp.eq.s32.totalorder %v85, %v1042
  %v1044 = vsel %vm1043, 1, 0
  %v1045 = vcvt.s32.f32 %v1044
  %v1046 = vpack.c.bf16 %v1045, %v1045
  %1047 = vmatprep.subr.bf16.mxu0 0
  %1048 = vmatpush1.bf16.msra.mxu0 %v128
  %1049 = vmatprep.subr.bf16.mxu0 0
  %1050 = vmatpush1.bf16.msra.mxu0 %v129
  %1051 = vmatprep.subr.bf16.mxu0 0
  %1052 = vmatpush1.bf16.msra.mxu0 %v130
  %1053 = vmatprep.subr.bf16.mxu0 0
  %1054 = vmatpush1.bf16.msra.mxu0 %v131
  %1055 = vmatprep.subr.bf16.mxu0 0
  %1056 = vmatpush1.bf16.msra.mxu0 %v132
  %1057 = vmatprep.subr.bf16.mxu0 0
  %1058 = vmatpush1.bf16.msra.mxu0 %v133
  %1059 = vmatprep.subr.bf16.mxu0 0
  %1060 = vmatpush1.bf16.msra.mxu0 %v134
  %1061 = vmatprep.subr.bf16.mxu0 0
  %1062 = vmatpush1.bf16.msra.mxu0 %v135
  %1063 = vmatprep.subr.bf16.mxu0 0
  %1064 = vmatpush1.bf16.msra.mxu0 0
  %1065 = vmatprep.subr.bf16.mxu0 0
  %1066 = vmatpush1.bf16.msra.mxu0 0
  %1067 = vmatprep.subr.bf16.mxu0 0
  %1068 = vmatpush1.bf16.msra.mxu0 0
  %1069 = vmatprep.subr.bf16.mxu0 0
  %1070 = vmatpush1.bf16.msra.mxu0 0
  %1071 = vmatprep.subr.bf16.mxu0 0
  %1072 = vmatpush1.bf16.msra.mxu0 0
  %1073 = vmatprep.subr.bf16.mxu0 0
  %1074 = vmatpush1.bf16.msra.mxu0 0
  %1075 = vmatprep.subr.bf16.mxu0 0
  %1076 = vmatpush1.bf16.msra.mxu0 0
  %1077 = vmatprep.subr.bf16.mxu0 0
  %1078 = vmatpush1.bf16.msra.mxu0 0
  %1079 = vmatprep.mubr.bf16.mxu0 0
  %1080 = vmatmul.mubr.bf16.gmra.mrb[0].mxu0 %v970
  %v1081 = vpop.f32.mrb[0].mxu0
  %v1082 = vadd.f32 0.0, %v1081
  %v1083 = vpop.f32.mrb[0].mxu0
  %v1084 = vpop.f32.mrb[0].mxu0
  %v1085 = vpop.f32.mrb[0].mxu0
  %1086 = vdwg.mxu0
  %1087 = vmatprep.subr.bf16.mxu0 0
  %1088 = vmatpush1.bf16.msra.mxu0 %v216
  %1089 = vmatprep.subr.bf16.mxu0 0
  %1090 = vmatpush1.bf16.msra.mxu0 %v217
  %1091 = vmatprep.subr.bf16.mxu0 0
  %1092 = vmatpush1.bf16.msra.mxu0 %v218
  %1093 = vmatprep.subr.bf16.mxu0 0
  %1094 = vmatpush1.bf16.msra.mxu0 %v219
  %1095 = vmatprep.subr.bf16.mxu0 0
  %1096 = vmatpush1.bf16.msra.mxu0 %v220
  %1097 = vmatprep.subr.bf16.mxu0 0
  %1098 = vmatpush1.bf16.msra.mxu0 %v221
  %1099 = vmatprep.subr.bf16.mxu0 0
  %1100 = vmatpush1.bf16.msra.mxu0 %v222
  %1101 = vmatprep.subr.bf16.mxu0 0
  %1102 = vmatpush1.bf16.msra.mxu0 %v223
  %1103 = vmatprep.subr.bf16.mxu0 0
  %1104 = vmatpush1.bf16.msra.mxu0 0
  %1105 = vmatprep.subr.bf16.mxu0 0
  %1106 = vmatpush1.bf16.msra.mxu0 0
  %1107 = vmatprep.subr.bf16.mxu0 0
  %1108 = vmatpush1.bf16.msra.mxu0 0
  %1109 = vmatprep.subr.bf16.mxu0 0
  %1110 = vmatpush1.bf16.msra.mxu0 0
  %1111 = vmatprep.subr.bf16.mxu0 0
  %1112 = vmatpush1.bf16.msra.mxu0 0
  %1113 = vmatprep.subr.bf16.mxu0 0
  %1114 = vmatpush1.bf16.msra.mxu0 0
  %1115 = vmatprep.subr.bf16.mxu0 0
  %1116 = vmatpush1.bf16.msra.mxu0 0
  %1117 = vmatprep.subr.bf16.mxu0 0
  %1118 = vmatpush1.bf16.msra.mxu0 0
  %1119 = vmatprep.mubr.bf16.mxu0 0
  %1120 = vmatmul.mubr.bf16.gmra.mrb[0].mxu0 %v1046
  %v1121 = vpop.f32.mrb[0].mxu0
  %v1122 = vadd.f32 %v1082, %v1121
  %v1123 = vpop.f32.mrb[0].mxu0
  %v1124 = vpop.f32.mrb[0].mxu0
  %v1125 = vpop.f32.mrb[0].mxu0
  %1126 = vdwg.mxu0
  %v1127 = vadd.f32 %v1122, %v276
  %v1128 = vtanh.pop %v1127
  %v1129 = vpack.c.bf16 %v1128, %v1128
  %1130 = vmatprep.subr.bf16.mxu0 0
  %1131 = vmatpush1.bf16.msra.mxu0 %v319
  %1132 = vmatprep.subr.bf16.mxu0 0
  %1133 = vmatpush1.bf16.msra.mxu0 %v320
  %1134 = vmatprep.subr.bf16.mxu0 0
  %1135 = vmatpush1.bf16.msra.mxu0 %v321
  %1136 = vmatprep.subr.bf16.mxu0 0
  %1137 = vmatpush1.bf16.msra.mxu0 %v322
  %1138 = vmatprep.subr.bf16.mxu0 0
  %1139 = vmatpush1.bf16.msra.mxu0 %v323
  %1140 = vmatprep.subr.bf16.mxu0 0
  %1141 = vmatpush1.bf16.msra.mxu0 %v324
  %1142 = vmatprep.subr.bf16.mxu0 0
  %1143 = vmatpush1.bf16.msra.mxu0 %v325
  %1144 = vmatprep.subr.bf16.mxu0 0
  %1145 = vmatpush1.bf16.msra.mxu0 %v326
  %1146 = vmatprep.subr.bf16.mxu0 0
  %1147 = vmatpush1.bf16.msra.mxu0 0
  %1148 = vmatprep.subr.bf16.mxu0 0
  %1149 = vmatpush1.bf16.msra.mxu0 0
  %1150 = vmatprep.subr.bf16.mxu0 0
  %1151 = vmatpush1.bf16.msra.mxu0 0
  %1152 = vmatprep.subr.bf16.mxu0 0
  %1153 = vmatpush1.bf16.msra.mxu0 0
  %1154 = vmatprep.subr.bf16.mxu0 0
  %1155 = vmatpush1.bf16.msra.mxu0 0
  %1156 = vmatprep.subr.bf16.mxu0 0
  %1157 = vmatpush1.bf16.msra.mxu0 0
  %1158 = vmatprep.subr.bf16.mxu0 0
  %1159 = vmatpush1.bf16.msra.mxu0 0
  %1160 = vmatprep.subr.bf16.mxu0 0
  %1161 = vmatpush1.bf16.msra.mxu0 0
  %1162 = vmatprep.mubr.bf16.mxu0 0
  %1163 = vmatmul.mubr.bf16.gmra.mrb[0].mxu0 %v1129
  %v1164 = vpop.f32.mrb[0].mxu0
  %v1165 = vadd.f32 %v285, %v1164
  %v1166 = vpop.f32.mrb[0].mxu0
  %v1167 = vpop.f32.mrb[0].mxu0
  %v1168 = vpop.f32.mrb[0].mxu0
  %1169 = vdwg.mxu0
  %s1170 = scalar_lea.vmem %s8, 40
  %1171 = vst [vmem:[%s1170] sm:$0xff] %v1165
  %v1172 = vsel %vm376, %v1165, -1e+30
  %1173 = vmax.xlane.f32.xlu0 %v1172
  %v1174 = vpop.xlane.xlu0 %1173
  %vm1175 = vcmp.ge.f32.partialorder %v1172, %v1174
  %v1176 = vsel %vm1175, %v85, 128
  %v1177 = vand.u32 %v1176, 65535
  %v1178 = vshra.s32 %v1176, 16
  %v1179 = vcvt.s32.f32 %v1177
  %v1180 = vcvt.s32.f32 %v1178
  %1181 = vmin.xlane.f32.xlu0 %v1180
  %v1182 = vpop.xlane.xlu0 %1181
  %vm1183 = vcmp.eq.f32.partialorder %v1180, %v1182
  %v1184 = vsel %vm1183, %v1179, inf
  %1185 = vmin.xlane.f32.xlu0 %v1184
  %v1186 = vpop.xlane.xlu0 %1185
  %v1187 = vcvt.f32.s32 %v1186
  %v1188 = vcvt.f32.s32 %v1182
  %v1189 = vshll.u32 %v1188, 16
  %v1190 = vadd.s32 %v1189, %v1187
  %s1191 = sld [smem:[#allocation3 + $0x6]]
  %p1192 = scmp.ne.s32.totalorder %s1191, 0
  %s1193 = scalar_lea.vmem %s1, 48
  %v1194 = vld [vmem:[%s1193] sm:$0xff]
  %s1195 = scalar_select %p1192, 1, 0
  %v1196 = vstv %s1195
  %vm1197 = vcmp.eq.s32.totalorder %v1196, 1
  %v1198 = vsel %vm1197, %v1194, %v1190
  %1199 = vset.pattern.permute.xlu0 0
  %1200 = vperm.xlu0 %1199, %v1198
  %v1201 = vpop.permute.xlu0 %1200
  %vm1202 = vcmp.eq.s32.totalorder %v85, %v1201
  %v1203 = vsel %vm1202, 1, 0
  %v1204 = vcvt.s32.f32 %v1203
  %v1205 = vpack.c.bf16 %v1204, %v1204
  %1206 = vmatprep.subr.bf16.mxu0 0
  %1207 = vmatpush1.bf16.msra.mxu0 %v128
  %1208 = vmatprep.subr.bf16.mxu0 0
  %1209 = vmatpush1.bf16.msra.mxu0 %v129
  %1210 = vmatprep.subr.bf16.mxu0 0
  %1211 = vmatpush1.bf16.msra.mxu0 %v130
  %1212 = vmatprep.subr.bf16.mxu0 0
  %1213 = vmatpush1.bf16.msra.mxu0 %v131
  %1214 = vmatprep.subr.bf16.mxu0 0
  %1215 = vmatpush1.bf16.msra.mxu0 %v132
  %1216 = vmatprep.subr.bf16.mxu0 0
  %1217 = vmatpush1.bf16.msra.mxu0 %v133
  %1218 = vmatprep.subr.bf16.mxu0 0
  %1219 = vmatpush1.bf16.msra.mxu0 %v134
  %1220 = vmatprep.subr.bf16.mxu0 0
  %1221 = vmatpush1.bf16.msra.mxu0 %v135
  %1222 = vmatprep.subr.bf16.mxu0 0
  %1223 = vmatpush1.bf16.msra.mxu0 0
  %1224 = vmatprep.subr.bf16.mxu0 0
  %1225 = vmatpush1.bf16.msra.mxu0 0
  %1226 = vmatprep.subr.bf16.mxu0 0
  %1227 = vmatpush1.bf16.msra.mxu0 0
  %1228 = vmatprep.subr.bf16.mxu0 0
  %1229 = vmatpush1.bf16.msra.mxu0 0
  %1230 = vmatprep.subr.bf16.mxu0 0
  %1231 = vmatpush1.bf16.msra.mxu0 0
  %1232 = vmatprep.subr.bf16.mxu0 0
  %1233 = vmatpush1.bf16.msra.mxu0 0
  %1234 = vmatprep.subr.bf16.mxu0 0
  %1235 = vmatpush1.bf16.msra.mxu0 0
  %1236 = vmatprep.subr.bf16.mxu0 0
  %1237 = vmatpush1.bf16.msra.mxu0 0
  %1238 = vmatprep.mubr.bf16.mxu0 0
  %1239 = vmatmul.mubr.bf16.gmra.mrb[0].mxu0 %v1129
  %v1240 = vpop.f32.mrb[0].mxu0
  %v1241 = vadd.f32 0.0, %v1240
  %v1242 = vpop.f32.mrb[0].mxu0
  %v1243 = vpop.f32.mrb[0].mxu0
  %v1244 = vpop.f32.mrb[0].mxu0
  %1245 = vdwg.mxu0
  %1246 = vmatprep.subr.bf16.mxu0 0
  %1247 = vmatpush1.bf16.msra.mxu0 %v216
  %1248 = vmatprep.subr.bf16.mxu0 0
  %1249 = vmatpush1.bf16.msra.mxu0 %v217
  %1250 = vmatprep.subr.bf16.mxu0 0
  %1251 = vmatpush1.bf16.msra.mxu0 %v218
  %1252 = vmatprep.subr.bf16.mxu0 0
  %1253 = vmatpush1.bf16.msra.mxu0 %v219
  %1254 = vmatprep.subr.bf16.mxu0 0
  %1255 = vmatpush1.bf16.msra.mxu0 %v220
  %1256 = vmatprep.subr.bf16.mxu0 0
  %1257 = vmatpush1.bf16.msra.mxu0 %v221
  %1258 = vmatprep.subr.bf16.mxu0 0
  %1259 = vmatpush1.bf16.msra.mxu0 %v222
  %1260 = vmatprep.subr.bf16.mxu0 0
  %1261 = vmatpush1.bf16.msra.mxu0 %v223
  %1262 = vmatprep.subr.bf16.mxu0 0
  %1263 = vmatpush1.bf16.msra.mxu0 0
  %1264 = vmatprep.subr.bf16.mxu0 0
  %1265 = vmatpush1.bf16.msra.mxu0 0
  %1266 = vmatprep.subr.bf16.mxu0 0
  %1267 = vmatpush1.bf16.msra.mxu0 0
  %1268 = vmatprep.subr.bf16.mxu0 0
  %1269 = vmatpush1.bf16.msra.mxu0 0
  %1270 = vmatprep.subr.bf16.mxu0 0
  %1271 = vmatpush1.bf16.msra.mxu0 0
  %1272 = vmatprep.subr.bf16.mxu0 0
  %1273 = vmatpush1.bf16.msra.mxu0 0
  %1274 = vmatprep.subr.bf16.mxu0 0
  %1275 = vmatpush1.bf16.msra.mxu0 0
  %1276 = vmatprep.subr.bf16.mxu0 0
  %1277 = vmatpush1.bf16.msra.mxu0 0
  %1278 = vmatprep.mubr.bf16.mxu0 0
  %1279 = vmatmul.mubr.bf16.gmra.mrb[0].mxu0 %v1205
  %v1280 = vpop.f32.mrb[0].mxu0
  %v1281 = vadd.f32 %v1241, %v1280
  %v1282 = vpop.f32.mrb[0].mxu0
  %v1283 = vpop.f32.mrb[0].mxu0
  %v1284 = vpop.f32.mrb[0].mxu0
  %1285 = vdwg.mxu0
  %v1286 = vadd.f32 %v1281, %v276
  %v1287 = vtanh.pop %v1286
  %v1288 = vpack.c.bf16 %v1287, %v1287
  %1289 = vmatprep.subr.bf16.mxu0 0
  %1290 = vmatpush1.bf16.msra.mxu0 %v319
  %1291 = vmatprep.subr.bf16.mxu0 0
  %1292 = vmatpush1.bf16.msra.mxu0 %v320
  %1293 = vmatprep.subr.bf16.mxu0 0
  %1294 = vmatpush1.bf16.msra.mxu0 %v321
  %1295 = vmatprep.subr.bf16.mxu0 0
  %1296 = vmatpush1.bf16.msra.mxu0 %v322
  %1297 = vmatprep.subr.bf16.mxu0 0
  %1298 = vmatpush1.bf16.msra.mxu0 %v323
  %1299 = vmatprep.subr.bf16.mxu0 0
  %1300 = vmatpush1.bf16.msra.mxu0 %v324
  %1301 = vmatprep.subr.bf16.mxu0 0
  %1302 = vmatpush1.bf16.msra.mxu0 %v325
  %1303 = vmatprep.subr.bf16.mxu0 0
  %1304 = vmatpush1.bf16.msra.mxu0 %v326
  %1305 = vmatprep.subr.bf16.mxu0 0
  %1306 = vmatpush1.bf16.msra.mxu0 0
  %1307 = vmatprep.subr.bf16.mxu0 0
  %1308 = vmatpush1.bf16.msra.mxu0 0
  %1309 = vmatprep.subr.bf16.mxu0 0
  %1310 = vmatpush1.bf16.msra.mxu0 0
  %1311 = vmatprep.subr.bf16.mxu0 0
  %1312 = vmatpush1.bf16.msra.mxu0 0
  %1313 = vmatprep.subr.bf16.mxu0 0
  %1314 = vmatpush1.bf16.msra.mxu0 0
  %1315 = vmatprep.subr.bf16.mxu0 0
  %1316 = vmatpush1.bf16.msra.mxu0 0
  %1317 = vmatprep.subr.bf16.mxu0 0
  %1318 = vmatpush1.bf16.msra.mxu0 0
  %1319 = vmatprep.subr.bf16.mxu0 0
  %1320 = vmatpush1.bf16.msra.mxu0 0
  %1321 = vmatprep.mubr.bf16.mxu0 0
  %1322 = vmatmul.mubr.bf16.gmra.mrb[0].mxu0 %v1288
  %v1323 = vpop.f32.mrb[0].mxu0
  %v1324 = vadd.f32 %v285, %v1323
  %v1325 = vpop.f32.mrb[0].mxu0
  %v1326 = vpop.f32.mrb[0].mxu0
  %v1327 = vpop.f32.mrb[0].mxu0
  %1328 = vdwg.mxu0
  %s1329 = scalar_lea.vmem %s8, 48
  %1330 = vst [vmem:[%s1329] sm:$0xff] %v1324
  // Predicated region
  $region30: #{seq2seq_forward.3} parent=0 // pred_check
    _
  $region31: #{seq2seq_forward.3} parent=0 // pred_check_branch
    %1332 = sbr.rel (0) target = $region33
  $region32: #{seq2seq_forward.3} parent=0 // pred_region
    _
  $region33: #{seq2seq_forward.3} parent=0 // pred_fallthru
    _
  // Predicated region
  $region34: #{seq2seq_forward.3} parent=0 // pred_check
    _
  $region35: #{seq2seq_forward.3} parent=0 // pred_check_branch
    %1334 = sbr.rel (0) target = $region37
  $region36: #{seq2seq_forward.3} parent=0 // pred_region
    _
  $region37: #{seq2seq_forward.3} parent=0 // pred_fallthru
    _

</llo_original>
